<compile_context>
chip_gen: v5e
topology: v5e:2x2
jax: 0.10.0
libtpu: 0.0.40
codegen_flags: <defaults>
</compile_context>

<pallas_src>
import functools

import jax
import jax.numpy as jnp
from jax.experimental import pallas as pl
from jax.experimental.pallas import tpu as pltpu

EPS = 1e-5          # BatchNorm2d default eps
_LANE = 128


def _round_up(x, m):
    return (x + m - 1) // m * m


def _device_budget():
    """(vmem_limit_bytes, row-tile target) tuned per TPU generation."""
    try:
        cap = int(pltpu.get_tpu_info().vmem_capacity_bytes)
    except Exception:
        cap = 64 * 1024 * 1024
    if cap >= 96 * 1024 * 1024:          # v5e / v6e class: 128 MiB physical VMEM
        return 80 * 1024 * 1024, 1024
    return 36 * 1024 * 1024, 512         # v7x (64 MiB) or unknown: conservative


def _pick_row_tile(m, target):
    """Fixed, aligned row tile; the grid uses cdiv + in-kernel tail masking."""
    tm = min(target, _round_up(max(1, -(-m // 2)), _LANE))  # >=2 grid steps when possible
    return max(tm, _LANE)


_SQRT_2_OVER_PI = 0.7978845608028654


def _gelu(x):
    # tanh-form GELU: the transcendental runs on the EUP (otherwise-idle slot).
    return 0.5 * x * (1.0 + jnp.tanh(_SQRT_2_OVER_PI * (x + 0.044715 * x * x * x)))


# ---------------------------------------------------------------------------
# Pass 1: 1x1 expand conv (matmul, bf16 operands / f32 acc) + GELU;
#         emits partial BN1 stats (sum, sum_sq) per row tile.
# ---------------------------------------------------------------------------
def expand_kernel(x_ref, w1_ref, b1_ref, y1_ref, st_ref, *, M, TM):
    y = jnp.dot(x_ref[...], w1_ref[...], preferred_element_type=jnp.float32)
    y = _gelu(y + b1_ref[...])
    ys = y.astype(y1_ref.dtype)
    y1_ref[...] = ys
    yf = ys.astype(jnp.float32)          # stats from the values actually stored
    if M % TM != 0:                      # mask ragged (out-of-bounds) rows out of stats
        row = pl.program_id(0) * TM + jax.lax.broadcasted_iota(jnp.int32, yf.shape, 0)
        yf = jnp.where(row < M, yf, 0.0)
    st_ref[0:1, :] = jnp.sum(yf, axis=0, keepdims=True)
    st_ref[1:2, :] = jnp.sum(yf * yf, axis=0, keepdims=True)


# ---------------------------------------------------------------------------
# Pass 2: BN1 affine + depthwise 3x3 (pad=1) via VMEM halo scratch + GELU;
#         emits partial BN2 stats.  Grid = (batch, 128-channel blocks).
#         Only 3 W-shifted slab reads of the scratch; the dy offsets are
#         free slices along the leading (untiled) axis.
# ---------------------------------------------------------------------------
def dw_kernel(y1_ref, s1_ref, t1_ref, dww_ref, dwb_ref, y2_ref, st_ref, pad_ref,
              *, H, W, TC):
    f32 = jnp.float32
    x1 = y1_ref[...].astype(f32) * s1_ref[...] + t1_ref[...]           # (H, W, TC)

    # zero-padded halo in VMEM scratch (borders zero == conv padding=1)
    pad_ref[0:1, :, :] = jnp.zeros((1, W + 2, TC), f32)
    pad_ref[H + 1:H + 2, :, :] = jnp.zeros((1, W + 2, TC), f32)
    pad_ref[1:H + 1, 0:1, :] = jnp.zeros((H, 1, TC), f32)
    pad_ref[1:H + 1, W + 1:W + 2, :] = jnp.zeros((H, 1, TC), f32)
    pad_ref[1:H + 1, 1:W + 1, :] = x1

    w = dww_ref[...]                                                    # (3, 3, TC)
    acc = jnp.zeros((H, W, TC), f32)
    for dx in range(3):
        slab = pad_ref[:, dx:dx + W, :]                                 # (H+2, W, TC)
        for dy in range(3):
            acc = acc + slab[dy:dy + H] * w[dy, dx, :]

    y = _gelu(acc + dwb_ref[...])
    ys = y.astype(y2_ref.dtype)
    y2_ref[...] = ys
    yf = ys.astype(f32)
    st_ref[0:1, :] = jnp.sum(jnp.sum(yf, axis=0), axis=0, keepdims=True)
    st_ref[1:2, :] = jnp.sum(jnp.sum(yf * yf, axis=0), axis=0, keepdims=True)


# ---------------------------------------------------------------------------
# Pass 3: BN1/BN2 affines + residual add + 1x1 projection (bf16 MXU operands);
#         emits partial BN3 stats.  BN3 affine applied in the XLA epilogue.
# ---------------------------------------------------------------------------
def proj_kernel(y1_ref, y2_ref, s1_ref, t1_ref, s2_ref, t2_ref, w2_ref, b2_ref,
                y3_ref, st_ref, *, M, TM):
    f32 = jnp.float32
    x1 = y1_ref[...].astype(f32) * s1_ref[...] + t1_ref[...]
    x2 = x1 + y2_ref[...].astype(f32) * s2_ref[...] + t2_ref[...]
    y = jnp.dot(x2.astype(w2_ref.dtype), w2_ref[...],
                preferred_element_type=jnp.float32) + b2_ref[...]
    y3_ref[...] = y
    if M % TM != 0:
        row = pl.program_id(0) * TM + jax.lax.broadcasted_iota(jnp.int32, y.shape, 0)
        y = jnp.where(row < M, y, 0.0)
    st_ref[0:1, :] = jnp.sum(y, axis=0, keepdims=True)
    st_ref[1:2, :] = jnp.sum(y * y, axis=0, keepdims=True)


# ---------------------------------------------------------------------------
# Wrapper
# ---------------------------------------------------------------------------
def inverted_residual_feed_forward(x_nchw, p, *,
                                   storage_dtype=jnp.bfloat16,
                                   compute_dtype=jnp.bfloat16):
    N, C, H, W = x_nchw.shape
    C4 = p["w1"].shape[1]
    Cp = _round_up(C, _LANE)
    C4p = _round_up(C4, _LANE)
    M = N * H * W

    vmem_limit, tm_target = _device_budget()
    TM = _pick_row_tile(M, tm_target)
    nT = -(-M // TM)
    TC = min(C4p, _LANE)
    nC = C4p // TC

    f32 = jnp.float32
    cdt = compute_dtype

    # lane-dense zero-padded parameters; padded channels stay exactly 0 end-to-end
    w1p = jnp.zeros((Cp, C4p), cdt).at[:C, :C4].set(p["w1"].astype(cdt))
    b1p = jnp.zeros((1, C4p), f32).at[:, :C4].set(p["b1"].astype(f32))
    g1p = jnp.zeros((C4p,), f32).at[:C4].set(p["g1"].reshape(-1).astype(f32))
    be1p = jnp.zeros((C4p,), f32).at[:C4].set(p["be1"].reshape(-1).astype(f32))
    dwwp = jnp.zeros((3, 3, C4p), f32).at[:, :, :C4].set(p["dw_w"].astype(f32))
    dwbp = jnp.zeros((1, C4p), f32).at[:, :C4].set(p["dw_b"].astype(f32))
    g2p = jnp.zeros((C4p,), f32).at[:C4].set(p["g2"].reshape(-1).astype(f32))
    be2p = jnp.zeros((C4p,), f32).at[:C4].set(p["be2"].reshape(-1).astype(f32))
    w2p = jnp.zeros((C4p, Cp), cdt).at[:C4, :C].set(p["w2"].astype(cdt))
    b2p = jnp.zeros((1, Cp), f32).at[:, :C].set(p["b2"].astype(f32))
    g3p = jnp.zeros((Cp,), f32).at[:C].set(p["g3"].reshape(-1).astype(f32))
    be3p = jnp.zeros((Cp,), f32).at[:C].set(p["be3"].reshape(-1).astype(f32))

    # NCHW -> (M, Cp) rows: zero-padded contraction dim, MXU compute dtype
    x_rows = jnp.transpose(x_nchw, (0, 2, 3, 1)).reshape(M, C).astype(cdt)
    x_flat = jnp.zeros((M, Cp), cdt).at[:, :C].set(x_rows)

    # ---------------- pass 1: expand + GELU (+ BN1 partial stats) ----------------
    kern1 = functools.partial(expand_kernel, M=M, TM=TM)
    y1, st1 = pl.pallas_call(
        kern1,
        out_shape=(jax.ShapeDtypeStruct((M, C4p), storage_dtype),
                   jax.ShapeDtypeStruct((nT, 2, C4p), f32)),
        grid=(nT,),
        in_specs=[
            pl.BlockSpec((TM, Cp), lambda t: (t, 0)),
            pl.BlockSpec((Cp, C4p), lambda t: (0, 0)),
            pl.BlockSpec((1, C4p), lambda t: (0, 0)),
        ],
        out_specs=(
            pl.BlockSpec((TM, C4p), lambda t: (t, 0)),
            pl.BlockSpec((None, 2, C4p), lambda t: (t, 0, 0)),
        ),
        compiler_params=pltpu.CompilerParams(
            dimension_semantics=("parallel",), vmem_limit_bytes=vmem_limit),
        cost_estimate=pl.CostEstimate(
            flops=2 * M * Cp * C4p, transcendentals=M * C4p,
            bytes_accessed=2 * (M * Cp + M * C4p + Cp * C4p)),
    )(x_flat, w1p, b1p)

    s1 = jnp.sum(st1[:, 0, :], axis=0)
    q1 = jnp.sum(st1[:, 1, :], axis=0)
    mean1 = s1 / M
    var1 = jnp.maximum(q1 / M - mean1 * mean1, 0.0)
    rstd1 = jax.lax.rsqrt(var1 + EPS)
    scale1 = (g1p * rstd1).reshape(1, C4p)
    shift1 = (be1p - mean1 * g1p * rstd1).reshape(1, C4p)

    # ------- pass 2: BN1 affine + depthwise 3x3 + GELU (+ BN2 partial stats) -------
    y1_4d = y1.reshape(N, H, W, C4p)
    kern2 = functools.partial(dw_kernel, H=H, W=W, TC=TC)
    y2, st2 = pl.pallas_call(
        kern2,
        out_shape=(jax.ShapeDtypeStruct((N, H, W, C4p), storage_dtype),
                   jax.ShapeDtypeStruct((N, nC, 2, TC), f32)),
        grid=(N, nC),
        in_specs=[
            pl.BlockSpec((None, H, W, TC), lambda n, c: (n, 0, 0, c)),
            pl.BlockSpec((1, TC), lambda n, c: (0, c)),
            pl.BlockSpec((1, TC), lambda n, c: (0, c)),
            pl.BlockSpec((3, 3, TC), lambda n, c: (0, 0, c)),
            pl.BlockSpec((1, TC), lambda n, c: (0, c)),
        ],
        out_specs=(
            pl.BlockSpec((None, H, W, TC), lambda n, c: (n, 0, 0, c)),
            pl.BlockSpec((None, None, 2, TC), lambda n, c: (n, c, 0, 0)),
        ),
        scratch_shapes=[pltpu.VMEM((H + 2, W + 2, TC), jnp.float32)],
        compiler_params=pltpu.CompilerParams(
            dimension_semantics=("parallel", "parallel"),
            vmem_limit_bytes=vmem_limit),
        cost_estimate=pl.CostEstimate(
            flops=2 * 9 * M * C4p, transcendentals=M * C4p,
            bytes_accessed=2 * 2 * M * C4p),
    )(y1_4d, scale1, shift1, dwwp, dwbp)

    s2 = jnp.sum(st2[:, :, 0, :], axis=0).reshape(C4p)
    q2 = jnp.sum(st2[:, :, 1, :], axis=0).reshape(C4p)
    mean2 = s2 / M
    var2 = jnp.maximum(q2 / M - mean2 * mean2, 0.0)
    rstd2 = jax.lax.rsqrt(var2 + EPS)
    scale2 = (g2p * rstd2).reshape(1, C4p)
    shift2 = (be2p - mean2 * g2p * rstd2).reshape(1, C4p)

    # ------ pass 3: residual + 1x1 projection (+ BN3 partial stats) ------
    y2_flat = y2.reshape(M, C4p)
    kern3 = functools.partial(proj_kernel, M=M, TM=TM)
    y3, st3 = pl.pallas_call(
        kern3,
        out_shape=(jax.ShapeDtypeStruct((M, Cp), f32),
                   jax.ShapeDtypeStruct((nT, 2, Cp), f32)),
        grid=(nT,),
        in_specs=[
            pl.BlockSpec((TM, C4p), lambda t: (t, 0)),
            pl.BlockSpec((TM, C4p), lambda t: (t, 0)),
            pl.BlockSpec((1, C4p), lambda t: (0, 0)),
            pl.BlockSpec((1, C4p), lambda t: (0, 0)),
            pl.BlockSpec((1, C4p), lambda t: (0, 0)),
            pl.BlockSpec((1, C4p), lambda t: (0, 0)),
            pl.BlockSpec((C4p, Cp), lambda t: (0, 0)),
            pl.BlockSpec((1, Cp), lambda t: (0, 0)),
        ],
        out_specs=(
            pl.BlockSpec((TM, Cp), lambda t: (t, 0)),
            pl.BlockSpec((None, 2, Cp), lambda t: (t, 0, 0)),
        ),
        compiler_params=pltpu.CompilerParams(
            dimension_semantics=("parallel",), vmem_limit_bytes=vmem_limit),
        cost_estimate=pl.CostEstimate(
            flops=2 * M * C4p * Cp, transcendentals=0,
            bytes_accessed=2 * 2 * M * C4p + 4 * M * Cp + 2 * C4p * Cp),
    )(y1, y2_flat, scale1, shift1, scale2, shift2, w2p, b2p)

    # ---- epilogue (XLA, fuses with the final transpose): BN3 affine + slice ----
    s3 = jnp.sum(st3[:, 0, :], axis=0)
    q3 = jnp.sum(st3[:, 1, :], axis=0)
    mean3 = s3 / M
    var3 = jnp.maximum(q3 / M - mean3 * mean3, 0.0)
    rstd3 = jax.lax.rsqrt(var3 + EPS)
    scale3 = g3p * rstd3
    shift3 = be3p - mean3 * g3p * rstd3
    out = (y3 * scale3[None, :] + shift3[None, :]).reshape(N, H, W, Cp)[:, :, :, :C]
    return jnp.transpose(out, (0, 3, 1, 2))                      # back to NCHW


def init_params(key, dim, dim_ratio=4.0):
    C = dim
    C4 = int(dim_ratio * dim)
    ks = jax.random.split(key, 14)
    f32 = jnp.float32
    return {
        # conv1x1 expand: torch weight [C4, C, 1, 1] stored here as [C, C4]
        "w1": 0.1 * jax.random.normal(ks[0], (C, C4), f32),
        "b1": 0.05 * jax.random.normal(ks[1], (1, C4), f32),
        "g1": 1.0 + 0.1 * jax.random.normal(ks[2], (1, C4), f32),
        "be1": 0.05 * jax.random.normal(ks[3], (1, C4), f32),
        # depthwise 3x3: torch weight [C4, 1, 3, 3] stored here as [3, 3, C4]
        "dw_w": 0.1 * jax.random.normal(ks[4], (3, 3, C4), f32),
        "dw_b": 0.05 * jax.random.normal(ks[5], (1, C4), f32),
        "g2": 1.0 + 0.1 * jax.random.normal(ks[6], (1, C4), f32),
        "be2": 0.05 * jax.random.normal(ks[7], (1, C4), f32),
        # conv1x1 project: torch weight [C, C4, 1, 1] stored here as [C4, C]
        "w2": 0.1 * jax.random.normal(ks[8], (C4, C), f32),
        "b2": 0.05 * jax.random.normal(ks[9], (1, C), f32),
        "g3": 1.0 + 0.1 * jax.random.normal(ks[10], (1, C), f32),
        "be3": 0.05 * jax.random.normal(ks[11], (1, C), f32),
    }


if __name__ == "__main__":
    key = jax.random.PRNGKey(0)
    k_x, k_p = jax.random.split(key)

    N, C, H, W = 2, 4, 16, 16          # dim=4, dim_ratio=4 -> C4=16
    x = jax.random.normal(k_x, (N, C, H, W), jnp.float32)
    params = init_params(k_p, dim=C, dim_ratio=4.0)

    fwd = jax.jit(inverted_residual_feed_forward)
    out = jax.block_until_ready(fwd(x, params))
    assert out.shape == (N, C, H, W), out.shape
    assert bool(jnp.all(jnp.isfinite(out)))
    print("KERNEL_OK")
</pallas_src>

<mosaic_0001>
module attributes {stable_mosaic.version = 11 : i64} {
  func.func @expand_kernel(%arg0: i32, %arg1: memref<256x128xbf16, #tpu.memory_space<vmem>>, %arg2: memref<128x128xbf16, #tpu.memory_space<vmem>>, %arg3: memref<1x128xf32, #tpu.memory_space<vmem>>, %arg4: memref<256x128xbf16, #tpu.memory_space<vmem>>, %arg5: memref<1x2x128xf32, #tpu.memory_space<vmem>>) attributes {dimension_semantics = [#tpu.dimension_semantics<parallel>], iteration_bounds = array<i64: 2>, scalar_prefetch = 0 : i64, scratch_operands = 0 : i64, tpu.core_type = #tpu.core_type<tc>, window_params = [{transform_indices = @transform_0, window_bounds = array<i64: 256, 128>}, {pipeline_mode = #tpu.pipeline_mode<synchronous>, transform_indices = @transform_1, window_bounds = array<i64: 128, 128>}, {pipeline_mode = #tpu.pipeline_mode<synchronous>, transform_indices = @transform_2, window_bounds = array<i64: 1, 128>}, {transform_indices = @transform_3, window_bounds = array<i64: 256, 128>}, {transform_indices = @transform_4, window_bounds = array<i64: 1, 2, 128>}]} {
    %c0 = arith.constant 0 : index
    %c0_0 = arith.constant 0 : index
    %0 = vector.load %arg1[%c0, %c0_0] : memref<256x128xbf16, #tpu.memory_space<vmem>>, vector<256x128xbf16>
    %c0_1 = arith.constant 0 : index
    %c0_2 = arith.constant 0 : index
    %1 = vector.load %arg2[%c0_1, %c0_2] : memref<128x128xbf16, #tpu.memory_space<vmem>>, vector<128x128xbf16>
    %cst = arith.constant dense<0.000000e+00> : vector<256x128xf32>
    %2 = tpu.matmul %0, %1, %cst {dimension_numbers = #tpu.dot_dimension_numbers<[1], [0], [0], [1], [0, 0, 1, 1], [], []>} : vector<256x128xbf16>, vector<128x128xbf16>, vector<256x128xf32> -> vector<256x128xf32>
    %c0_3 = arith.constant 0 : index
    %c0_4 = arith.constant 0 : index
    %3 = vector.load %arg3[%c0_3, %c0_4] : memref<1x128xf32, #tpu.memory_space<vmem>>, vector<1x128xf32>
    %4 = vector.broadcast %3 : vector<1x128xf32> to vector<256x128xf32>
    %5 = arith.addf %2, %4 : vector<256x128xf32>
    %cst_5 = arith.constant 5.000000e-01 : f32
    %6 = vector.broadcast %cst_5 : f32 to vector<256x128xf32>
    %7 = arith.mulf %6, %5 : vector<256x128xf32>
    %cst_6 = arith.constant 4.471500e-02 : f32
    %8 = vector.broadcast %cst_6 : f32 to vector<256x128xf32>
    %9 = arith.mulf %8, %5 : vector<256x128xf32>
    %10 = arith.mulf %9, %5 : vector<256x128xf32>
    %11 = arith.mulf %10, %5 : vector<256x128xf32>
    %12 = arith.addf %5, %11 : vector<256x128xf32>
    %cst_7 = arith.constant 0.797884583 : f32
    %13 = vector.broadcast %cst_7 : f32 to vector<256x128xf32>
    %14 = arith.mulf %13, %12 : vector<256x128xf32>
    %15 = math.tanh %14 : vector<256x128xf32>
    %cst_8 = arith.constant 1.000000e+00 : f32
    %16 = vector.broadcast %cst_8 : f32 to vector<256x128xf32>
    %17 = arith.addf %16, %15 : vector<256x128xf32>
    %18 = arith.mulf %7, %17 : vector<256x128xf32>
    %19 = arith.truncf %18 : vector<256x128xf32> to vector<256x128xbf16>
    %c0_9 = arith.constant 0 : index
    %c0_10 = arith.constant 0 : index
    %20 = vector.load %arg4[%c0_9, %c0_10] : memref<256x128xbf16, #tpu.memory_space<vmem>>, vector<256x128xbf16>
    tpu.vector_store %arg4[%c0_9, %c0_10], %19 {strides = array<i32>} : memref<256x128xbf16, #tpu.memory_space<vmem>>, vector<256x128xbf16>,
    %21 = arith.extf %19 : vector<256x128xbf16> to vector<256x128xf32>
    %cst_11 = arith.constant dense<0.000000e+00> : vector<128xf32>
    %22 = vector.multi_reduction <add>, %21, %cst_11 [0] : vector<256x128xf32> to vector<128xf32>
    %23 = vector.shape_cast %22 : vector<128xf32> to vector<1x128xf32>
    %c0_12 = arith.constant 0 : index
    %c0_13 = arith.constant 0 : index
    %c0_14 = arith.constant 0 : index
    %24 = vector.load %arg5[%c0_12, %c0_13, %c0_14] : memref<1x2x128xf32, #tpu.memory_space<vmem>>, vector<1x1x128xf32>
    %25 = vector.shape_cast %24 : vector<1x1x128xf32> to vector<1x128xf32>
    %26 = vector.shape_cast %23 : vector<1x128xf32> to vector<1x1x128xf32>
    tpu.vector_store %arg5[%c0_12, %c0_13, %c0_14], %26 {strides = array<i32>} : memref<1x2x128xf32, #tpu.memory_space<vmem>>, vector<1x1x128xf32>,
    %27 = arith.mulf %21, %21 : vector<256x128xf32>
    %cst_15 = arith.constant dense<0.000000e+00> : vector<128xf32>
    %28 = vector.multi_reduction <add>, %27, %cst_15 [0] : vector<256x128xf32> to vector<128xf32>
    %29 = vector.shape_cast %28 : vector<128xf32> to vector<1x128xf32>
    %c0_16 = arith.constant 0 : index
    %c1 = arith.constant 1 : index
    %c0_17 = arith.constant 0 : index
    %30 = vector.load %arg5[%c0_16, %c1, %c0_17] : memref<1x2x128xf32, #tpu.memory_space<vmem>>, vector<1x1x128xf32>
    %31 = vector.shape_cast %30 : vector<1x1x128xf32> to vector<1x128xf32>
    %32 = vector.shape_cast %29 : vector<1x128xf32> to vector<1x1x128xf32>
    tpu.vector_store %arg5[%c0_16, %c1, %c0_17], %32 {strides = array<i32>} : memref<1x2x128xf32, #tpu.memory_space<vmem>>, vector<1x1x128xf32>,
    return
  }
  func.func @transform_0(%arg0: i32) -> (i32, i32) {
    %c0_i32 = arith.constant 0 : i32
    %c0_i32_0 = arith.constant 0 : i32
    return %arg0, %c0_i32 : i32, i32
  }
  func.func @transform_1(%arg0: i32) -> (i32, i32) {
    %c0_i32 = arith.constant 0 : i32
    %c0_i32_0 = arith.constant 0 : i32
    %c0_i32_1 = arith.constant 0 : i32
    return %c0_i32, %c0_i32_0 : i32, i32
  }
  func.func @transform_2(%arg0: i32) -> (i32, i32) {
    %c0_i32 = arith.constant 0 : i32
    %c0_i32_0 = arith.constant 0 : i32
    %c0_i32_1 = arith.constant 0 : i32
    return %c0_i32, %c0_i32_0 : i32, i32
  }
  func.func @transform_3(%arg0: i32) -> (i32, i32) {
    %c0_i32 = arith.constant 0 : i32
    %c0_i32_0 = arith.constant 0 : i32
    return %arg0, %c0_i32 : i32, i32
  }
  func.func @transform_4(%arg0: i32) -> (i32, i32, i32) {
    %c0_i32 = arith.constant 0 : i32
    %c0_i32_0 = arith.constant 0 : i32
    %c0_i32_1 = arith.constant 0 : i32
    return %arg0, %c0_i32, %c0_i32_0 : i32, i32, i32
  }
}

module attributes {stable_mosaic.version = 11 : i64} {
  func.func @proj_kernel(%arg0: i32, %arg1: memref<256x128xbf16, #tpu.memory_space<vmem>>, %arg2: memref<256x128xbf16, #tpu.memory_space<vmem>>, %arg3: memref<1x128xf32, #tpu.memory_space<vmem>>, %arg4: memref<1x128xf32, #tpu.memory_space<vmem>>, %arg5: memref<1x128xf32, #tpu.memory_space<vmem>>, %arg6: memref<1x128xf32, #tpu.memory_space<vmem>>, %arg7: memref<128x128xbf16, #tpu.memory_space<vmem>>, %arg8: memref<1x128xf32, #tpu.memory_space<vmem>>, %arg9: memref<256x128xf32, #tpu.memory_space<vmem>>, %arg10: memref<1x2x128xf32, #tpu.memory_space<vmem>>) attributes {dimension_semantics = [#tpu.dimension_semantics<parallel>], iteration_bounds = array<i64: 2>, scalar_prefetch = 0 : i64, scratch_operands = 0 : i64, tpu.core_type = #tpu.core_type<tc>, window_params = [{transform_indices = @transform_0, window_bounds = array<i64: 256, 128>}, {transform_indices = @transform_1, window_bounds = array<i64: 256, 128>}, {pipeline_mode = #tpu.pipeline_mode<synchronous>, transform_indices = @transform_2, window_bounds = array<i64: 1, 128>}, {pipeline_mode = #tpu.pipeline_mode<synchronous>, transform_indices = @transform_3, window_bounds = array<i64: 1, 128>}, {pipeline_mode = #tpu.pipeline_mode<synchronous>, transform_indices = @transform_4, window_bounds = array<i64: 1, 128>}, {pipeline_mode = #tpu.pipeline_mode<synchronous>, transform_indices = @transform_5, window_bounds = array<i64: 1, 128>}, {pipeline_mode = #tpu.pipeline_mode<synchronous>, transform_indices = @transform_6, window_bounds = array<i64: 128, 128>}, {pipeline_mode = #tpu.pipeline_mode<synchronous>, transform_indices = @transform_7, window_bounds = array<i64: 1, 128>}, {transform_indices = @transform_8, window_bounds = array<i64: 256, 128>}, {transform_indices = @transform_9, window_bounds = array<i64: 1, 2, 128>}]} {
    %c0 = arith.constant 0 : index
    %c0_0 = arith.constant 0 : index
    %0 = vector.load %arg1[%c0, %c0_0] : memref<256x128xbf16, #tpu.memory_space<vmem>>, vector<256x128xbf16>
    %1 = arith.extf %0 : vector<256x128xbf16> to vector<256x128xf32>
    %c0_1 = arith.constant 0 : index
    %c0_2 = arith.constant 0 : index
    %2 = vector.load %arg3[%c0_1, %c0_2] : memref<1x128xf32, #tpu.memory_space<vmem>>, vector<1x128xf32>
    %3 = vector.broadcast %2 : vector<1x128xf32> to vector<256x128xf32>
    %4 = arith.mulf %1, %3 : vector<256x128xf32>
    %c0_3 = arith.constant 0 : index
    %c0_4 = arith.constant 0 : index
    %5 = vector.load %arg4[%c0_3, %c0_4] : memref<1x128xf32, #tpu.memory_space<vmem>>, vector<1x128xf32>
    %6 = vector.broadcast %5 : vector<1x128xf32> to vector<256x128xf32>
    %7 = arith.addf %4, %6 : vector<256x128xf32>
    %c0_5 = arith.constant 0 : index
    %c0_6 = arith.constant 0 : index
    %8 = vector.load %arg2[%c0_5, %c0_6] : memref<256x128xbf16, #tpu.memory_space<vmem>>, vector<256x128xbf16>
    %9 = arith.extf %8 : vector<256x128xbf16> to vector<256x128xf32>
    %c0_7 = arith.constant 0 : index
    %c0_8 = arith.constant 0 : index
    %10 = vector.load %arg5[%c0_7, %c0_8] : memref<1x128xf32, #tpu.memory_space<vmem>>, vector<1x128xf32>
    %11 = vector.broadcast %10 : vector<1x128xf32> to vector<256x128xf32>
    %12 = arith.mulf %9, %11 : vector<256x128xf32>
    %13 = arith.addf %7, %12 : vector<256x128xf32>
    %c0_9 = arith.constant 0 : index
    %c0_10 = arith.constant 0 : index
    %14 = vector.load %arg6[%c0_9, %c0_10] : memref<1x128xf32, #tpu.memory_space<vmem>>, vector<1x128xf32>
    %15 = vector.broadcast %14 : vector<1x128xf32> to vector<256x128xf32>
    %16 = arith.addf %13, %15 : vector<256x128xf32>
    %17 = arith.truncf %16 : vector<256x128xf32> to vector<256x128xbf16>
    %c0_11 = arith.constant 0 : index
    %c0_12 = arith.constant 0 : index
    %18 = vector.load %arg7[%c0_11, %c0_12] : memref<128x128xbf16, #tpu.memory_space<vmem>>, vector<128x128xbf16>
    %cst = arith.constant dense<0.000000e+00> : vector<256x128xf32>
    %19 = tpu.matmul %17, %18, %cst {dimension_numbers = #tpu.dot_dimension_numbers<[1], [0], [0], [1], [0, 0, 1, 1], [], []>} : vector<256x128xbf16>, vector<128x128xbf16>, vector<256x128xf32> -> vector<256x128xf32>
    %c0_13 = arith.constant 0 : index
    %c0_14 = arith.constant 0 : index
    %20 = vector.load %arg8[%c0_13, %c0_14] : memref<1x128xf32, #tpu.memory_space<vmem>>, vector<1x128xf32>
    %21 = vector.broadcast %20 : vector<1x128xf32> to vector<256x128xf32>
    %22 = arith.addf %19, %21 : vector<256x128xf32>
    %c0_15 = arith.constant 0 : index
    %c0_16 = arith.constant 0 : index
    %23 = vector.load %arg9[%c0_15, %c0_16] : memref<256x128xf32, #tpu.memory_space<vmem>>, vector<256x128xf32>
    tpu.vector_store %arg9[%c0_15, %c0_16], %22 {strides = array<i32>} : memref<256x128xf32, #tpu.memory_space<vmem>>, vector<256x128xf32>,
    %cst_17 = arith.constant dense<0.000000e+00> : vector<128xf32>
    %24 = vector.multi_reduction <add>, %22, %cst_17 [0] : vector<256x128xf32> to vector<128xf32>
    %25 = vector.shape_cast %24 : vector<128xf32> to vector<1x128xf32>
    %c0_18 = arith.constant 0 : index
    %c0_19 = arith.constant 0 : index
    %c0_20 = arith.constant 0 : index
    %26 = vector.load %arg10[%c0_18, %c0_19, %c0_20] : memref<1x2x128xf32, #tpu.memory_space<vmem>>, vector<1x1x128xf32>
    %27 = vector.shape_cast %26 : vector<1x1x128xf32> to vector<1x128xf32>
    %28 = vector.shape_cast %25 : vector<1x128xf32> to vector<1x1x128xf32>
    tpu.vector_store %arg10[%c0_18, %c0_19, %c0_20], %28 {strides = array<i32>} : memref<1x2x128xf32, #tpu.memory_space<vmem>>, vector<1x1x128xf32>,
    %29 = arith.mulf %22, %22 : vector<256x128xf32>
    %cst_21 = arith.constant dense<0.000000e+00> : vector<128xf32>
    %30 = vector.multi_reduction <add>, %29, %cst_21 [0] : vector<256x128xf32> to vector<128xf32>
    %31 = vector.shape_cast %30 : vector<128xf32> to vector<1x128xf32>
    %c0_22 = arith.constant 0 : index
    %c1 = arith.constant 1 : index
    %c0_23 = arith.constant 0 : index
    %32 = vector.load %arg10[%c0_22, %c1, %c0_23] : memref<1x2x128xf32, #tpu.memory_space<vmem>>, vector<1x1x128xf32>
    %33 = vector.shape_cast %32 : vector<1x1x128xf32> to vector<1x128xf32>
    %34 = vector.shape_cast %31 : vector<1x128xf32> to vector<1x1x128xf32>
    tpu.vector_store %arg10[%c0_22, %c1, %c0_23], %34 {strides = array<i32>} : memref<1x2x128xf32, #tpu.memory_space<vmem>>, vector<1x1x128xf32>,
    return
  }
  func.func @transform_0(%arg0: i32) -> (i32, i32) {
    %c0_i32 = arith.constant 0 : i32
    %c0_i32_0 = arith.constant 0 : i32
    return %arg0, %c0_i32 : i32, i32
  }
  func.func @transform_1(%arg0: i32) -> (i32, i32) {
    %c0_i32 = arith.constant 0 : i32
    %c0_i32_0 = arith.constant 0 : i32
    return %arg0, %c0_i32 : i32, i32
  }
  func.func @transform_2(%arg0: i32) -> (i32, i32) {
    %c0_i32 = arith.constant 0 : i32
    %c0_i32_0 = arith.constant 0 : i32
    %c0_i32_1 = arith.constant 0 : i32
    return %c0_i32, %c0_i32_0 : i32, i32
  }
  func.func @transform_3(%arg0: i32) -> (i32, i32) {
    %c0_i32 = arith.constant 0 : i32
    %c0_i32_0 = arith.constant 0 : i32
    %c0_i32_1 = arith.constant 0 : i32
    return %c0_i32, %c0_i32_0 : i32, i32
  }
  func.func @transform_4(%arg0: i32) -> (i32, i32) {
    %c0_i32 = arith.constant 0 : i32
    %c0_i32_0 = arith.constant 0 : i32
    %c0_i32_1 = arith.constant 0 : i32
    return %c0_i32, %c0_i32_0 : i32, i32
  }
  func.func @transform_5(%arg0: i32) -> (i32, i32) {
    %c0_i32 = arith.constant 0 : i32
    %c0_i32_0 = arith.constant 0 : i32
    %c0_i32_1 = arith.constant 0 : i32
    return %c0_i32, %c0_i32_0 : i32, i32
  }
  func.func @transform_6(%arg0: i32) -> (i32, i32) {
    %c0_i32 = arith.constant 0 : i32
    %c0_i32_0 = arith.constant 0 : i32
    %c0_i32_1 = arith.constant 0 : i32
    return %c0_i32, %c0_i32_0 : i32, i32
  }
  func.func @transform_7(%arg0: i32) -> (i32, i32) {
    %c0_i32 = arith.constant 0 : i32
    %c0_i32_0 = arith.constant 0 : i32
    %c0_i32_1 = arith.constant 0 : i32
    return %c0_i32, %c0_i32_0 : i32, i32
  }
  func.func @transform_8(%arg0: i32) -> (i32, i32) {
    %c0_i32 = arith.constant 0 : i32
    %c0_i32_0 = arith.constant 0 : i32
    return %arg0, %c0_i32 : i32, i32
  }
  func.func @transform_9(%arg0: i32) -> (i32, i32, i32) {
    %c0_i32 = arith.constant 0 : i32
    %c0_i32_0 = arith.constant 0 : i32
    %c0_i32_1 = arith.constant 0 : i32
    return %arg0, %c0_i32, %c0_i32_0 : i32, i32, i32
  }
}

module attributes {stable_mosaic.version = 11 : i64} {
  func.func @dw_kernel(%arg0: i32, %arg1: i32, %arg2: memref<1x16x16x128xbf16, #tpu.memory_space<vmem>>, %arg3: memref<1x128xf32, #tpu.memory_space<vmem>>, %arg4: memref<1x128xf32, #tpu.memory_space<vmem>>, %arg5: memref<3x3x128xf32, #tpu.memory_space<vmem>>, %arg6: memref<1x128xf32, #tpu.memory_space<vmem>>, %arg7: memref<1x16x16x128xbf16, #tpu.memory_space<vmem>>, %arg8: memref<1x1x2x128xf32, #tpu.memory_space<vmem>>, %arg9: memref<18x18x128xf32, #tpu.memory_space<vmem>>) attributes {dimension_semantics = [#tpu.dimension_semantics<parallel>, #tpu.dimension_semantics<parallel>], iteration_bounds = array<i64: 2, 1>, scalar_prefetch = 0 : i64, scratch_operands = 1 : i64, tpu.core_type = #tpu.core_type<tc>, window_params = [{transform_indices = @transform_0, window_bounds = array<i64: 1, 16, 16, 128>}, {transform_indices = @transform_1, window_bounds = array<i64: 1, 128>}, {transform_indices = @transform_2, window_bounds = array<i64: 1, 128>}, {transform_indices = @transform_3, window_bounds = array<i64: 3, 3, 128>}, {transform_indices = @transform_4, window_bounds = array<i64: 1, 128>}, {transform_indices = @transform_5, window_bounds = array<i64: 1, 16, 16, 128>}, {transform_indices = @transform_6, window_bounds = array<i64: 1, 1, 2, 128>}]} {
    %c0 = arith.constant 0 : index
    %c0_0 = arith.constant 0 : index
    %c0_1 = arith.constant 0 : index
    %c0_2 = arith.constant 0 : index
    %0 = vector.load %arg2[%c0, %c0_0, %c0_1, %c0_2] : memref<1x16x16x128xbf16, #tpu.memory_space<vmem>>, vector<1x16x16x128xbf16>
    %1 = vector.shape_cast %0 : vector<1x16x16x128xbf16> to vector<16x16x128xbf16>
    %2 = arith.extf %1 : vector<16x16x128xbf16> to vector<16x16x128xf32>
    %c0_3 = arith.constant 0 : index
    %c0_4 = arith.constant 0 : index
    %3 = vector.load %arg3[%c0_3, %c0_4] : memref<1x128xf32, #tpu.memory_space<vmem>>, vector<1x128xf32>
    %4 = vector.shape_cast %3 : vector<1x128xf32> to vector<1x1x128xf32>
    %5 = vector.broadcast %4 : vector<1x1x128xf32> to vector<16x16x128xf32>
    %6 = arith.mulf %2, %5 : vector<16x16x128xf32>
    %c0_5 = arith.constant 0 : index
    %c0_6 = arith.constant 0 : index
    %7 = vector.load %arg4[%c0_5, %c0_6] : memref<1x128xf32, #tpu.memory_space<vmem>>, vector<1x128xf32>
    %8 = vector.shape_cast %7 : vector<1x128xf32> to vector<1x1x128xf32>
    %9 = vector.broadcast %8 : vector<1x1x128xf32> to vector<16x16x128xf32>
    %10 = arith.addf %6, %9 : vector<16x16x128xf32>
    %cst = arith.constant 0.000000e+00 : f32
    %11 = vector.broadcast %cst : f32 to vector<1x18x128xf32>
    %c0_7 = arith.constant 0 : index
    %c0_8 = arith.constant 0 : index
    %c0_9 = arith.constant 0 : index
    %12 = vector.load %arg9[%c0_7, %c0_8, %c0_9] : memref<18x18x128xf32, #tpu.memory_space<vmem>>, vector<1x18x128xf32>
    tpu.vector_store %arg9[%c0_7, %c0_8, %c0_9], %11 {strides = array<i32>} : memref<18x18x128xf32, #tpu.memory_space<vmem>>, vector<1x18x128xf32>,
    %cst_10 = arith.constant 0.000000e+00 : f32
    %13 = vector.broadcast %cst_10 : f32 to vector<1x18x128xf32>
    %c17 = arith.constant 17 : index
    %c0_11 = arith.constant 0 : index
    %c0_12 = arith.constant 0 : index
    %14 = vector.load %arg9[%c17, %c0_11, %c0_12] : memref<18x18x128xf32, #tpu.memory_space<vmem>>, vector<1x18x128xf32>
    tpu.vector_store %arg9[%c17, %c0_11, %c0_12], %13 {strides = array<i32>} : memref<18x18x128xf32, #tpu.memory_space<vmem>>, vector<1x18x128xf32>,
    %cst_13 = arith.constant 0.000000e+00 : f32
    %15 = vector.broadcast %cst_13 : f32 to vector<16x1x128xf32>
    %c1 = arith.constant 1 : index
    %c0_14 = arith.constant 0 : index
    %c0_15 = arith.constant 0 : index
    %16 = vector.load %arg9[%c1, %c0_14, %c0_15] : memref<18x18x128xf32, #tpu.memory_space<vmem>>, vector<16x1x128xf32>
    tpu.vector_store %arg9[%c1, %c0_14, %c0_15], %15 {strides = array<i32>} : memref<18x18x128xf32, #tpu.memory_space<vmem>>, vector<16x1x128xf32>,
    %cst_16 = arith.constant 0.000000e+00 : f32
    %17 = vector.broadcast %cst_16 : f32 to vector<16x1x128xf32>
    %c1_17 = arith.constant 1 : index
    %c17_18 = arith.constant 17 : index
    %c0_19 = arith.constant 0 : index
    %18 = vector.load %arg9[%c1_17, %c17_18, %c0_19] : memref<18x18x128xf32, #tpu.memory_space<vmem>>, vector<16x1x128xf32>
    tpu.vector_store %arg9[%c1_17, %c17_18, %c0_19], %17 {strides = array<i32>} : memref<18x18x128xf32, #tpu.memory_space<vmem>>, vector<16x1x128xf32>,
    %c1_20 = arith.constant 1 : index
    %c1_21 = arith.constant 1 : index
    %c0_22 = arith.constant 0 : index
    %19 = vector.load %arg9[%c1_20, %c1_21, %c0_22] : memref<18x18x128xf32, #tpu.memory_space<vmem>>, vector<16x16x128xf32>
    tpu.vector_store %arg9[%c1_20, %c1_21, %c0_22], %10 {strides = array<i32>} : memref<18x18x128xf32, #tpu.memory_space<vmem>>, vector<16x16x128xf32>,
    %c0_23 = arith.constant 0 : index
    %c0_24 = arith.constant 0 : index
    %c0_25 = arith.constant 0 : index
    %20 = vector.load %arg5[%c0_23, %c0_24, %c0_25] : memref<3x3x128xf32, #tpu.memory_space<vmem>>, vector<3x3x128xf32>
    %cst_26 = arith.constant 0.000000e+00 : f32
    %21 = vector.broadcast %cst_26 : f32 to vector<16x16x128xf32>
    %c0_27 = arith.constant 0 : index
    %c0_28 = arith.constant 0 : index
    %c0_29 = arith.constant 0 : index
    %22 = vector.load %arg9[%c0_27, %c0_28, %c0_29] : memref<18x18x128xf32, #tpu.memory_space<vmem>>, vector<18x16x128xf32>
    %23 = vector.extract_strided_slice %22 {offsets = [0, 0, 0], sizes = [16, 16, 128], strides = [1, 1, 1]} : vector<18x16x128xf32> to vector<16x16x128xf32>
    %24 = vector.extract_strided_slice %20 {offsets = [0, 0, 0], sizes = [1, 1, 128], strides = [1, 1, 1]} : vector<3x3x128xf32> to vector<1x1x128xf32>
    %25 = vector.shape_cast %24 : vector<1x1x128xf32> to vector<128xf32>
    %26 = vector.shape_cast %25 : vector<128xf32> to vector<1x1x128xf32>
    %27 = vector.broadcast %26 : vector<1x1x128xf32> to vector<16x16x128xf32>
    %28 = arith.mulf %23, %27 : vector<16x16x128xf32>
    %29 = arith.addf %21, %28 : vector<16x16x128xf32>
    %30 = vector.extract_strided_slice %22 {offsets = [1, 0, 0], sizes = [16, 16, 128], strides = [1, 1, 1]} : vector<18x16x128xf32> to vector<16x16x128xf32>
    %31 = vector.extract_strided_slice %20 {offsets = [1, 0, 0], sizes = [1, 1, 128], strides = [1, 1, 1]} : vector<3x3x128xf32> to vector<1x1x128xf32>
    %32 = vector.shape_cast %31 : vector<1x1x128xf32> to vector<128xf32>
    %33 = vector.shape_cast %32 : vector<128xf32> to vector<1x1x128xf32>
    %34 = vector.broadcast %33 : vector<1x1x128xf32> to vector<16x16x128xf32>
    %35 = arith.mulf %30, %34 : vector<16x16x128xf32>
    %36 = arith.addf %29, %35 : vector<16x16x128xf32>
    %37 = vector.extract_strided_slice %22 {offsets = [2, 0, 0], sizes = [16, 16, 128], strides = [1, 1, 1]} : vector<18x16x128xf32> to vector<16x16x128xf32>
    %38 = vector.extract_strided_slice %20 {offsets = [2, 0, 0], sizes = [1, 1, 128], strides = [1, 1, 1]} : vector<3x3x128xf32> to vector<1x1x128xf32>
    %39 = vector.shape_cast %38 : vector<1x1x128xf32> to vector<128xf32>
    %40 = vector.shape_cast %39 : vector<128xf32> to vector<1x1x128xf32>
    %41 = vector.broadcast %40 : vector<1x1x128xf32> to vector<16x16x128xf32>
    %42 = arith.mulf %37, %41 : vector<16x16x128xf32>
    %43 = arith.addf %36, %42 : vector<16x16x128xf32>
    %c0_30 = arith.constant 0 : index
    %c1_31 = arith.constant 1 : index
    %c0_32 = arith.constant 0 : index
    %44 = vector.load %arg9[%c0_30, %c1_31, %c0_32] : memref<18x18x128xf32, #tpu.memory_space<vmem>>, vector<18x16x128xf32>
    %45 = vector.extract_strided_slice %44 {offsets = [0, 0, 0], sizes = [16, 16, 128], strides = [1, 1, 1]} : vector<18x16x128xf32> to vector<16x16x128xf32>
    %46 = vector.extract_strided_slice %20 {offsets = [0, 1, 0], sizes = [1, 1, 128], strides = [1, 1, 1]} : vector<3x3x128xf32> to vector<1x1x128xf32>
    %47 = vector.shape_cast %46 : vector<1x1x128xf32> to vector<128xf32>
    %48 = vector.shape_cast %47 : vector<128xf32> to vector<1x1x128xf32>
    %49 = vector.broadcast %48 : vector<1x1x128xf32> to vector<16x16x128xf32>
    %50 = arith.mulf %45, %49 : vector<16x16x128xf32>
    %51 = arith.addf %43, %50 : vector<16x16x128xf32>
    %52 = vector.extract_strided_slice %44 {offsets = [1, 0, 0], sizes = [16, 16, 128], strides = [1, 1, 1]} : vector<18x16x128xf32> to vector<16x16x128xf32>
    %53 = vector.extract_strided_slice %20 {offsets = [1, 1, 0], sizes = [1, 1, 128], strides = [1, 1, 1]} : vector<3x3x128xf32> to vector<1x1x128xf32>
    %54 = vector.shape_cast %53 : vector<1x1x128xf32> to vector<128xf32>
    %55 = vector.shape_cast %54 : vector<128xf32> to vector<1x1x128xf32>
    %56 = vector.broadcast %55 : vector<1x1x128xf32> to vector<16x16x128xf32>
    %57 = arith.mulf %52, %56 : vector<16x16x128xf32>
    %58 = arith.addf %51, %57 : vector<16x16x128xf32>
    %59 = vector.extract_strided_slice %44 {offsets = [2, 0, 0], sizes = [16, 16, 128], strides = [1, 1, 1]} : vector<18x16x128xf32> to vector<16x16x128xf32>
    %60 = vector.extract_strided_slice %20 {offsets = [2, 1, 0], sizes = [1, 1, 128], strides = [1, 1, 1]} : vector<3x3x128xf32> to vector<1x1x128xf32>
    %61 = vector.shape_cast %60 : vector<1x1x128xf32> to vector<128xf32>
    %62 = vector.shape_cast %61 : vector<128xf32> to vector<1x1x128xf32>
    %63 = vector.broadcast %62 : vector<1x1x128xf32> to vector<16x16x128xf32>
    %64 = arith.mulf %59, %63 : vector<16x16x128xf32>
    %65 = arith.addf %58, %64 : vector<16x16x128xf32>
    %c0_33 = arith.constant 0 : index
    %c2 = arith.constant 2 : index
    %c0_34 = arith.constant 0 : index
    %66 = vector.load %arg9[%c0_33, %c2, %c0_34] : memref<18x18x128xf32, #tpu.memory_space<vmem>>, vector<18x16x128xf32>
    %67 = vector.extract_strided_slice %66 {offsets = [0, 0, 0], sizes = [16, 16, 128], strides = [1, 1, 1]} : vector<18x16x128xf32> to vector<16x16x128xf32>
    %68 = vector.extract_strided_slice %20 {offsets = [0, 2, 0], sizes = [1, 1, 128], strides = [1, 1, 1]} : vector<3x3x128xf32> to vector<1x1x128xf32>
    %69 = vector.shape_cast %68 : vector<1x1x128xf32> to vector<128xf32>
    %70 = vector.shape_cast %69 : vector<128xf32> to vector<1x1x128xf32>
    %71 = vector.broadcast %70 : vector<1x1x128xf32> to vector<16x16x128xf32>
    %72 = arith.mulf %67, %71 : vector<16x16x128xf32>
    %73 = arith.addf %65, %72 : vector<16x16x128xf32>
    %74 = vector.extract_strided_slice %66 {offsets = [1, 0, 0], sizes = [16, 16, 128], strides = [1, 1, 1]} : vector<18x16x128xf32> to vector<16x16x128xf32>
    %75 = vector.extract_strided_slice %20 {offsets = [1, 2, 0], sizes = [1, 1, 128], strides = [1, 1, 1]} : vector<3x3x128xf32> to vector<1x1x128xf32>
    %76 = vector.shape_cast %75 : vector<1x1x128xf32> to vector<128xf32>
    %77 = vector.shape_cast %76 : vector<128xf32> to vector<1x1x128xf32>
    %78 = vector.broadcast %77 : vector<1x1x128xf32> to vector<16x16x128xf32>
    %79 = arith.mulf %74, %78 : vector<16x16x128xf32>
    %80 = arith.addf %73, %79 : vector<16x16x128xf32>
    %81 = vector.extract_strided_slice %66 {offsets = [2, 0, 0], sizes = [16, 16, 128], strides = [1, 1, 1]} : vector<18x16x128xf32> to vector<16x16x128xf32>
    %82 = vector.extract_strided_slice %20 {offsets = [2, 2, 0], sizes = [1, 1, 128], strides = [1, 1, 1]} : vector<3x3x128xf32> to vector<1x1x128xf32>
    %83 = vector.shape_cast %82 : vector<1x1x128xf32> to vector<128xf32>
    %84 = vector.shape_cast %83 : vector<128xf32> to vector<1x1x128xf32>
    %85 = vector.broadcast %84 : vector<1x1x128xf32> to vector<16x16x128xf32>
    %86 = arith.mulf %81, %85 : vector<16x16x128xf32>
    %87 = arith.addf %80, %86 : vector<16x16x128xf32>
    %c0_35 = arith.constant 0 : index
    %c0_36 = arith.constant 0 : index
    %88 = vector.load %arg6[%c0_35, %c0_36] : memref<1x128xf32, #tpu.memory_space<vmem>>, vector<1x128xf32>
    %89 = vector.shape_cast %88 : vector<1x128xf32> to vector<1x1x128xf32>
    %90 = vector.broadcast %89 : vector<1x1x128xf32> to vector<16x16x128xf32>
    %91 = arith.addf %87, %90 : vector<16x16x128xf32>
    %cst_37 = arith.constant 5.000000e-01 : f32
    %92 = vector.broadcast %cst_37 : f32 to vector<16x16x128xf32>
    %93 = arith.mulf %92, %91 : vector<16x16x128xf32>
    %cst_38 = arith.constant 4.471500e-02 : f32
    %94 = vector.broadcast %cst_38 : f32 to vector<16x16x128xf32>
    %95 = arith.mulf %94, %91 : vector<16x16x128xf32>
    %96 = arith.mulf %95, %91 : vector<16x16x128xf32>
    %97 = arith.mulf %96, %91 : vector<16x16x128xf32>
    %98 = arith.addf %91, %97 : vector<16x16x128xf32>
    %cst_39 = arith.constant 0.797884583 : f32
    %99 = vector.broadcast %cst_39 : f32 to vector<16x16x128xf32>
    %100 = arith.mulf %99, %98 : vector<16x16x128xf32>
    %101 = math.tanh %100 : vector<16x16x128xf32>
    %cst_40 = arith.constant 1.000000e+00 : f32
    %102 = vector.broadcast %cst_40 : f32 to vector<16x16x128xf32>
    %103 = arith.addf %102, %101 : vector<16x16x128xf32>
    %104 = arith.mulf %93, %103 : vector<16x16x128xf32>
    %105 = arith.truncf %104 : vector<16x16x128xf32> to vector<16x16x128xbf16>
    %c0_41 = arith.constant 0 : index
    %c0_42 = arith.constant 0 : index
    %c0_43 = arith.constant 0 : index
    %c0_44 = arith.constant 0 : index
    %106 = vector.load %arg7[%c0_41, %c0_42, %c0_43, %c0_44] : memref<1x16x16x128xbf16, #tpu.memory_space<vmem>>, vector<1x16x16x128xbf16>
    %107 = vector.shape_cast %106 : vector<1x16x16x128xbf16> to vector<16x16x128xbf16>
    %108 = vector.shape_cast %105 : vector<16x16x128xbf16> to vector<1x16x16x128xbf16>
    tpu.vector_store %arg7[%c0_41, %c0_42, %c0_43, %c0_44], %108 {strides = array<i32>} : memref<1x16x16x128xbf16, #tpu.memory_space<vmem>>, vector<1x16x16x128xbf16>,
    %109 = arith.extf %105 : vector<16x16x128xbf16> to vector<16x16x128xf32>
    %cst_45 = arith.constant dense<0.000000e+00> : vector<16x128xf32>
    %110 = vector.multi_reduction <add>, %109, %cst_45 [0] : vector<16x16x128xf32> to vector<16x128xf32>
    %cst_46 = arith.constant dense<0.000000e+00> : vector<128xf32>
    %111 = vector.multi_reduction <add>, %110, %cst_46 [0] : vector<16x128xf32> to vector<128xf32>
    %112 = vector.shape_cast %111 : vector<128xf32> to vector<1x128xf32>
    %c0_47 = arith.constant 0 : index
    %c0_48 = arith.constant 0 : index
    %c0_49 = arith.constant 0 : index
    %c0_50 = arith.constant 0 : index
    %113 = vector.load %arg8[%c0_47, %c0_48, %c0_49, %c0_50] : memref<1x1x2x128xf32, #tpu.memory_space<vmem>>, vector<1x1x1x128xf32>
    %114 = vector.shape_cast %113 : vector<1x1x1x128xf32> to vector<1x128xf32>
    %115 = vector.shape_cast %112 : vector<1x128xf32> to vector<1x1x1x128xf32>
    tpu.vector_store %arg8[%c0_47, %c0_48, %c0_49, %c0_50], %115 {strides = array<i32>} : memref<1x1x2x128xf32, #tpu.memory_space<vmem>>, vector<1x1x1x128xf32>,
    %116 = arith.mulf %109, %109 : vector<16x16x128xf32>
    %cst_51 = arith.constant dense<0.000000e+00> : vector<16x128xf32>
    %117 = vector.multi_reduction <add>, %116, %cst_51 [0] : vector<16x16x128xf32> to vector<16x128xf32>
    %cst_52 = arith.constant dense<0.000000e+00> : vector<128xf32>
    %118 = vector.multi_reduction <add>, %117, %cst_52 [0] : vector<16x128xf32> to vector<128xf32>
    %119 = vector.shape_cast %118 : vector<128xf32> to vector<1x128xf32>
    %c0_53 = arith.constant 0 : index
    %c0_54 = arith.constant 0 : index
    %c1_55 = arith.constant 1 : index
    %c0_56 = arith.constant 0 : index
    %120 = vector.load %arg8[%c0_53, %c0_54, %c1_55, %c0_56] : memref<1x1x2x128xf32, #tpu.memory_space<vmem>>, vector<1x1x1x128xf32>
    %121 = vector.shape_cast %120 : vector<1x1x1x128xf32> to vector<1x128xf32>
    %122 = vector.shape_cast %119 : vector<1x128xf32> to vector<1x1x1x128xf32>
    tpu.vector_store %arg8[%c0_53, %c0_54, %c1_55, %c0_56], %122 {strides = array<i32>} : memref<1x1x2x128xf32, #tpu.memory_space<vmem>>, vector<1x1x1x128xf32>,
    return
  }
  func.func @transform_0(%arg0: i32, %arg1: i32) -> (i32, i32, i32, i32) {
    %c0_i32 = arith.constant 0 : i32
    %c0_i32_0 = arith.constant 0 : i32
    %c0_i32_1 = arith.constant 0 : i32
    return %arg0, %c0_i32, %c0_i32_0, %arg1 : i32, i32, i32, i32
  }
  func.func @transform_1(%arg0: i32, %arg1: i32) -> (i32, i32) {
    %c0_i32 = arith.constant 0 : i32
    %c0_i32_0 = arith.constant 0 : i32
    return %c0_i32, %arg1 : i32, i32
  }
  func.func @transform_2(%arg0: i32, %arg1: i32) -> (i32, i32) {
    %c0_i32 = arith.constant 0 : i32
    %c0_i32_0 = arith.constant 0 : i32
    return %c0_i32, %arg1 : i32, i32
  }
  func.func @transform_3(%arg0: i32, %arg1: i32) -> (i32, i32, i32) {
    %c0_i32 = arith.constant 0 : i32
    %c0_i32_0 = arith.constant 0 : i32
    %c0_i32_1 = arith.constant 0 : i32
    return %c0_i32, %c0_i32_0, %arg1 : i32, i32, i32
  }
  func.func @transform_4(%arg0: i32, %arg1: i32) -> (i32, i32) {
    %c0_i32 = arith.constant 0 : i32
    %c0_i32_0 = arith.constant 0 : i32
    return %c0_i32, %arg1 : i32, i32
  }
  func.func @transform_5(%arg0: i32, %arg1: i32) -> (i32, i32, i32, i32) {
    %c0_i32 = arith.constant 0 : i32
    %c0_i32_0 = arith.constant 0 : i32
    %c0_i32_1 = arith.constant 0 : i32
    return %arg0, %c0_i32, %c0_i32_0, %arg1 : i32, i32, i32, i32
  }
  func.func @transform_6(%arg0: i32, %arg1: i32) -> (i32, i32, i32, i32) {
    %c0_i32 = arith.constant 0 : i32
    %c0_i32_0 = arith.constant 0 : i32
    %c0_i32_1 = arith.constant 0 : i32
    return %arg0, %arg1, %c0_i32, %c0_i32_0 : i32, i32, i32, i32
  }
}

</mosaic_0001>

<llo_original>
// kernel: inverted_residual_feed_forward.5
$region0: #{inverted_residual_feed_forward.5}
  #allocation0 [shape = 'u32[]', space=smem, size = 0x4, offset = 0x4, fixed_abs, tag = 'smem constant byte address 0x4 - core index']
  #allocation1 [shape = 'u32[72,128]{1,0:T(1,128)}', space=vmem, size = 0x9000, scoped, tag = 'internal scratch']
  %s0 = inlined_call_operand.vmem [shape: bf16[512,128], index: 0, kind: input, shape index: {}]
  %s1 = inlined_call_operand.vmem [shape: bf16[512,128], index: 1, kind: input, shape index: {}]
  %s2 = inlined_call_operand.vmem [shape: f32[1,128], index: 2, kind: input, shape index: {}]
  %s3 = inlined_call_operand.vmem [shape: f32[1,128], index: 3, kind: input, shape index: {}]
  %s4 = inlined_call_operand.vmem [shape: f32[1,128], index: 4, kind: input, shape index: {}]
  %s5 = inlined_call_operand.vmem [shape: f32[1,128], index: 5, kind: input, shape index: {}]
  %s6 = inlined_call_operand.vmem [shape: bf16[128,128], index: 6, kind: input, shape index: {}]
  %s7 = inlined_call_operand.vmem [shape: f32[1,128], index: 7, kind: input, shape index: {}]
  %s8 = inlined_call_operand.vmem [shape: f32[512,128], index: 8, kind: output, shape index: {0}]
  %s9 = inlined_call_operand.vmem [shape: f32[2,2,128], index: 9, kind: output, shape index: {1}]
  %10 = xla_tuple %s8, %s9
  %s11 = sld [smem:[#allocation0]]
  $region73: #{inverted_residual_feed_forward.5} parent=0
    _
  %s13 = ssub.s32 1, %s11
  %s14 = scalar_select 0, %s13, %s11
  loop: start=0, step=1, limit=4
  $region2: #{inverted_residual_feed_forward.5} parent=0 // loop_pre_header
    _
  $region3: #{inverted_residual_feed_forward.5} parent=0 // loop_header
    %s16 = sphi 0, %s20
    %p17 = scmp.ge.s32.totalorder %s16, 4
    %s26 = sphi 0, %s28
    %s29 = sphi 0, %s26
    %s30 = sphi 0, %s29
    %s46 = sphi 0, %s30
    %s52 = sphi 0, %s54
    %s55 = sphi 0, %s52
    %s56 = sphi 0, %s55
    %s72 = sphi 0, %s56
    %s76 = sphi 0, %s76
    %s78 = sphi 0, %s76
    %s79 = sphi 0, %s78
    %s93 = sphi 0, %s79
    %s97 = sphi 0, %s97
    %s99 = sphi 0, %s97
    %s100 = sphi 0, %s99
    %s114 = sphi 0, %s100
    %s118 = sphi 0, %s118
    %s120 = sphi 0, %s118
    %s121 = sphi 0, %s120
    %s135 = sphi 0, %s121
    %s139 = sphi 0, %s139
    %s141 = sphi 0, %s139
    %s142 = sphi 0, %s141
    %s156 = sphi 0, %s142
    %s160 = sphi 0, %s160
    %s162 = sphi 0, %s160
    %s163 = sphi 0, %s162
    %s177 = sphi 0, %s163
    %s181 = sphi 0, %s181
    %s183 = sphi 0, %s181
    %s184 = sphi 0, %s183
    %s198 = sphi 0, %s184
    %s204 = sphi 0, %s206
    %s207 = sphi 0, %s204
    %s208 = sphi 0, %s207
    %s224 = sphi 0, %s208
    %s230 = sphi 0, %s232
    %s233 = sphi 0, %s230
    %s234 = sphi 0, %s233
    %s250 = sphi 0, %s234
  $region4: #{inverted_residual_feed_forward.5} parent=0 // loop_header_branch
    %19 = sbr.rel (%p17) target = $region8
  $region5: #{inverted_residual_feed_forward.5} parent=0 // loop_body
    %s21 = ssub.s32 %s16, 1
    %s22 = ssub.s32 %s16, 2
    %s23 = sadd.s32 %s16, 1
    %s24 = ssub.s32 %s16, %s23
    %p25 = scmp.eq.s32.totalorder %s24, 0
    %s27 = sadd.s32 %s26, 1
    %s28 = scalar_select %p25, %s26, %s27
    %p31 = pneg %p25
    %p32 = scmp.eq.s32.totalorder %s16, 1
    %p33 = por %p31, %p32
    %p34 = scmp.ne.s32.totalorder %s26, %s29
    %p35 = scmp.eq.s32.totalorder %s16, 0
    %p36 = por %p34, %p35
    %p37 = scmp.ne.s32.totalorder %s26, %s29
    %p38 = scmp.eq.s32.totalorder %s21, 1
    %p39 = por %p37, %p38
    %p40 = scmp.ne.s32.totalorder %s29, %s30
    %p41 = scmp.eq.s32.totalorder %s21, 0
    %p42 = por %p40, %p41
    %p43 = scmp.ne.s32.totalorder %s29, %s30
    %p44 = scmp.eq.s32.totalorder %s22, 1
    %p45 = por %p43, %p44
    %p47 = scmp.ne.s32.totalorder %s30, %s46
    %p48 = scmp.eq.s32.totalorder %s22, 0
    %p49 = por %p47, %p48
    %s50 = ssub.s32 %s16, %s23
    %p51 = scmp.eq.s32.totalorder %s50, 0
    %s53 = sadd.s32 %s52, 1
    %s54 = scalar_select %p51, %s52, %s53
    %p57 = pneg %p51
    %p58 = scmp.eq.s32.totalorder %s16, 1
    %p59 = por %p57, %p58
    %p60 = scmp.ne.s32.totalorder %s52, %s55
    %p61 = scmp.eq.s32.totalorder %s16, 0
    %p62 = por %p60, %p61
    %p63 = scmp.ne.s32.totalorder %s52, %s55
    %p64 = scmp.eq.s32.totalorder %s21, 1
    %p65 = por %p63, %p64
    %p66 = scmp.ne.s32.totalorder %s55, %s56
    %p67 = scmp.eq.s32.totalorder %s21, 0
    %p68 = por %p66, %p67
    %p69 = scmp.ne.s32.totalorder %s55, %s56
    %p70 = scmp.eq.s32.totalorder %s22, 1
    %p71 = por %p69, %p70
    %p73 = scmp.ne.s32.totalorder %s56, %s72
    %p74 = scmp.eq.s32.totalorder %s22, 0
    %p75 = por %p73, %p74
    %s77 = sadd.s32 %s76, 1
    %p80 = scmp.eq.s32.totalorder %s16, 1
    %p81 = scmp.ne.s32.totalorder %s76, %s78
    %p82 = scmp.eq.s32.totalorder %s16, 0
    %p83 = por %p81, %p82
    %p84 = scmp.ne.s32.totalorder %s76, %s78
    %p85 = scmp.eq.s32.totalorder %s21, 1
    %p86 = por %p84, %p85
    %p87 = scmp.ne.s32.totalorder %s78, %s79
    %p88 = scmp.eq.s32.totalorder %s21, 0
    %p89 = por %p87, %p88
    %p90 = scmp.ne.s32.totalorder %s78, %s79
    %p91 = scmp.eq.s32.totalorder %s22, 1
    %p92 = por %p90, %p91
    %p94 = scmp.ne.s32.totalorder %s79, %s93
    %p95 = scmp.eq.s32.totalorder %s22, 0
    %p96 = por %p94, %p95
    %s98 = sadd.s32 %s97, 1
    %p101 = scmp.eq.s32.totalorder %s16, 1
    %p102 = scmp.ne.s32.totalorder %s97, %s99
    %p103 = scmp.eq.s32.totalorder %s16, 0
    %p104 = por %p102, %p103
    %p105 = scmp.ne.s32.totalorder %s97, %s99
    %p106 = scmp.eq.s32.totalorder %s21, 1
    %p107 = por %p105, %p106
    %p108 = scmp.ne.s32.totalorder %s99, %s100
    %p109 = scmp.eq.s32.totalorder %s21, 0
    %p110 = por %p108, %p109
    %p111 = scmp.ne.s32.totalorder %s99, %s100
    %p112 = scmp.eq.s32.totalorder %s22, 1
    %p113 = por %p111, %p112
    %p115 = scmp.ne.s32.totalorder %s100, %s114
    %p116 = scmp.eq.s32.totalorder %s22, 0
    %p117 = por %p115, %p116
    %s119 = sadd.s32 %s118, 1
    %p122 = scmp.eq.s32.totalorder %s16, 1
    %p123 = scmp.ne.s32.totalorder %s118, %s120
    %p124 = scmp.eq.s32.totalorder %s16, 0
    %p125 = por %p123, %p124
    %p126 = scmp.ne.s32.totalorder %s118, %s120
    %p127 = scmp.eq.s32.totalorder %s21, 1
    %p128 = por %p126, %p127
    %p129 = scmp.ne.s32.totalorder %s120, %s121
    %p130 = scmp.eq.s32.totalorder %s21, 0
    %p131 = por %p129, %p130
    %p132 = scmp.ne.s32.totalorder %s120, %s121
    %p133 = scmp.eq.s32.totalorder %s22, 1
    %p134 = por %p132, %p133
    %p136 = scmp.ne.s32.totalorder %s121, %s135
    %p137 = scmp.eq.s32.totalorder %s22, 0
    %p138 = por %p136, %p137
    %s140 = sadd.s32 %s139, 1
    %p143 = scmp.eq.s32.totalorder %s16, 1
    %p144 = scmp.ne.s32.totalorder %s139, %s141
    %p145 = scmp.eq.s32.totalorder %s16, 0
    %p146 = por %p144, %p145
    %p147 = scmp.ne.s32.totalorder %s139, %s141
    %p148 = scmp.eq.s32.totalorder %s21, 1
    %p149 = por %p147, %p148
    %p150 = scmp.ne.s32.totalorder %s141, %s142
    %p151 = scmp.eq.s32.totalorder %s21, 0
    %p152 = por %p150, %p151
    %p153 = scmp.ne.s32.totalorder %s141, %s142
    %p154 = scmp.eq.s32.totalorder %s22, 1
    %p155 = por %p153, %p154
    %p157 = scmp.ne.s32.totalorder %s142, %s156
    %p158 = scmp.eq.s32.totalorder %s22, 0
    %p159 = por %p157, %p158
    %s161 = sadd.s32 %s160, 1
    %p164 = scmp.eq.s32.totalorder %s16, 1
    %p165 = scmp.ne.s32.totalorder %s160, %s162
    %p166 = scmp.eq.s32.totalorder %s16, 0
    %p167 = por %p165, %p166
    %p168 = scmp.ne.s32.totalorder %s160, %s162
    %p169 = scmp.eq.s32.totalorder %s21, 1
    %p170 = por %p168, %p169
    %p171 = scmp.ne.s32.totalorder %s162, %s163
    %p172 = scmp.eq.s32.totalorder %s21, 0
    %p173 = por %p171, %p172
    %p174 = scmp.ne.s32.totalorder %s162, %s163
    %p175 = scmp.eq.s32.totalorder %s22, 1
    %p176 = por %p174, %p175
    %p178 = scmp.ne.s32.totalorder %s163, %s177
    %p179 = scmp.eq.s32.totalorder %s22, 0
    %p180 = por %p178, %p179
    %s182 = sadd.s32 %s181, 1
    %p185 = scmp.eq.s32.totalorder %s16, 1
    %p186 = scmp.ne.s32.totalorder %s181, %s183
    %p187 = scmp.eq.s32.totalorder %s16, 0
    %p188 = por %p186, %p187
    %p189 = scmp.ne.s32.totalorder %s181, %s183
    %p190 = scmp.eq.s32.totalorder %s21, 1
    %p191 = por %p189, %p190
    %p192 = scmp.ne.s32.totalorder %s183, %s184
    %p193 = scmp.eq.s32.totalorder %s21, 0
    %p194 = por %p192, %p193
    %p195 = scmp.ne.s32.totalorder %s183, %s184
    %p196 = scmp.eq.s32.totalorder %s22, 1
    %p197 = por %p195, %p196
    %p199 = scmp.ne.s32.totalorder %s184, %s198
    %p200 = scmp.eq.s32.totalorder %s22, 0
    %p201 = por %p199, %p200
    %s202 = ssub.s32 %s16, %s23
    %p203 = scmp.eq.s32.totalorder %s202, 0
    %s205 = sadd.s32 %s204, 1
    %s206 = scalar_select %p203, %s204, %s205
    %p209 = pneg %p203
    %p210 = scmp.eq.s32.totalorder %s16, 1
    %p211 = por %p209, %p210
    %p212 = scmp.ne.s32.totalorder %s204, %s207
    %p213 = scmp.eq.s32.totalorder %s16, 0
    %p214 = por %p212, %p213
    %p215 = scmp.ne.s32.totalorder %s204, %s207
    %p216 = scmp.eq.s32.totalorder %s21, 1
    %p217 = por %p215, %p216
    %p218 = scmp.ne.s32.totalorder %s207, %s208
    %p219 = scmp.eq.s32.totalorder %s21, 0
    %p220 = por %p218, %p219
    %p221 = scmp.ne.s32.totalorder %s207, %s208
    %p222 = scmp.eq.s32.totalorder %s22, 1
    %p223 = por %p221, %p222
    %p225 = scmp.ne.s32.totalorder %s208, %s224
    %p226 = scmp.eq.s32.totalorder %s22, 0
    %p227 = por %p225, %p226
    %s228 = ssub.s32 %s16, %s23
    %p229 = scmp.eq.s32.totalorder %s228, 0
    %s231 = sadd.s32 %s230, 1
    %s232 = scalar_select %p229, %s230, %s231
    %p235 = pneg %p229
    %p236 = scmp.eq.s32.totalorder %s16, 1
    %p237 = por %p235, %p236
    %p238 = scmp.ne.s32.totalorder %s230, %s233
    %p239 = scmp.eq.s32.totalorder %s16, 0
    %p240 = por %p238, %p239
    %p241 = scmp.ne.s32.totalorder %s230, %s233
    %p242 = scmp.eq.s32.totalorder %s21, 1
    %p243 = por %p241, %p242
    %p244 = scmp.ne.s32.totalorder %s233, %s234
    %p245 = scmp.eq.s32.totalorder %s21, 0
    %p246 = por %p244, %p245
    %p247 = scmp.ne.s32.totalorder %s233, %s234
    %p248 = scmp.eq.s32.totalorder %s22, 1
    %p249 = por %p247, %p248
    %p251 = scmp.ne.s32.totalorder %s234, %s250
    %p252 = scmp.eq.s32.totalorder %s22, 0
    %p253 = por %p251, %p252
    %p254 = scmp.le.s32.totalorder 1, %s16
    %p255 = scmp.lt.s32.totalorder %s16, 3
    %p256 = pnand %p254, %p255
    %p257 = pneg %p256
    // Predicated region
    $region9: #{inverted_residual_feed_forward.5} parent=5 // pred_check
      _
    $region10: #{inverted_residual_feed_forward.5} parent=5 // pred_check_branch
      %259 = sbr.rel (%p256) target = $region12
    $region11: #{inverted_residual_feed_forward.5} parent=5 // pred_region
      %s260 = ssub.s32 %s16, 1
      // Predicated region
      $region13: #{inverted_residual_feed_forward.5} parent=11 // pred_check
        %p261 = pneg %p89
      $region14: #{inverted_residual_feed_forward.5} parent=11 // pred_check_branch
        %263 = sbr.rel (%p261) target = $region16
      $region15: #{inverted_residual_feed_forward.5} parent=11 // pred_region
        _
      $region16: #{inverted_residual_feed_forward.5} parent=11 // pred_fallthru
        _
      // Predicated region
      $region17: #{inverted_residual_feed_forward.5} parent=11 // pred_check
        %p264 = pneg %p110
      $region18: #{inverted_residual_feed_forward.5} parent=11 // pred_check_branch
        %266 = sbr.rel (%p264) target = $region20
      $region19: #{inverted_residual_feed_forward.5} parent=11 // pred_region
        _
      $region20: #{inverted_residual_feed_forward.5} parent=11 // pred_fallthru
        _
      // Predicated region
      $region21: #{inverted_residual_feed_forward.5} parent=11 // pred_check
        %p267 = pneg %p131
      $region22: #{inverted_residual_feed_forward.5} parent=11 // pred_check_branch
        %269 = sbr.rel (%p267) target = $region24
      $region23: #{inverted_residual_feed_forward.5} parent=11 // pred_region
        _
      $region24: #{inverted_residual_feed_forward.5} parent=11 // pred_fallthru
        _
      // Predicated region
      $region25: #{inverted_residual_feed_forward.5} parent=11 // pred_check
        %p270 = pneg %p152
      $region26: #{inverted_residual_feed_forward.5} parent=11 // pred_check_branch
        %272 = sbr.rel (%p270) target = $region28
      $region27: #{inverted_residual_feed_forward.5} parent=11 // pred_region
        _
      $region28: #{inverted_residual_feed_forward.5} parent=11 // pred_fallthru
        _
      // Predicated region
      $region29: #{inverted_residual_feed_forward.5} parent=11 // pred_check
        %p273 = pneg %p173
      $region30: #{inverted_residual_feed_forward.5} parent=11 // pred_check_branch
        %275 = sbr.rel (%p273) target = $region32
      $region31: #{inverted_residual_feed_forward.5} parent=11 // pred_region
        _
      $region32: #{inverted_residual_feed_forward.5} parent=11 // pred_fallthru
        _
      // Predicated region
      $region33: #{inverted_residual_feed_forward.5} parent=11 // pred_check
        %p276 = pneg %p194
      $region34: #{inverted_residual_feed_forward.5} parent=11 // pred_check_branch
        %278 = sbr.rel (%p276) target = $region36
      $region35: #{inverted_residual_feed_forward.5} parent=11 // pred_region
        _
      $region36: #{inverted_residual_feed_forward.5} parent=11 // pred_fallthru
        _
    $region12: #{inverted_residual_feed_forward.5} parent=5 // pred_fallthru
      _
    %p279 = scmp.lt.s32.totalorder %s16, 2
    // Predicated region
    $region37: #{inverted_residual_feed_forward.5} parent=5 // pred_check
      %p280 = pneg %p279
    $region38: #{inverted_residual_feed_forward.5} parent=5 // pred_check_branch
      %282 = sbr.rel (%p280) target = $region40
    $region39: #{inverted_residual_feed_forward.5} parent=5 // pred_region
      // Predicated region
      $region41: #{inverted_residual_feed_forward.5} parent=39 // pred_check
        %p283 = pneg %p36
      $region42: #{inverted_residual_feed_forward.5} parent=39 // pred_check_branch
        %285 = sbr.rel (%p283) target = $region44
      $region43: #{inverted_residual_feed_forward.5} parent=39 // pred_region
        %s286 = smul.u32 32, %s16
        %p287 = scmp.lt.s32.totalorder %s286, 63
        %s288 = scalar_select %p287, %s286, 63
        %s289 = smul.addr %s288, 4
        %s290 = scalar_lea.vmem %s0, %s289
        %s291 = smul.u32 32, %s16
      $region44: #{inverted_residual_feed_forward.5} parent=39 // pred_fallthru
        _
      // Predicated region
      $region45: #{inverted_residual_feed_forward.5} parent=39 // pred_check
        %p292 = pneg %p62
      $region46: #{inverted_residual_feed_forward.5} parent=39 // pred_check_branch
        %294 = sbr.rel (%p292) target = $region48
      $region47: #{inverted_residual_feed_forward.5} parent=39 // pred_region
        %s295 = smul.u32 32, %s16
        %p296 = scmp.lt.s32.totalorder %s295, 63
        %s297 = scalar_select %p296, %s295, 63
        %s298 = smul.addr %s297, 4
        %s299 = scalar_lea.vmem %s1, %s298
        %s300 = smul.u32 32, %s16
      $region48: #{inverted_residual_feed_forward.5} parent=39 // pred_fallthru
        _
    $region40: #{inverted_residual_feed_forward.5} parent=5 // pred_fallthru
      _
    %p301 = scmp.le.s32.totalorder 1, %s16
    %p302 = scmp.lt.s32.totalorder %s16, 3
    %p303 = pnand %p301, %p302
    %p304 = pneg %p303
    // Predicated region
    $region49: #{inverted_residual_feed_forward.5} parent=5 // pred_check
      _
    $region50: #{inverted_residual_feed_forward.5} parent=5 // pred_check_branch
      %306 = sbr.rel (%p303) target = $region52
    $region51: #{inverted_residual_feed_forward.5} parent=5 // pred_region
      %s307 = ssub.s32 %s16, 1
      %s308 = smul.u32 32, %s21
      %p309 = scmp.lt.s32.totalorder %s308, 63
      %s310 = scalar_select %p309, %s308, 63
      %s311 = smul.addr %s310, 4
      %s312 = scalar_lea.vmem %s0, %s311
      %p313 = pneg %p42
      %p314 = pneg %p39
      %s315 = smul.u32 32, %s21
      %p316 = scmp.lt.s32.totalorder %s315, 63
      %s317 = scalar_select %p316, %s315, 63
      %s318 = smul.addr %s317, 4
      %s319 = scalar_lea.vmem %s1, %s318
      %p320 = pneg %p68
      %p321 = pneg %p65
      %p322 = pneg %p89
      %p323 = pneg %p86
      %p324 = pneg %p110
      %p325 = pneg %p107
      %p326 = pneg %p131
      %p327 = pneg %p128
      %p328 = pneg %p152
      %p329 = pneg %p149
      %p330 = pneg %p173
      %p331 = pneg %p170
      %p332 = pneg %p194
      %p333 = pneg %p191
      %p334 = pneg %p220
      %p335 = pneg %p217
      %s336 = smul.u32 32, %s21
      %p337 = scmp.lt.s32.totalorder %s336, 63
      %s338 = scalar_select %p337, %s336, 63
      %s339 = smul.addr %s338, 8
      %s340 = scalar_lea.vmem %s8, %s339
      %p341 = pneg %p246
      %p342 = pneg %p243
      %p343 = scmp.lt.s32.totalorder %s21, 1
      %s344 = scalar_select %p343, %s21, 1
      %s345 = smul.addr %s344, 2
      %s346 = scalar_lea.vmem %s9, %s345
      %s347 = smul.u32 32, %s21
      %p348 = scmp.lt.s32.totalorder %s347, 63
      %s349 = scalar_select %p348, %s347, 63
      %s350 = smul.addr %s349, 4
      %s351 = scalar_lea.vmem %s0, %s350
      %s352 = smul.u32 32, %s21
      %s353 = smul.u32 32, %s21
      %p354 = scmp.lt.s32.totalorder %s353, 63
      %s355 = scalar_select %p354, %s353, 63
      %s356 = smul.addr %s355, 4
      %s357 = scalar_lea.vmem %s1, %s356
      %s358 = smul.u32 32, %s21
      %s359 = smul.u32 32, %s21
      %p360 = scmp.lt.s32.totalorder %s359, 63
      %s361 = scalar_select %p360, %s359, 63
      %s362 = smul.addr %s361, 8
      %s363 = scalar_lea.vmem %s8, %s362
      %s364 = smul.u32 32, %s21
      %p365 = scmp.lt.s32.totalorder %s21, 1
      %s366 = scalar_select %p365, %s21, 1
      %s367 = smul.addr %s366, 2
      %s368 = scalar_lea.vmem %s9, %s367
      %v369 = vld [vmem:[%s351] sm:$0xf]
      %v370 = vld [vmem:[%s351 + $0x4] sm:$0xf]
      %v371 = vld [vmem:[%s351 + $0x8] sm:$0xf]
      %v372 = vld [vmem:[%s351 + $0xc] sm:$0xf]
      %v373 = vld [vmem:[%s351 + $0x10] sm:$0xf]
      %v374 = vld [vmem:[%s351 + $0x14] sm:$0xf]
      %v375 = vld [vmem:[%s351 + $0x18] sm:$0xf]
      %v376 = vld [vmem:[%s351 + $0x1c] sm:$0xf]
      %v377 = vld [vmem:[%s351 + $0x20] sm:$0xf]
      %v378 = vld [vmem:[%s351 + $0x24] sm:$0xf]
      %v379 = vld [vmem:[%s351 + $0x28] sm:$0xf]
      %v380 = vld [vmem:[%s351 + $0x2c] sm:$0xf]
      %v381 = vld [vmem:[%s351 + $0x30] sm:$0xf]
      %v382 = vld [vmem:[%s351 + $0x34] sm:$0xf]
      %v383 = vld [vmem:[%s351 + $0x38] sm:$0xf]
      %v384 = vld [vmem:[%s351 + $0x3c] sm:$0xf]
      %v385 = vld [vmem:[%s351 + $0x40] sm:$0xf]
      %v386 = vld [vmem:[%s351 + $0x44] sm:$0xf]
      %v387 = vld [vmem:[%s351 + $0x48] sm:$0xf]
      %v388 = vld [vmem:[%s351 + $0x4c] sm:$0xf]
      %v389 = vld [vmem:[%s351 + $0x50] sm:$0xf]
      %v390 = vld [vmem:[%s351 + $0x54] sm:$0xf]
      %v391 = vld [vmem:[%s351 + $0x58] sm:$0xf]
      %v392 = vld [vmem:[%s351 + $0x5c] sm:$0xf]
      %v393 = vld [vmem:[%s351 + $0x60] sm:$0xf]
      %v394 = vld [vmem:[%s351 + $0x64] sm:$0xf]
      %v395 = vld [vmem:[%s351 + $0x68] sm:$0xf]
      %v396 = vld [vmem:[%s351 + $0x6c] sm:$0xf]
      %v397 = vld [vmem:[%s351 + $0x70] sm:$0xf]
      %v398 = vld [vmem:[%s351 + $0x74] sm:$0xf]
      %v399 = vld [vmem:[%s351 + $0x78] sm:$0xf]
      %v400 = vld [vmem:[%s351 + $0x7c] sm:$0xf]
      %v401 = vunpack.c.l.bf16 %v369
      %v402 = vunpack.c.l.bf16 %v370
      %v403 = vunpack.c.l.bf16 %v371
      %v404 = vunpack.c.l.bf16 %v372
      %v405 = vunpack.c.l.bf16 %v373
      %v406 = vunpack.c.l.bf16 %v374
      %v407 = vunpack.c.l.bf16 %v375
      %v408 = vunpack.c.l.bf16 %v376
      %v409 = vunpack.c.l.bf16 %v377
      %v410 = vunpack.c.l.bf16 %v378
      %v411 = vunpack.c.l.bf16 %v379
      %v412 = vunpack.c.l.bf16 %v380
      %v413 = vunpack.c.l.bf16 %v381
      %v414 = vunpack.c.l.bf16 %v382
      %v415 = vunpack.c.l.bf16 %v383
      %v416 = vunpack.c.l.bf16 %v384
      %v417 = vunpack.c.l.bf16 %v385
      %v418 = vunpack.c.l.bf16 %v386
      %v419 = vunpack.c.l.bf16 %v387
      %v420 = vunpack.c.l.bf16 %v388
      %v421 = vunpack.c.l.bf16 %v389
      %v422 = vunpack.c.l.bf16 %v390
      %v423 = vunpack.c.l.bf16 %v391
      %v424 = vunpack.c.l.bf16 %v392
      %v425 = vunpack.c.l.bf16 %v393
      %v426 = vunpack.c.l.bf16 %v394
      %v427 = vunpack.c.l.bf16 %v395
      %v428 = vunpack.c.l.bf16 %v396
      %v429 = vunpack.c.l.bf16 %v397
      %v430 = vunpack.c.l.bf16 %v398
      %v431 = vunpack.c.l.bf16 %v399
      %v432 = vunpack.c.l.bf16 %v400
      %v433 = vld [vmem:[%s2] sm:$0x1]
      %v435 = vperm.slane %v433, 0
      %v437 = vmul.f32 %v401, %v435
      %v438 = vmul.f32 %v402, %v435
      %v439 = vmul.f32 %v403, %v435
      %v440 = vmul.f32 %v404, %v435
      %v441 = vmul.f32 %v405, %v435
      %v442 = vmul.f32 %v406, %v435
      %v443 = vmul.f32 %v407, %v435
      %v444 = vmul.f32 %v408, %v435
      %v445 = vmul.f32 %v409, %v435
      %v446 = vmul.f32 %v410, %v435
      %v447 = vmul.f32 %v411, %v435
      %v448 = vmul.f32 %v412, %v435
      %v449 = vmul.f32 %v413, %v435
      %v450 = vmul.f32 %v414, %v435
      %v451 = vmul.f32 %v415, %v435
      %v452 = vmul.f32 %v416, %v435
      %v453 = vmul.f32 %v417, %v435
      %v454 = vmul.f32 %v418, %v435
      %v455 = vmul.f32 %v419, %v435
      %v456 = vmul.f32 %v420, %v435
      %v457 = vmul.f32 %v421, %v435
      %v458 = vmul.f32 %v422, %v435
      %v459 = vmul.f32 %v423, %v435
      %v460 = vmul.f32 %v424, %v435
      %v461 = vmul.f32 %v425, %v435
      %v462 = vmul.f32 %v426, %v435
      %v463 = vmul.f32 %v427, %v435
      %v464 = vmul.f32 %v428, %v435
      %v465 = vmul.f32 %v429, %v435
      %v466 = vmul.f32 %v430, %v435
      %v467 = vmul.f32 %v431, %v435
      %v468 = vmul.f32 %v432, %v435
      %v469 = vld [vmem:[%s3] sm:$0x1]
      %v471 = vperm.slane %v469, 0
      %v473 = vadd.f32 %v437, %v471
      %v474 = vadd.f32 %v438, %v471
      %v475 = vadd.f32 %v439, %v471
      %v476 = vadd.f32 %v440, %v471
      %v477 = vadd.f32 %v441, %v471
      %v478 = vadd.f32 %v442, %v471
      %v479 = vadd.f32 %v443, %v471
      %v480 = vadd.f32 %v444, %v471
      %v481 = vadd.f32 %v445, %v471
      %v482 = vadd.f32 %v446, %v471
      %v483 = vadd.f32 %v447, %v471
      %v484 = vadd.f32 %v448, %v471
      %v485 = vadd.f32 %v449, %v471
      %v486 = vadd.f32 %v450, %v471
      %v487 = vadd.f32 %v451, %v471
      %v488 = vadd.f32 %v452, %v471
      %v489 = vadd.f32 %v453, %v471
      %v490 = vadd.f32 %v454, %v471
      %v491 = vadd.f32 %v455, %v471
      %v492 = vadd.f32 %v456, %v471
      %v493 = vadd.f32 %v457, %v471
      %v494 = vadd.f32 %v458, %v471
      %v495 = vadd.f32 %v459, %v471
      %v496 = vadd.f32 %v460, %v471
      %v497 = vadd.f32 %v461, %v471
      %v498 = vadd.f32 %v462, %v471
      %v499 = vadd.f32 %v463, %v471
      %v500 = vadd.f32 %v464, %v471
      %v501 = vadd.f32 %v465, %v471
      %v502 = vadd.f32 %v466, %v471
      %v503 = vadd.f32 %v467, %v471
      %v504 = vadd.f32 %v468, %v471
      %v505 = vld [vmem:[%s357] sm:$0xf]
      %v506 = vld [vmem:[%s357 + $0x4] sm:$0xf]
      %v507 = vld [vmem:[%s357 + $0x8] sm:$0xf]
      %v508 = vld [vmem:[%s357 + $0xc] sm:$0xf]
      %v509 = vld [vmem:[%s357 + $0x10] sm:$0xf]
      %v510 = vld [vmem:[%s357 + $0x14] sm:$0xf]
      %v511 = vld [vmem:[%s357 + $0x18] sm:$0xf]
      %v512 = vld [vmem:[%s357 + $0x1c] sm:$0xf]
      %v513 = vld [vmem:[%s357 + $0x20] sm:$0xf]
      %v514 = vld [vmem:[%s357 + $0x24] sm:$0xf]
      %v515 = vld [vmem:[%s357 + $0x28] sm:$0xf]
      %v516 = vld [vmem:[%s357 + $0x2c] sm:$0xf]
      %v517 = vld [vmem:[%s357 + $0x30] sm:$0xf]
      %v518 = vld [vmem:[%s357 + $0x34] sm:$0xf]
      %v519 = vld [vmem:[%s357 + $0x38] sm:$0xf]
      %v520 = vld [vmem:[%s357 + $0x3c] sm:$0xf]
      %v521 = vld [vmem:[%s357 + $0x40] sm:$0xf]
      %v522 = vld [vmem:[%s357 + $0x44] sm:$0xf]
      %v523 = vld [vmem:[%s357 + $0x48] sm:$0xf]
      %v524 = vld [vmem:[%s357 + $0x4c] sm:$0xf]
      %v525 = vld [vmem:[%s357 + $0x50] sm:$0xf]
      %v526 = vld [vmem:[%s357 + $0x54] sm:$0xf]
      %v527 = vld [vmem:[%s357 + $0x58] sm:$0xf]
      %v528 = vld [vmem:[%s357 + $0x5c] sm:$0xf]
      %v529 = vld [vmem:[%s357 + $0x60] sm:$0xf]
      %v530 = vld [vmem:[%s357 + $0x64] sm:$0xf]
      %v531 = vld [vmem:[%s357 + $0x68] sm:$0xf]
      %v532 = vld [vmem:[%s357 + $0x6c] sm:$0xf]
      %v533 = vld [vmem:[%s357 + $0x70] sm:$0xf]
      %v534 = vld [vmem:[%s357 + $0x74] sm:$0xf]
      %v535 = vld [vmem:[%s357 + $0x78] sm:$0xf]
      %v536 = vld [vmem:[%s357 + $0x7c] sm:$0xf]
      %v537 = vunpack.c.l.bf16 %v505
      %v538 = vunpack.c.l.bf16 %v506
      %v539 = vunpack.c.l.bf16 %v507
      %v540 = vunpack.c.l.bf16 %v508
      %v541 = vunpack.c.l.bf16 %v509
      %v542 = vunpack.c.l.bf16 %v510
      %v543 = vunpack.c.l.bf16 %v511
      %v544 = vunpack.c.l.bf16 %v512
      %v545 = vunpack.c.l.bf16 %v513
      %v546 = vunpack.c.l.bf16 %v514
      %v547 = vunpack.c.l.bf16 %v515
      %v548 = vunpack.c.l.bf16 %v516
      %v549 = vunpack.c.l.bf16 %v517
      %v550 = vunpack.c.l.bf16 %v518
      %v551 = vunpack.c.l.bf16 %v519
      %v552 = vunpack.c.l.bf16 %v520
      %v553 = vunpack.c.l.bf16 %v521
      %v554 = vunpack.c.l.bf16 %v522
      %v555 = vunpack.c.l.bf16 %v523
      %v556 = vunpack.c.l.bf16 %v524
      %v557 = vunpack.c.l.bf16 %v525
      %v558 = vunpack.c.l.bf16 %v526
      %v559 = vunpack.c.l.bf16 %v527
      %v560 = vunpack.c.l.bf16 %v528
      %v561 = vunpack.c.l.bf16 %v529
      %v562 = vunpack.c.l.bf16 %v530
      %v563 = vunpack.c.l.bf16 %v531
      %v564 = vunpack.c.l.bf16 %v532
      %v565 = vunpack.c.l.bf16 %v533
      %v566 = vunpack.c.l.bf16 %v534
      %v567 = vunpack.c.l.bf16 %v535
      %v568 = vunpack.c.l.bf16 %v536
      %v569 = vld [vmem:[%s4] sm:$0x1]
      %v571 = vperm.slane %v569, 0
      %v573 = vmul.f32 %v537, %v571
      %v574 = vmul.f32 %v538, %v571
      %v575 = vmul.f32 %v539, %v571
      %v576 = vmul.f32 %v540, %v571
      %v577 = vmul.f32 %v541, %v571
      %v578 = vmul.f32 %v542, %v571
      %v579 = vmul.f32 %v543, %v571
      %v580 = vmul.f32 %v544, %v571
      %v581 = vmul.f32 %v545, %v571
      %v582 = vmul.f32 %v546, %v571
      %v583 = vmul.f32 %v547, %v571
      %v584 = vmul.f32 %v548, %v571
      %v585 = vmul.f32 %v549, %v571
      %v586 = vmul.f32 %v550, %v571
      %v587 = vmul.f32 %v551, %v571
      %v588 = vmul.f32 %v552, %v571
      %v589 = vmul.f32 %v553, %v571
      %v590 = vmul.f32 %v554, %v571
      %v591 = vmul.f32 %v555, %v571
      %v592 = vmul.f32 %v556, %v571
      %v593 = vmul.f32 %v557, %v571
      %v594 = vmul.f32 %v558, %v571
      %v595 = vmul.f32 %v559, %v571
      %v596 = vmul.f32 %v560, %v571
      %v597 = vmul.f32 %v561, %v571
      %v598 = vmul.f32 %v562, %v571
      %v599 = vmul.f32 %v563, %v571
      %v600 = vmul.f32 %v564, %v571
      %v601 = vmul.f32 %v565, %v571
      %v602 = vmul.f32 %v566, %v571
      %v603 = vmul.f32 %v567, %v571
      %v604 = vmul.f32 %v568, %v571
      %v605 = vadd.f32 %v473, %v573
      %v606 = vadd.f32 %v474, %v574
      %v607 = vadd.f32 %v475, %v575
      %v608 = vadd.f32 %v476, %v576
      %v609 = vadd.f32 %v477, %v577
      %v610 = vadd.f32 %v478, %v578
      %v611 = vadd.f32 %v479, %v579
      %v612 = vadd.f32 %v480, %v580
      %v613 = vadd.f32 %v481, %v581
      %v614 = vadd.f32 %v482, %v582
      %v615 = vadd.f32 %v483, %v583
      %v616 = vadd.f32 %v484, %v584
      %v617 = vadd.f32 %v485, %v585
      %v618 = vadd.f32 %v486, %v586
      %v619 = vadd.f32 %v487, %v587
      %v620 = vadd.f32 %v488, %v588
      %v621 = vadd.f32 %v489, %v589
      %v622 = vadd.f32 %v490, %v590
      %v623 = vadd.f32 %v491, %v591
      %v624 = vadd.f32 %v492, %v592
      %v625 = vadd.f32 %v493, %v593
      %v626 = vadd.f32 %v494, %v594
      %v627 = vadd.f32 %v495, %v595
      %v628 = vadd.f32 %v496, %v596
      %v629 = vadd.f32 %v497, %v597
      %v630 = vadd.f32 %v498, %v598
      %v631 = vadd.f32 %v499, %v599
      %v632 = vadd.f32 %v500, %v600
      %v633 = vadd.f32 %v501, %v601
      %v634 = vadd.f32 %v502, %v602
      %v635 = vadd.f32 %v503, %v603
      %v636 = vadd.f32 %v504, %v604
      %v637 = vld [vmem:[%s5] sm:$0x1]
      %v639 = vperm.slane %v637, 0
      %v641 = vadd.f32 %v605, %v639
      %v642 = vadd.f32 %v606, %v639
      %v643 = vadd.f32 %v607, %v639
      %v644 = vadd.f32 %v608, %v639
      %v645 = vadd.f32 %v609, %v639
      %v646 = vadd.f32 %v610, %v639
      %v647 = vadd.f32 %v611, %v639
      %v648 = vadd.f32 %v612, %v639
      %v649 = vadd.f32 %v613, %v639
      %v650 = vadd.f32 %v614, %v639
      %v651 = vadd.f32 %v615, %v639
      %v652 = vadd.f32 %v616, %v639
      %v653 = vadd.f32 %v617, %v639
      %v654 = vadd.f32 %v618, %v639
      %v655 = vadd.f32 %v619, %v639
      %v656 = vadd.f32 %v620, %v639
      %v657 = vadd.f32 %v621, %v639
      %v658 = vadd.f32 %v622, %v639
      %v659 = vadd.f32 %v623, %v639
      %v660 = vadd.f32 %v624, %v639
      %v661 = vadd.f32 %v625, %v639
      %v662 = vadd.f32 %v626, %v639
      %v663 = vadd.f32 %v627, %v639
      %v664 = vadd.f32 %v628, %v639
      %v665 = vadd.f32 %v629, %v639
      %v666 = vadd.f32 %v630, %v639
      %v667 = vadd.f32 %v631, %v639
      %v668 = vadd.f32 %v632, %v639
      %v669 = vadd.f32 %v633, %v639
      %v670 = vadd.f32 %v634, %v639
      %v671 = vadd.f32 %v635, %v639
      %v672 = vadd.f32 %v636, %v639
      %v673 = vpack.c.bf16 %v642, %v641
      %v674 = vpack.c.bf16 %v644, %v643
      %v675 = vpack.c.bf16 %v646, %v645
      %v676 = vpack.c.bf16 %v648, %v647
      %v677 = vpack.c.bf16 %v650, %v649
      %v678 = vpack.c.bf16 %v652, %v651
      %v679 = vpack.c.bf16 %v654, %v653
      %v680 = vpack.c.bf16 %v656, %v655
      %v681 = vpack.c.bf16 %v658, %v657
      %v682 = vpack.c.bf16 %v660, %v659
      %v683 = vpack.c.bf16 %v662, %v661
      %v684 = vpack.c.bf16 %v664, %v663
      %v685 = vpack.c.bf16 %v666, %v665
      %v686 = vpack.c.bf16 %v668, %v667
      %v687 = vpack.c.bf16 %v670, %v669
      %v688 = vpack.c.bf16 %v672, %v671
      %v689 = vld [vmem:[%s6] sm:$0xf]
      %v690 = vld [vmem:[%s6 + $0x4] sm:$0xf]
      %v691 = vld [vmem:[%s6 + $0x8] sm:$0xf]
      %v692 = vld [vmem:[%s6 + $0xc] sm:$0xf]
      %v693 = vld [vmem:[%s6 + $0x10] sm:$0xf]
      %v694 = vld [vmem:[%s6 + $0x14] sm:$0xf]
      %v695 = vld [vmem:[%s6 + $0x18] sm:$0xf]
      %v696 = vld [vmem:[%s6 + $0x1c] sm:$0xf]
      %v697 = vld [vmem:[%s6 + $0x20] sm:$0xf]
      %v698 = vld [vmem:[%s6 + $0x24] sm:$0xf]
      %v699 = vld [vmem:[%s6 + $0x28] sm:$0xf]
      %v700 = vld [vmem:[%s6 + $0x2c] sm:$0xf]
      %v701 = vld [vmem:[%s6 + $0x30] sm:$0xf]
      %v702 = vld [vmem:[%s6 + $0x34] sm:$0xf]
      %v703 = vld [vmem:[%s6 + $0x38] sm:$0xf]
      %v704 = vld [vmem:[%s6 + $0x3c] sm:$0xf]
      %v705 = vld [vmem:[%s7] sm:$0x1]
      %v707 = vperm.slane %v705, 0
      %v725 = vunpack.c.l.b16 %v689
      %v726 = vunpack.c.l.b16 %v690
      %v727 = vunpack.c.l.b16 %v691
      %v728 = vunpack.c.l.b16 %v692
      %v729 = vunpack.c.l.b16 %v693
      %v730 = vunpack.c.l.b16 %v694
      %v731 = vunpack.c.l.b16 %v695
      %v732 = vunpack.c.l.b16 %v696
      %v733 = vunpack.c.l.b16 %v697
      %v734 = vunpack.c.l.b16 %v698
      %v735 = vunpack.c.l.b16 %v699
      %v736 = vunpack.c.l.b16 %v700
      %v737 = vunpack.c.l.b16 %v701
      %v738 = vunpack.c.l.b16 %v702
      %v739 = vunpack.c.l.b16 %v703
      %v740 = vunpack.c.l.b16 %v704
      %v741 = vpack.c.b16 %v726, %v725
      %v742 = vpack.c.b16 %v728, %v727
      %v743 = vpack.c.b16 %v730, %v729
      %v744 = vpack.c.b16 %v732, %v731
      %v745 = vpack.c.b16 %v734, %v733
      %v746 = vpack.c.b16 %v736, %v735
      %v747 = vpack.c.b16 %v738, %v737
      %v748 = vpack.c.b16 %v740, %v739
      %757 = vmatpush.bf16.msra.mxu0 %v748
      %758 = vmatpush.bf16.msra.mxu0 %v747
      %759 = vmatpush.bf16.msra.mxu0 %v746
      %760 = vmatpush.bf16.msra.mxu0 %v745
      %761 = vmatpush.bf16.msra.mxu0 %v744
      %762 = vmatpush.bf16.msra.mxu0 %v743
      %763 = vmatpush.bf16.msra.mxu0 %v742
      %764 = vmatpush.bf16.msra.mxu0 %v741
      %765 = vmatmul.bf16.gmra.mxu0 %v673
      %v766 = vpop.f32.mrf.mxu0
      %v767 = vadd.f32 %v707, %v766
      %v768 = vpop.f32.mrf.mxu0
      %v769 = vadd.f32 %v707, %v768
      %770 = vmatmul.bf16.gmra.mxu0 %v674
      %v771 = vpop.f32.mrf.mxu0
      %v772 = vadd.f32 %v707, %v771
      %v773 = vpop.f32.mrf.mxu0
      %v774 = vadd.f32 %v707, %v773
      %775 = vmatmul.bf16.gmra.mxu0 %v675
      %v776 = vpop.f32.mrf.mxu0
      %v777 = vadd.f32 %v707, %v776
      %v778 = vpop.f32.mrf.mxu0
      %v779 = vadd.f32 %v707, %v778
      %780 = vmatmul.bf16.gmra.mxu0 %v676
      %v781 = vpop.f32.mrf.mxu0
      %v782 = vadd.f32 %v707, %v781
      %v783 = vpop.f32.mrf.mxu0
      %v784 = vadd.f32 %v707, %v783
      %785 = vmatmul.bf16.gmra.mxu0 %v677
      %v786 = vpop.f32.mrf.mxu0
      %v787 = vadd.f32 %v707, %v786
      %v788 = vpop.f32.mrf.mxu0
      %v789 = vadd.f32 %v707, %v788
      %790 = vmatmul.bf16.gmra.mxu0 %v678
      %v791 = vpop.f32.mrf.mxu0
      %v792 = vadd.f32 %v707, %v791
      %v793 = vpop.f32.mrf.mxu0
      %v794 = vadd.f32 %v707, %v793
      %795 = vmatmul.bf16.gmra.mxu0 %v679
      %v796 = vpop.f32.mrf.mxu0
      %v797 = vadd.f32 %v707, %v796
      %v798 = vpop.f32.mrf.mxu0
      %v799 = vadd.f32 %v707, %v798
      %800 = vmatmul.bf16.gmra.mxu0 %v680
      %v801 = vpop.f32.mrf.mxu0
      %v802 = vadd.f32 %v707, %v801
      %v803 = vpop.f32.mrf.mxu0
      %v804 = vadd.f32 %v707, %v803
      %805 = vmatmul.bf16.gmra.mxu0 %v681
      %v806 = vpop.f32.mrf.mxu0
      %v807 = vadd.f32 %v707, %v806
      %v808 = vpop.f32.mrf.mxu0
      %v809 = vadd.f32 %v707, %v808
      %810 = vmatmul.bf16.gmra.mxu0 %v682
      %v811 = vpop.f32.mrf.mxu0
      %v812 = vadd.f32 %v707, %v811
      %v813 = vpop.f32.mrf.mxu0
      %v814 = vadd.f32 %v707, %v813
      %815 = vmatmul.bf16.gmra.mxu0 %v683
      %v816 = vpop.f32.mrf.mxu0
      %v817 = vadd.f32 %v707, %v816
      %v818 = vpop.f32.mrf.mxu0
      %v819 = vadd.f32 %v707, %v818
      %820 = vmatmul.bf16.gmra.mxu0 %v684
      %v821 = vpop.f32.mrf.mxu0
      %v822 = vadd.f32 %v707, %v821
      %v823 = vpop.f32.mrf.mxu0
      %v824 = vadd.f32 %v707, %v823
      %825 = vmatmul.bf16.gmra.mxu0 %v685
      %v826 = vpop.f32.mrf.mxu0
      %v827 = vadd.f32 %v707, %v826
      %v828 = vpop.f32.mrf.mxu0
      %v829 = vadd.f32 %v707, %v828
      %830 = vmatmul.bf16.gmra.mxu0 %v686
      %v831 = vpop.f32.mrf.mxu0
      %v832 = vadd.f32 %v707, %v831
      %v833 = vpop.f32.mrf.mxu0
      %v834 = vadd.f32 %v707, %v833
      %835 = vmatmul.bf16.gmra.mxu0 %v687
      %v836 = vpop.f32.mrf.mxu0
      %v837 = vadd.f32 %v707, %v836
      %v838 = vpop.f32.mrf.mxu0
      %v839 = vadd.f32 %v707, %v838
      %840 = vmatmul.bf16.gmra.mxu0 %v688
      %v841 = vpop.f32.mrf.mxu0
      %v842 = vadd.f32 %v707, %v841
      %v843 = vpop.f32.mrf.mxu0
      %v844 = vadd.f32 %v707, %v843
      %845 = vdwg.mxu0
      %846 = vst [vmem:[%s363] sm:$0xff] %v767
      %847 = vst [vmem:[%s363 + $0x8] sm:$0xff] %v769
      %848 = vst [vmem:[%s363 + $0x10] sm:$0xff] %v772
      %849 = vst [vmem:[%s363 + $0x18] sm:$0xff] %v774
      %850 = vst [vmem:[%s363 + $0x20] sm:$0xff] %v777
      %851 = vst [vmem:[%s363 + $0x28] sm:$0xff] %v779
      %852 = vst [vmem:[%s363 + $0x30] sm:$0xff] %v782
      %853 = vst [vmem:[%s363 + $0x38] sm:$0xff] %v784
      %854 = vst [vmem:[%s363 + $0x40] sm:$0xff] %v787
      %855 = vst [vmem:[%s363 + $0x48] sm:$0xff] %v789
      %856 = vst [vmem:[%s363 + $0x50] sm:$0xff] %v792
      %857 = vst [vmem:[%s363 + $0x58] sm:$0xff] %v794
      %858 = vst [vmem:[%s363 + $0x60] sm:$0xff] %v797
      %859 = vst [vmem:[%s363 + $0x68] sm:$0xff] %v799
      %860 = vst [vmem:[%s363 + $0x70] sm:$0xff] %v802
      %861 = vst [vmem:[%s363 + $0x78] sm:$0xff] %v804
      %862 = vst [vmem:[%s363 + $0x80] sm:$0xff] %v807
      %863 = vst [vmem:[%s363 + $0x88] sm:$0xff] %v809
      %864 = vst [vmem:[%s363 + $0x90] sm:$0xff] %v812
      %865 = vst [vmem:[%s363 + $0x98] sm:$0xff] %v814
      %866 = vst [vmem:[%s363 + $0xa0] sm:$0xff] %v817
      %867 = vst [vmem:[%s363 + $0xa8] sm:$0xff] %v819
      %868 = vst [vmem:[%s363 + $0xb0] sm:$0xff] %v822
      %869 = vst [vmem:[%s363 + $0xb8] sm:$0xff] %v824
      %870 = vst [vmem:[%s363 + $0xc0] sm:$0xff] %v827
      %871 = vst [vmem:[%s363 + $0xc8] sm:$0xff] %v829
      %872 = vst [vmem:[%s363 + $0xd0] sm:$0xff] %v832
      %873 = vst [vmem:[%s363 + $0xd8] sm:$0xff] %v834
      %874 = vst [vmem:[%s363 + $0xe0] sm:$0xff] %v837
      %875 = vst [vmem:[%s363 + $0xe8] sm:$0xff] %v839
      %876 = vst [vmem:[%s363 + $0xf0] sm:$0xff] %v842
      %877 = vst [vmem:[%s363 + $0xf8] sm:$0xff] %v844
      %v878 = vadd.f32 %v767, %v769
      %v879 = vadd.f32 %v878, %v772
      %v880 = vadd.f32 %v879, %v774
      %v881 = vadd.f32 %v880, %v777
      %v882 = vadd.f32 %v881, %v779
      %v883 = vadd.f32 %v882, %v782
      %v884 = vadd.f32 %v883, %v784
      %v885 = vadd.f32 %v884, %v787
      %v886 = vadd.f32 %v885, %v789
      %v887 = vadd.f32 %v886, %v792
      %v888 = vadd.f32 %v887, %v794
      %v889 = vadd.f32 %v888, %v797
      %v890 = vadd.f32 %v889, %v799
      %v891 = vadd.f32 %v890, %v802
      %v892 = vadd.f32 %v891, %v804
      %v893 = vadd.f32 %v892, %v807
      %v894 = vadd.f32 %v893, %v809
      %v895 = vadd.f32 %v894, %v812
      %v896 = vadd.f32 %v895, %v814
      %v897 = vadd.f32 %v896, %v817
      %v898 = vadd.f32 %v897, %v819
      %v899 = vadd.f32 %v898, %v822
      %v900 = vadd.f32 %v899, %v824
      %v901 = vadd.f32 %v900, %v827
      %v902 = vadd.f32 %v901, %v829
      %v903 = vadd.f32 %v902, %v832
      %v904 = vadd.f32 %v903, %v834
      %v905 = vadd.f32 %v904, %v837
      %v906 = vadd.f32 %v905, %v839
      %v907 = vadd.f32 %v906, %v842
      %v908 = vadd.f32 %v907, %v844
      %v909 = vrot.slane %v908, 4
      %v910 = vadd.f32 %v908, %v909
      %v911 = vrot.slane %v910, 2
      %v912 = vadd.f32 %v910, %v911
      %v913 = vrot.slane %v912, 1
      %v914 = vadd.f32 %v912, %v913
      %915 = vst [vmem:[%s368] sm:$0x1] %v914
      %v916 = vmul.f32 %v767, %v767
      %v917 = vmul.f32 %v769, %v769
      %v918 = vmul.f32 %v772, %v772
      %v919 = vmul.f32 %v774, %v774
      %v920 = vmul.f32 %v777, %v777
      %v921 = vmul.f32 %v779, %v779
      %v922 = vmul.f32 %v782, %v782
      %v923 = vmul.f32 %v784, %v784
      %v924 = vmul.f32 %v787, %v787
      %v925 = vmul.f32 %v789, %v789
      %v926 = vmul.f32 %v792, %v792
      %v927 = vmul.f32 %v794, %v794
      %v928 = vmul.f32 %v797, %v797
      %v929 = vmul.f32 %v799, %v799
      %v930 = vmul.f32 %v802, %v802
      %v931 = vmul.f32 %v804, %v804
      %v932 = vmul.f32 %v807, %v807
      %v933 = vmul.f32 %v809, %v809
      %v934 = vmul.f32 %v812, %v812
      %v935 = vmul.f32 %v814, %v814
      %v936 = vmul.f32 %v817, %v817
      %v937 = vmul.f32 %v819, %v819
      %v938 = vmul.f32 %v822, %v822
      %v939 = vmul.f32 %v824, %v824
      %v940 = vmul.f32 %v827, %v827
      %v941 = vmul.f32 %v829, %v829
      %v942 = vmul.f32 %v832, %v832
      %v943 = vmul.f32 %v834, %v834
      %v944 = vmul.f32 %v837, %v837
      %v945 = vmul.f32 %v839, %v839
      %v946 = vmul.f32 %v842, %v842
      %v947 = vmul.f32 %v844, %v844
      %v948 = vadd.f32 %v916, %v917
      %v949 = vadd.f32 %v948, %v918
      %v950 = vadd.f32 %v949, %v919
      %v951 = vadd.f32 %v950, %v920
      %v952 = vadd.f32 %v951, %v921
      %v953 = vadd.f32 %v952, %v922
      %v954 = vadd.f32 %v953, %v923
      %v955 = vadd.f32 %v954, %v924
      %v956 = vadd.f32 %v955, %v925
      %v957 = vadd.f32 %v956, %v926
      %v958 = vadd.f32 %v957, %v927
      %v959 = vadd.f32 %v958, %v928
      %v960 = vadd.f32 %v959, %v929
      %v961 = vadd.f32 %v960, %v930
      %v962 = vadd.f32 %v961, %v931
      %v963 = vadd.f32 %v962, %v932
      %v964 = vadd.f32 %v963, %v933
      %v965 = vadd.f32 %v964, %v934
      %v966 = vadd.f32 %v965, %v935
      %v967 = vadd.f32 %v966, %v936
      %v968 = vadd.f32 %v967, %v937
      %v969 = vadd.f32 %v968, %v938
      %v970 = vadd.f32 %v969, %v939
      %v971 = vadd.f32 %v970, %v940
      %v972 = vadd.f32 %v971, %v941
      %v973 = vadd.f32 %v972, %v942
      %v974 = vadd.f32 %v973, %v943
      %v975 = vadd.f32 %v974, %v944
      %v976 = vadd.f32 %v975, %v945
      %v977 = vadd.f32 %v976, %v946
      %v978 = vadd.f32 %v977, %v947
      %v979 = vrot.slane %v978, 4
      %v980 = vadd.f32 %v978, %v979
      %v981 = vrot.slane %v980, 2
      %v982 = vadd.f32 %v980, %v981
      %v983 = vrot.slane %v982, 1
      %v984 = vadd.f32 %v982, %v983
      %985 = vst [vmem:[%s368 + $0x1] sm:$0x1] %v984
      %s986 = smul.u32 32, %s21
      %p987 = scmp.lt.s32.totalorder %s986, 63
      %s988 = scalar_select %p987, %s986, 63
      %s989 = smul.addr %s988, 8
      %s990 = scalar_lea.vmem %s8, %s989
      %p991 = scmp.lt.s32.totalorder %s21, 1
      %s992 = scalar_select %p991, %s21, 1
      %s993 = smul.addr %s992, 2
      %s994 = scalar_lea.vmem %s9, %s993
      // Predicated region
      $region53: #{inverted_residual_feed_forward.5} parent=51 // pred_check
        %p995 = pneg %p217
      $region54: #{inverted_residual_feed_forward.5} parent=51 // pred_check_branch
        %997 = sbr.rel (%p995) target = $region56
      $region55: #{inverted_residual_feed_forward.5} parent=51 // pred_region
        %s998 = smul.u32 32, %s21
      $region56: #{inverted_residual_feed_forward.5} parent=51 // pred_fallthru
        _
      // Predicated region
      $region57: #{inverted_residual_feed_forward.5} parent=51 // pred_check
        %p999 = pneg %p243
      $region58: #{inverted_residual_feed_forward.5} parent=51 // pred_check_branch
        %1001 = sbr.rel (%p999) target = $region60
      $region59: #{inverted_residual_feed_forward.5} parent=51 // pred_region
        _
      $region60: #{inverted_residual_feed_forward.5} parent=51 // pred_fallthru
        _
    $region52: #{inverted_residual_feed_forward.5} parent=5 // pred_fallthru
      _
    %p1002 = scmp.le.s32.totalorder 2, %s16
    // Predicated region
    $region61: #{inverted_residual_feed_forward.5} parent=5 // pred_check
      %p1003 = pneg %p1002
    $region62: #{inverted_residual_feed_forward.5} parent=5 // pred_check_branch
      %1005 = sbr.rel (%p1003) target = $region64
    $region63: #{inverted_residual_feed_forward.5} parent=5 // pred_region
      %s1006 = ssub.s32 %s16, 2
      // Predicated region
      $region65: #{inverted_residual_feed_forward.5} parent=63 // pred_check
        %p1007 = pneg %p223
      $region66: #{inverted_residual_feed_forward.5} parent=63 // pred_check_branch
        %1009 = sbr.rel (%p1007) target = $region68
      $region67: #{inverted_residual_feed_forward.5} parent=63 // pred_region
        %s1010 = smul.u32 32, %s22
        %p1011 = scmp.lt.s32.totalorder %s1010, 63
        %s1012 = scalar_select %p1011, %s1010, 63
        %s1013 = smul.addr %s1012, 8
        %s1014 = scalar_lea.vmem %s8, %s1013
      $region68: #{inverted_residual_feed_forward.5} parent=63 // pred_fallthru
        _
      // Predicated region
      $region69: #{inverted_residual_feed_forward.5} parent=63 // pred_check
        %p1015 = pneg %p249
      $region70: #{inverted_residual_feed_forward.5} parent=63 // pred_check_branch
        %1017 = sbr.rel (%p1015) target = $region72
      $region71: #{inverted_residual_feed_forward.5} parent=63 // pred_region
        %p1018 = scmp.lt.s32.totalorder %s22, 1
        %s1019 = scalar_select %p1018, %s22, 1
        %s1020 = smul.addr %s1019, 2
        %s1021 = scalar_lea.vmem %s9, %s1020
      $region72: #{inverted_residual_feed_forward.5} parent=63 // pred_fallthru
        _
    $region64: #{inverted_residual_feed_forward.5} parent=5 // pred_fallthru
      _
  $region6: #{inverted_residual_feed_forward.5} parent=0 // loop_footer
    %s20 = sadd.s32 1, %s16
  $region7: #{inverted_residual_feed_forward.5} parent=0 // loop_footer_branch
    %15 = sbr.rel target = $region3
  $region8: #{inverted_residual_feed_forward.5} parent=0 // loop_exit
    _

// kernel: inverted_residual_feed_forward.3
$region0: #{inverted_residual_feed_forward.3}
  #allocation0 [shape = 'u32[]', space=smem, size = 0x4, offset = 0x4, fixed_abs, tag = 'smem constant byte address 0x4 - core index']
  #allocation1 [shape = 'u32[72,128]{1,0:T(1,128)}', space=vmem, size = 0x9000, scoped, tag = 'internal scratch']
  %s0 = inlined_call_operand.vmem [shape: bf16[512,128], index: 0, kind: input, shape index: {}]
  %s1 = inlined_call_operand.vmem [shape: bf16[128,128], index: 1, kind: input, shape index: {}]
  %s2 = inlined_call_operand.vmem [shape: f32[1,128], index: 2, kind: input, shape index: {}]
  %s3 = inlined_call_operand.vmem [shape: bf16[512,128], index: 3, kind: output, shape index: {0}]
  %s4 = inlined_call_operand.vmem [shape: f32[2,2,128], index: 4, kind: output, shape index: {1}]
  %5 = xla_tuple %s3, %s4
  %s6 = sld [smem:[#allocation0]]
  $region53: #{inverted_residual_feed_forward.3} parent=0
    _
  %s8 = ssub.s32 1, %s6
  %s9 = scalar_select 0, %s8, %s6
  loop: start=0, step=1, limit=4
  $region2: #{inverted_residual_feed_forward.3} parent=0 // loop_pre_header
    _
  $region3: #{inverted_residual_feed_forward.3} parent=0 // loop_header
    %s11 = sphi 0, %s15
    %p12 = scmp.ge.s32.totalorder %s11, 4
    %s21 = sphi 0, %s23
    %s24 = sphi 0, %s21
    %s25 = sphi 0, %s24
    %s41 = sphi 0, %s25
    %s45 = sphi 0, %s45
    %s47 = sphi 0, %s45
    %s48 = sphi 0, %s47
    %s62 = sphi 0, %s48
    %s66 = sphi 0, %s66
    %s68 = sphi 0, %s66
    %s69 = sphi 0, %s68
    %s83 = sphi 0, %s69
    %s89 = sphi 0, %s91
    %s92 = sphi 0, %s89
    %s93 = sphi 0, %s92
    %s109 = sphi 0, %s93
    %s115 = sphi 0, %s117
    %s118 = sphi 0, %s115
    %s119 = sphi 0, %s118
    %s135 = sphi 0, %s119
  $region4: #{inverted_residual_feed_forward.3} parent=0 // loop_header_branch
    %14 = sbr.rel (%p12) target = $region8
  $region5: #{inverted_residual_feed_forward.3} parent=0 // loop_body
    %s16 = ssub.s32 %s11, 1
    %s17 = ssub.s32 %s11, 2
    %s18 = sadd.s32 %s11, 1
    %s19 = ssub.s32 %s11, %s18
    %p20 = scmp.eq.s32.totalorder %s19, 0
    %s22 = sadd.s32 %s21, 1
    %s23 = scalar_select %p20, %s21, %s22
    %p26 = pneg %p20
    %p27 = scmp.eq.s32.totalorder %s11, 1
    %p28 = por %p26, %p27
    %p29 = scmp.ne.s32.totalorder %s21, %s24
    %p30 = scmp.eq.s32.totalorder %s11, 0
    %p31 = por %p29, %p30
    %p32 = scmp.ne.s32.totalorder %s21, %s24
    %p33 = scmp.eq.s32.totalorder %s16, 1
    %p34 = por %p32, %p33
    %p35 = scmp.ne.s32.totalorder %s24, %s25
    %p36 = scmp.eq.s32.totalorder %s16, 0
    %p37 = por %p35, %p36
    %p38 = scmp.ne.s32.totalorder %s24, %s25
    %p39 = scmp.eq.s32.totalorder %s17, 1
    %p40 = por %p38, %p39
    %p42 = scmp.ne.s32.totalorder %s25, %s41
    %p43 = scmp.eq.s32.totalorder %s17, 0
    %p44 = por %p42, %p43
    %s46 = sadd.s32 %s45, 1
    %p49 = scmp.eq.s32.totalorder %s11, 1
    %p50 = scmp.ne.s32.totalorder %s45, %s47
    %p51 = scmp.eq.s32.totalorder %s11, 0
    %p52 = por %p50, %p51
    %p53 = scmp.ne.s32.totalorder %s45, %s47
    %p54 = scmp.eq.s32.totalorder %s16, 1
    %p55 = por %p53, %p54
    %p56 = scmp.ne.s32.totalorder %s47, %s48
    %p57 = scmp.eq.s32.totalorder %s16, 0
    %p58 = por %p56, %p57
    %p59 = scmp.ne.s32.totalorder %s47, %s48
    %p60 = scmp.eq.s32.totalorder %s17, 1
    %p61 = por %p59, %p60
    %p63 = scmp.ne.s32.totalorder %s48, %s62
    %p64 = scmp.eq.s32.totalorder %s17, 0
    %p65 = por %p63, %p64
    %s67 = sadd.s32 %s66, 1
    %p70 = scmp.eq.s32.totalorder %s11, 1
    %p71 = scmp.ne.s32.totalorder %s66, %s68
    %p72 = scmp.eq.s32.totalorder %s11, 0
    %p73 = por %p71, %p72
    %p74 = scmp.ne.s32.totalorder %s66, %s68
    %p75 = scmp.eq.s32.totalorder %s16, 1
    %p76 = por %p74, %p75
    %p77 = scmp.ne.s32.totalorder %s68, %s69
    %p78 = scmp.eq.s32.totalorder %s16, 0
    %p79 = por %p77, %p78
    %p80 = scmp.ne.s32.totalorder %s68, %s69
    %p81 = scmp.eq.s32.totalorder %s17, 1
    %p82 = por %p80, %p81
    %p84 = scmp.ne.s32.totalorder %s69, %s83
    %p85 = scmp.eq.s32.totalorder %s17, 0
    %p86 = por %p84, %p85
    %s87 = ssub.s32 %s11, %s18
    %p88 = scmp.eq.s32.totalorder %s87, 0
    %s90 = sadd.s32 %s89, 1
    %s91 = scalar_select %p88, %s89, %s90
    %p94 = pneg %p88
    %p95 = scmp.eq.s32.totalorder %s11, 1
    %p96 = por %p94, %p95
    %p97 = scmp.ne.s32.totalorder %s89, %s92
    %p98 = scmp.eq.s32.totalorder %s11, 0
    %p99 = por %p97, %p98
    %p100 = scmp.ne.s32.totalorder %s89, %s92
    %p101 = scmp.eq.s32.totalorder %s16, 1
    %p102 = por %p100, %p101
    %p103 = scmp.ne.s32.totalorder %s92, %s93
    %p104 = scmp.eq.s32.totalorder %s16, 0
    %p105 = por %p103, %p104
    %p106 = scmp.ne.s32.totalorder %s92, %s93
    %p107 = scmp.eq.s32.totalorder %s17, 1
    %p108 = por %p106, %p107
    %p110 = scmp.ne.s32.totalorder %s93, %s109
    %p111 = scmp.eq.s32.totalorder %s17, 0
    %p112 = por %p110, %p111
    %s113 = ssub.s32 %s11, %s18
    %p114 = scmp.eq.s32.totalorder %s113, 0
    %s116 = sadd.s32 %s115, 1
    %s117 = scalar_select %p114, %s115, %s116
    %p120 = pneg %p114
    %p121 = scmp.eq.s32.totalorder %s11, 1
    %p122 = por %p120, %p121
    %p123 = scmp.ne.s32.totalorder %s115, %s118
    %p124 = scmp.eq.s32.totalorder %s11, 0
    %p125 = por %p123, %p124
    %p126 = scmp.ne.s32.totalorder %s115, %s118
    %p127 = scmp.eq.s32.totalorder %s16, 1
    %p128 = por %p126, %p127
    %p129 = scmp.ne.s32.totalorder %s118, %s119
    %p130 = scmp.eq.s32.totalorder %s16, 0
    %p131 = por %p129, %p130
    %p132 = scmp.ne.s32.totalorder %s118, %s119
    %p133 = scmp.eq.s32.totalorder %s17, 1
    %p134 = por %p132, %p133
    %p136 = scmp.ne.s32.totalorder %s119, %s135
    %p137 = scmp.eq.s32.totalorder %s17, 0
    %p138 = por %p136, %p137
    %p139 = scmp.le.s32.totalorder 1, %s11
    %p140 = scmp.lt.s32.totalorder %s11, 3
    %p141 = pnand %p139, %p140
    %p142 = pneg %p141
    // Predicated region
    $region9: #{inverted_residual_feed_forward.3} parent=5 // pred_check
      _
    $region10: #{inverted_residual_feed_forward.3} parent=5 // pred_check_branch
      %144 = sbr.rel (%p141) target = $region12
    $region11: #{inverted_residual_feed_forward.3} parent=5 // pred_region
      %s145 = ssub.s32 %s11, 1
      // Predicated region
      $region13: #{inverted_residual_feed_forward.3} parent=11 // pred_check
        %p146 = pneg %p58
      $region14: #{inverted_residual_feed_forward.3} parent=11 // pred_check_branch
        %148 = sbr.rel (%p146) target = $region16
      $region15: #{inverted_residual_feed_forward.3} parent=11 // pred_region
        _
      $region16: #{inverted_residual_feed_forward.3} parent=11 // pred_fallthru
        _
      // Predicated region
      $region17: #{inverted_residual_feed_forward.3} parent=11 // pred_check
        %p149 = pneg %p79
      $region18: #{inverted_residual_feed_forward.3} parent=11 // pred_check_branch
        %151 = sbr.rel (%p149) target = $region20
      $region19: #{inverted_residual_feed_forward.3} parent=11 // pred_region
        _
      $region20: #{inverted_residual_feed_forward.3} parent=11 // pred_fallthru
        _
    $region12: #{inverted_residual_feed_forward.3} parent=5 // pred_fallthru
      _
    %p152 = scmp.lt.s32.totalorder %s11, 2
    // Predicated region
    $region21: #{inverted_residual_feed_forward.3} parent=5 // pred_check
      %p153 = pneg %p152
    $region22: #{inverted_residual_feed_forward.3} parent=5 // pred_check_branch
      %155 = sbr.rel (%p153) target = $region24
    $region23: #{inverted_residual_feed_forward.3} parent=5 // pred_region
      // Predicated region
      $region25: #{inverted_residual_feed_forward.3} parent=23 // pred_check
        %p156 = pneg %p31
      $region26: #{inverted_residual_feed_forward.3} parent=23 // pred_check_branch
        %158 = sbr.rel (%p156) target = $region28
      $region27: #{inverted_residual_feed_forward.3} parent=23 // pred_region
        %s159 = smul.u32 32, %s11
        %p160 = scmp.lt.s32.totalorder %s159, 63
        %s161 = scalar_select %p160, %s159, 63
        %s162 = smul.addr %s161, 4
        %s163 = scalar_lea.vmem %s0, %s162
        %s164 = smul.u32 32, %s11
      $region28: #{inverted_residual_feed_forward.3} parent=23 // pred_fallthru
        _
    $region24: #{inverted_residual_feed_forward.3} parent=5 // pred_fallthru
      _
    %p165 = scmp.le.s32.totalorder 1, %s11
    %p166 = scmp.lt.s32.totalorder %s11, 3
    %p167 = pnand %p165, %p166
    %p168 = pneg %p167
    // Predicated region
    $region29: #{inverted_residual_feed_forward.3} parent=5 // pred_check
      _
    $region30: #{inverted_residual_feed_forward.3} parent=5 // pred_check_branch
      %170 = sbr.rel (%p167) target = $region32
    $region31: #{inverted_residual_feed_forward.3} parent=5 // pred_region
      %s171 = ssub.s32 %s11, 1
      %s172 = smul.u32 32, %s16
      %p173 = scmp.lt.s32.totalorder %s172, 63
      %s174 = scalar_select %p173, %s172, 63
      %s175 = smul.addr %s174, 4
      %s176 = scalar_lea.vmem %s0, %s175
      %p177 = pneg %p37
      %p178 = pneg %p34
      %p179 = pneg %p58
      %p180 = pneg %p55
      %p181 = pneg %p79
      %p182 = pneg %p76
      %p183 = pneg %p105
      %p184 = pneg %p102
      %s185 = smul.u32 32, %s16
      %p186 = scmp.lt.s32.totalorder %s185, 63
      %s187 = scalar_select %p186, %s185, 63
      %s188 = smul.addr %s187, 4
      %s189 = scalar_lea.vmem %s3, %s188
      %p190 = pneg %p131
      %p191 = pneg %p128
      %p192 = scmp.lt.s32.totalorder %s16, 1
      %s193 = scalar_select %p192, %s16, 1
      %s194 = smul.addr %s193, 2
      %s195 = scalar_lea.vmem %s4, %s194
      %s196 = smul.u32 32, %s16
      %p197 = scmp.lt.s32.totalorder %s196, 63
      %s198 = scalar_select %p197, %s196, 63
      %s199 = smul.addr %s198, 4
      %s200 = scalar_lea.vmem %s0, %s199
      %s201 = smul.u32 32, %s16
      %s202 = smul.u32 32, %s16
      %p203 = scmp.lt.s32.totalorder %s202, 63
      %s204 = scalar_select %p203, %s202, 63
      %s205 = smul.addr %s204, 4
      %s206 = scalar_lea.vmem %s3, %s205
      %s207 = smul.u32 32, %s16
      %p208 = scmp.lt.s32.totalorder %s16, 1
      %s209 = scalar_select %p208, %s16, 1
      %s210 = smul.addr %s209, 2
      %s211 = scalar_lea.vmem %s4, %s210
      %v212 = vld [vmem:[%s200] sm:$0xf]
      %v213 = vld [vmem:[%s200 + $0x4] sm:$0xf]
      %v214 = vld [vmem:[%s200 + $0x8] sm:$0xf]
      %v215 = vld [vmem:[%s200 + $0xc] sm:$0xf]
      %v216 = vld [vmem:[%s200 + $0x10] sm:$0xf]
      %v217 = vld [vmem:[%s200 + $0x14] sm:$0xf]
      %v218 = vld [vmem:[%s200 + $0x18] sm:$0xf]
      %v219 = vld [vmem:[%s200 + $0x1c] sm:$0xf]
      %v220 = vld [vmem:[%s200 + $0x20] sm:$0xf]
      %v221 = vld [vmem:[%s200 + $0x24] sm:$0xf]
      %v222 = vld [vmem:[%s200 + $0x28] sm:$0xf]
      %v223 = vld [vmem:[%s200 + $0x2c] sm:$0xf]
      %v224 = vld [vmem:[%s200 + $0x30] sm:$0xf]
      %v225 = vld [vmem:[%s200 + $0x34] sm:$0xf]
      %v226 = vld [vmem:[%s200 + $0x38] sm:$0xf]
      %v227 = vld [vmem:[%s200 + $0x3c] sm:$0xf]
      %v228 = vld [vmem:[%s200 + $0x40] sm:$0xf]
      %v229 = vld [vmem:[%s200 + $0x44] sm:$0xf]
      %v230 = vld [vmem:[%s200 + $0x48] sm:$0xf]
      %v231 = vld [vmem:[%s200 + $0x4c] sm:$0xf]
      %v232 = vld [vmem:[%s200 + $0x50] sm:$0xf]
      %v233 = vld [vmem:[%s200 + $0x54] sm:$0xf]
      %v234 = vld [vmem:[%s200 + $0x58] sm:$0xf]
      %v235 = vld [vmem:[%s200 + $0x5c] sm:$0xf]
      %v236 = vld [vmem:[%s200 + $0x60] sm:$0xf]
      %v237 = vld [vmem:[%s200 + $0x64] sm:$0xf]
      %v238 = vld [vmem:[%s200 + $0x68] sm:$0xf]
      %v239 = vld [vmem:[%s200 + $0x6c] sm:$0xf]
      %v240 = vld [vmem:[%s200 + $0x70] sm:$0xf]
      %v241 = vld [vmem:[%s200 + $0x74] sm:$0xf]
      %v242 = vld [vmem:[%s200 + $0x78] sm:$0xf]
      %v243 = vld [vmem:[%s200 + $0x7c] sm:$0xf]
      %v244 = vld [vmem:[%s1] sm:$0xf]
      %v245 = vld [vmem:[%s1 + $0x4] sm:$0xf]
      %v246 = vld [vmem:[%s1 + $0x8] sm:$0xf]
      %v247 = vld [vmem:[%s1 + $0xc] sm:$0xf]
      %v248 = vld [vmem:[%s1 + $0x10] sm:$0xf]
      %v249 = vld [vmem:[%s1 + $0x14] sm:$0xf]
      %v250 = vld [vmem:[%s1 + $0x18] sm:$0xf]
      %v251 = vld [vmem:[%s1 + $0x1c] sm:$0xf]
      %v252 = vld [vmem:[%s1 + $0x20] sm:$0xf]
      %v253 = vld [vmem:[%s1 + $0x24] sm:$0xf]
      %v254 = vld [vmem:[%s1 + $0x28] sm:$0xf]
      %v255 = vld [vmem:[%s1 + $0x2c] sm:$0xf]
      %v256 = vld [vmem:[%s1 + $0x30] sm:$0xf]
      %v257 = vld [vmem:[%s1 + $0x34] sm:$0xf]
      %v258 = vld [vmem:[%s1 + $0x38] sm:$0xf]
      %v259 = vld [vmem:[%s1 + $0x3c] sm:$0xf]
      %v260 = vld [vmem:[%s2] sm:$0x1]
      %v262 = vperm.slane %v260, 0
      %v296 = vunpack.c.l.b16 %v212
      %v297 = vunpack.c.l.b16 %v213
      %v298 = vunpack.c.l.b16 %v214
      %v299 = vunpack.c.l.b16 %v215
      %v300 = vunpack.c.l.b16 %v216
      %v301 = vunpack.c.l.b16 %v217
      %v302 = vunpack.c.l.b16 %v218
      %v303 = vunpack.c.l.b16 %v219
      %v304 = vunpack.c.l.b16 %v220
      %v305 = vunpack.c.l.b16 %v221
      %v306 = vunpack.c.l.b16 %v222
      %v307 = vunpack.c.l.b16 %v223
      %v308 = vunpack.c.l.b16 %v224
      %v309 = vunpack.c.l.b16 %v225
      %v310 = vunpack.c.l.b16 %v226
      %v311 = vunpack.c.l.b16 %v227
      %v312 = vunpack.c.l.b16 %v228
      %v313 = vunpack.c.l.b16 %v229
      %v314 = vunpack.c.l.b16 %v230
      %v315 = vunpack.c.l.b16 %v231
      %v316 = vunpack.c.l.b16 %v232
      %v317 = vunpack.c.l.b16 %v233
      %v318 = vunpack.c.l.b16 %v234
      %v319 = vunpack.c.l.b16 %v235
      %v320 = vunpack.c.l.b16 %v236
      %v321 = vunpack.c.l.b16 %v237
      %v322 = vunpack.c.l.b16 %v238
      %v323 = vunpack.c.l.b16 %v239
      %v324 = vunpack.c.l.b16 %v240
      %v325 = vunpack.c.l.b16 %v241
      %v326 = vunpack.c.l.b16 %v242
      %v327 = vunpack.c.l.b16 %v243
      %v328 = vpack.c.b16 %v297, %v296
      %v329 = vpack.c.b16 %v299, %v298
      %v330 = vpack.c.b16 %v301, %v300
      %v331 = vpack.c.b16 %v303, %v302
      %v332 = vpack.c.b16 %v305, %v304
      %v333 = vpack.c.b16 %v307, %v306
      %v334 = vpack.c.b16 %v309, %v308
      %v335 = vpack.c.b16 %v311, %v310
      %v336 = vpack.c.b16 %v313, %v312
      %v337 = vpack.c.b16 %v315, %v314
      %v338 = vpack.c.b16 %v317, %v316
      %v339 = vpack.c.b16 %v319, %v318
      %v340 = vpack.c.b16 %v321, %v320
      %v341 = vpack.c.b16 %v323, %v322
      %v342 = vpack.c.b16 %v325, %v324
      %v343 = vpack.c.b16 %v327, %v326
      %v376 = vunpack.c.l.b16 %v244
      %v377 = vunpack.c.l.b16 %v245
      %v378 = vunpack.c.l.b16 %v246
      %v379 = vunpack.c.l.b16 %v247
      %v380 = vunpack.c.l.b16 %v248
      %v381 = vunpack.c.l.b16 %v249
      %v382 = vunpack.c.l.b16 %v250
      %v383 = vunpack.c.l.b16 %v251
      %v384 = vunpack.c.l.b16 %v252
      %v385 = vunpack.c.l.b16 %v253
      %v386 = vunpack.c.l.b16 %v254
      %v387 = vunpack.c.l.b16 %v255
      %v388 = vunpack.c.l.b16 %v256
      %v389 = vunpack.c.l.b16 %v257
      %v390 = vunpack.c.l.b16 %v258
      %v391 = vunpack.c.l.b16 %v259
      %v392 = vpack.c.b16 %v377, %v376
      %v393 = vpack.c.b16 %v379, %v378
      %v394 = vpack.c.b16 %v381, %v380
      %v395 = vpack.c.b16 %v383, %v382
      %v396 = vpack.c.b16 %v385, %v384
      %v397 = vpack.c.b16 %v387, %v386
      %v398 = vpack.c.b16 %v389, %v388
      %v399 = vpack.c.b16 %v391, %v390
      %408 = vmatpush.bf16.msra.mxu0 %v399
      %409 = vmatpush.bf16.msra.mxu0 %v398
      %410 = vmatpush.bf16.msra.mxu0 %v397
      %411 = vmatpush.bf16.msra.mxu0 %v396
      %412 = vmatpush.bf16.msra.mxu0 %v395
      %413 = vmatpush.bf16.msra.mxu0 %v394
      %414 = vmatpush.bf16.msra.mxu0 %v393
      %415 = vmatpush.bf16.msra.mxu0 %v392
      %416 = vmatmul.bf16.gmra.mxu0 %v328
      %v417 = vpop.f32.mrf.mxu0
      %v418 = vadd.f32 %v262, %v417
      %v419 = vpop.f32.mrf.mxu0
      %v420 = vadd.f32 %v262, %v419
      %421 = vmatmul.bf16.gmra.mxu0 %v329
      %v422 = vpop.f32.mrf.mxu0
      %v423 = vadd.f32 %v262, %v422
      %v424 = vpop.f32.mrf.mxu0
      %v425 = vadd.f32 %v262, %v424
      %426 = vmatmul.bf16.gmra.mxu0 %v330
      %v427 = vpop.f32.mrf.mxu0
      %v428 = vadd.f32 %v262, %v427
      %v429 = vpop.f32.mrf.mxu0
      %v430 = vadd.f32 %v262, %v429
      %431 = vmatmul.bf16.gmra.mxu0 %v331
      %v432 = vpop.f32.mrf.mxu0
      %v433 = vadd.f32 %v262, %v432
      %v434 = vpop.f32.mrf.mxu0
      %v435 = vadd.f32 %v262, %v434
      %436 = vmatmul.bf16.gmra.mxu0 %v332
      %v437 = vpop.f32.mrf.mxu0
      %v438 = vadd.f32 %v262, %v437
      %v439 = vpop.f32.mrf.mxu0
      %v440 = vadd.f32 %v262, %v439
      %441 = vmatmul.bf16.gmra.mxu0 %v333
      %v442 = vpop.f32.mrf.mxu0
      %v443 = vadd.f32 %v262, %v442
      %v444 = vpop.f32.mrf.mxu0
      %v445 = vadd.f32 %v262, %v444
      %446 = vmatmul.bf16.gmra.mxu0 %v334
      %v447 = vpop.f32.mrf.mxu0
      %v448 = vadd.f32 %v262, %v447
      %v449 = vpop.f32.mrf.mxu0
      %v450 = vadd.f32 %v262, %v449
      %451 = vmatmul.bf16.gmra.mxu0 %v335
      %v452 = vpop.f32.mrf.mxu0
      %v453 = vadd.f32 %v262, %v452
      %v454 = vpop.f32.mrf.mxu0
      %v455 = vadd.f32 %v262, %v454
      %456 = vmatmul.bf16.gmra.mxu0 %v336
      %v457 = vpop.f32.mrf.mxu0
      %v458 = vadd.f32 %v262, %v457
      %v459 = vpop.f32.mrf.mxu0
      %v460 = vadd.f32 %v262, %v459
      %461 = vmatmul.bf16.gmra.mxu0 %v337
      %v462 = vpop.f32.mrf.mxu0
      %v463 = vadd.f32 %v262, %v462
      %v464 = vpop.f32.mrf.mxu0
      %v465 = vadd.f32 %v262, %v464
      %466 = vmatmul.bf16.gmra.mxu0 %v338
      %v467 = vpop.f32.mrf.mxu0
      %v468 = vadd.f32 %v262, %v467
      %v469 = vpop.f32.mrf.mxu0
      %v470 = vadd.f32 %v262, %v469
      %471 = vmatmul.bf16.gmra.mxu0 %v339
      %v472 = vpop.f32.mrf.mxu0
      %v473 = vadd.f32 %v262, %v472
      %v474 = vpop.f32.mrf.mxu0
      %v475 = vadd.f32 %v262, %v474
      %476 = vmatmul.bf16.gmra.mxu0 %v340
      %v477 = vpop.f32.mrf.mxu0
      %v478 = vadd.f32 %v262, %v477
      %v479 = vpop.f32.mrf.mxu0
      %v480 = vadd.f32 %v262, %v479
      %481 = vmatmul.bf16.gmra.mxu0 %v341
      %v482 = vpop.f32.mrf.mxu0
      %v483 = vadd.f32 %v262, %v482
      %v484 = vpop.f32.mrf.mxu0
      %v485 = vadd.f32 %v262, %v484
      %486 = vmatmul.bf16.gmra.mxu0 %v342
      %v487 = vpop.f32.mrf.mxu0
      %v488 = vadd.f32 %v262, %v487
      %v489 = vpop.f32.mrf.mxu0
      %v490 = vadd.f32 %v262, %v489
      %491 = vmatmul.bf16.gmra.mxu0 %v343
      %v492 = vpop.f32.mrf.mxu0
      %v493 = vadd.f32 %v262, %v492
      %v494 = vpop.f32.mrf.mxu0
      %v495 = vadd.f32 %v262, %v494
      %496 = vdwg.mxu0
      %v497 = vmul.f32 %v418, 0.5
      %v498 = vmul.f32 %v420, 0.5
      %v499 = vmul.f32 %v423, 0.5
      %v500 = vmul.f32 %v425, 0.5
      %v501 = vmul.f32 %v428, 0.5
      %v502 = vmul.f32 %v430, 0.5
      %v503 = vmul.f32 %v433, 0.5
      %v504 = vmul.f32 %v435, 0.5
      %v505 = vmul.f32 %v438, 0.5
      %v506 = vmul.f32 %v440, 0.5
      %v507 = vmul.f32 %v443, 0.5
      %v508 = vmul.f32 %v445, 0.5
      %v509 = vmul.f32 %v448, 0.5
      %v510 = vmul.f32 %v450, 0.5
      %v511 = vmul.f32 %v453, 0.5
      %v512 = vmul.f32 %v455, 0.5
      %v513 = vmul.f32 %v458, 0.5
      %v514 = vmul.f32 %v460, 0.5
      %v515 = vmul.f32 %v463, 0.5
      %v516 = vmul.f32 %v465, 0.5
      %v517 = vmul.f32 %v468, 0.5
      %v518 = vmul.f32 %v470, 0.5
      %v519 = vmul.f32 %v473, 0.5
      %v520 = vmul.f32 %v475, 0.5
      %v521 = vmul.f32 %v478, 0.5
      %v522 = vmul.f32 %v480, 0.5
      %v523 = vmul.f32 %v483, 0.5
      %v524 = vmul.f32 %v485, 0.5
      %v525 = vmul.f32 %v488, 0.5
      %v526 = vmul.f32 %v490, 0.5
      %v527 = vmul.f32 %v493, 0.5
      %v528 = vmul.f32 %v495, 0.5
      %v529 = vmul.f32 %v418, 0.044715
      %v530 = vmul.f32 %v420, 0.044715
      %v531 = vmul.f32 %v423, 0.044715
      %v532 = vmul.f32 %v425, 0.044715
      %v533 = vmul.f32 %v428, 0.044715
      %v534 = vmul.f32 %v430, 0.044715
      %v535 = vmul.f32 %v433, 0.044715
      %v536 = vmul.f32 %v435, 0.044715
      %v537 = vmul.f32 %v438, 0.044715
      %v538 = vmul.f32 %v440, 0.044715
      %v539 = vmul.f32 %v443, 0.044715
      %v540 = vmul.f32 %v445, 0.044715
      %v541 = vmul.f32 %v448, 0.044715
      %v542 = vmul.f32 %v450, 0.044715
      %v543 = vmul.f32 %v453, 0.044715
      %v544 = vmul.f32 %v455, 0.044715
      %v545 = vmul.f32 %v458, 0.044715
      %v546 = vmul.f32 %v460, 0.044715
      %v547 = vmul.f32 %v463, 0.044715
      %v548 = vmul.f32 %v465, 0.044715
      %v549 = vmul.f32 %v468, 0.044715
      %v550 = vmul.f32 %v470, 0.044715
      %v551 = vmul.f32 %v473, 0.044715
      %v552 = vmul.f32 %v475, 0.044715
      %v553 = vmul.f32 %v478, 0.044715
      %v554 = vmul.f32 %v480, 0.044715
      %v555 = vmul.f32 %v483, 0.044715
      %v556 = vmul.f32 %v485, 0.044715
      %v557 = vmul.f32 %v488, 0.044715
      %v558 = vmul.f32 %v490, 0.044715
      %v559 = vmul.f32 %v493, 0.044715
      %v560 = vmul.f32 %v495, 0.044715
      %v561 = vmul.f32 %v529, %v418
      %v562 = vmul.f32 %v530, %v420
      %v563 = vmul.f32 %v531, %v423
      %v564 = vmul.f32 %v532, %v425
      %v565 = vmul.f32 %v533, %v428
      %v566 = vmul.f32 %v534, %v430
      %v567 = vmul.f32 %v535, %v433
      %v568 = vmul.f32 %v536, %v435
      %v569 = vmul.f32 %v537, %v438
      %v570 = vmul.f32 %v538, %v440
      %v571 = vmul.f32 %v539, %v443
      %v572 = vmul.f32 %v540, %v445
      %v573 = vmul.f32 %v541, %v448
      %v574 = vmul.f32 %v542, %v450
      %v575 = vmul.f32 %v543, %v453
      %v576 = vmul.f32 %v544, %v455
      %v577 = vmul.f32 %v545, %v458
      %v578 = vmul.f32 %v546, %v460
      %v579 = vmul.f32 %v547, %v463
      %v580 = vmul.f32 %v548, %v465
      %v581 = vmul.f32 %v549, %v468
      %v582 = vmul.f32 %v550, %v470
      %v583 = vmul.f32 %v551, %v473
      %v584 = vmul.f32 %v552, %v475
      %v585 = vmul.f32 %v553, %v478
      %v586 = vmul.f32 %v554, %v480
      %v587 = vmul.f32 %v555, %v483
      %v588 = vmul.f32 %v556, %v485
      %v589 = vmul.f32 %v557, %v488
      %v590 = vmul.f32 %v558, %v490
      %v591 = vmul.f32 %v559, %v493
      %v592 = vmul.f32 %v560, %v495
      %v593 = vmul.f32 %v561, %v418
      %v594 = vmul.f32 %v562, %v420
      %v595 = vmul.f32 %v563, %v423
      %v596 = vmul.f32 %v564, %v425
      %v597 = vmul.f32 %v565, %v428
      %v598 = vmul.f32 %v566, %v430
      %v599 = vmul.f32 %v567, %v433
      %v600 = vmul.f32 %v568, %v435
      %v601 = vmul.f32 %v569, %v438
      %v602 = vmul.f32 %v570, %v440
      %v603 = vmul.f32 %v571, %v443
      %v604 = vmul.f32 %v572, %v445
      %v605 = vmul.f32 %v573, %v448
      %v606 = vmul.f32 %v574, %v450
      %v607 = vmul.f32 %v575, %v453
      %v608 = vmul.f32 %v576, %v455
      %v609 = vmul.f32 %v577, %v458
      %v610 = vmul.f32 %v578, %v460
      %v611 = vmul.f32 %v579, %v463
      %v612 = vmul.f32 %v580, %v465
      %v613 = vmul.f32 %v581, %v468
      %v614 = vmul.f32 %v582, %v470
      %v615 = vmul.f32 %v583, %v473
      %v616 = vmul.f32 %v584, %v475
      %v617 = vmul.f32 %v585, %v478
      %v618 = vmul.f32 %v586, %v480
      %v619 = vmul.f32 %v587, %v483
      %v620 = vmul.f32 %v588, %v485
      %v621 = vmul.f32 %v589, %v488
      %v622 = vmul.f32 %v590, %v490
      %v623 = vmul.f32 %v591, %v493
      %v624 = vmul.f32 %v592, %v495
      %v625 = vadd.f32 %v418, %v593
      %v626 = vadd.f32 %v420, %v594
      %v627 = vadd.f32 %v423, %v595
      %v628 = vadd.f32 %v425, %v596
      %v629 = vadd.f32 %v428, %v597
      %v630 = vadd.f32 %v430, %v598
      %v631 = vadd.f32 %v433, %v599
      %v632 = vadd.f32 %v435, %v600
      %v633 = vadd.f32 %v438, %v601
      %v634 = vadd.f32 %v440, %v602
      %v635 = vadd.f32 %v443, %v603
      %v636 = vadd.f32 %v445, %v604
      %v637 = vadd.f32 %v448, %v605
      %v638 = vadd.f32 %v450, %v606
      %v639 = vadd.f32 %v453, %v607
      %v640 = vadd.f32 %v455, %v608
      %v641 = vadd.f32 %v458, %v609
      %v642 = vadd.f32 %v460, %v610
      %v643 = vadd.f32 %v463, %v611
      %v644 = vadd.f32 %v465, %v612
      %v645 = vadd.f32 %v468, %v613
      %v646 = vadd.f32 %v470, %v614
      %v647 = vadd.f32 %v473, %v615
      %v648 = vadd.f32 %v475, %v616
      %v649 = vadd.f32 %v478, %v617
      %v650 = vadd.f32 %v480, %v618
      %v651 = vadd.f32 %v483, %v619
      %v652 = vadd.f32 %v485, %v620
      %v653 = vadd.f32 %v488, %v621
      %v654 = vadd.f32 %v490, %v622
      %v655 = vadd.f32 %v493, %v623
      %v656 = vadd.f32 %v495, %v624
      %v657 = vmul.f32 %v625, 0.7978846
      %v658 = vmul.f32 %v626, 0.7978846
      %v659 = vmul.f32 %v627, 0.7978846
      %v660 = vmul.f32 %v628, 0.7978846
      %v661 = vmul.f32 %v629, 0.7978846
      %v662 = vmul.f32 %v630, 0.7978846
      %v663 = vmul.f32 %v631, 0.7978846
      %v664 = vmul.f32 %v632, 0.7978846
      %v665 = vmul.f32 %v633, 0.7978846
      %v666 = vmul.f32 %v634, 0.7978846
      %v667 = vmul.f32 %v635, 0.7978846
      %v668 = vmul.f32 %v636, 0.7978846
      %v669 = vmul.f32 %v637, 0.7978846
      %v670 = vmul.f32 %v638, 0.7978846
      %v671 = vmul.f32 %v639, 0.7978846
      %v672 = vmul.f32 %v640, 0.7978846
      %v673 = vmul.f32 %v641, 0.7978846
      %v674 = vmul.f32 %v642, 0.7978846
      %v675 = vmul.f32 %v643, 0.7978846
      %v676 = vmul.f32 %v644, 0.7978846
      %v677 = vmul.f32 %v645, 0.7978846
      %v678 = vmul.f32 %v646, 0.7978846
      %v679 = vmul.f32 %v647, 0.7978846
      %v680 = vmul.f32 %v648, 0.7978846
      %v681 = vmul.f32 %v649, 0.7978846
      %v682 = vmul.f32 %v650, 0.7978846
      %v683 = vmul.f32 %v651, 0.7978846
      %v684 = vmul.f32 %v652, 0.7978846
      %v685 = vmul.f32 %v653, 0.7978846
      %v686 = vmul.f32 %v654, 0.7978846
      %v687 = vmul.f32 %v655, 0.7978846
      %v688 = vmul.f32 %v656, 0.7978846
      %v689 = vtanh.pop %v657
      %v690 = vtanh.pop %v658
      %v691 = vtanh.pop %v659
      %v692 = vtanh.pop %v660
      %v693 = vtanh.pop %v661
      %v694 = vtanh.pop %v662
      %v695 = vtanh.pop %v663
      %v696 = vtanh.pop %v664
      %v697 = vtanh.pop %v665
      %v698 = vtanh.pop %v666
      %v699 = vtanh.pop %v667
      %v700 = vtanh.pop %v668
      %v701 = vtanh.pop %v669
      %v702 = vtanh.pop %v670
      %v703 = vtanh.pop %v671
      %v704 = vtanh.pop %v672
      %v705 = vtanh.pop %v673
      %v706 = vtanh.pop %v674
      %v707 = vtanh.pop %v675
      %v708 = vtanh.pop %v676
      %v709 = vtanh.pop %v677
      %v710 = vtanh.pop %v678
      %v711 = vtanh.pop %v679
      %v712 = vtanh.pop %v680
      %v713 = vtanh.pop %v681
      %v714 = vtanh.pop %v682
      %v715 = vtanh.pop %v683
      %v716 = vtanh.pop %v684
      %v717 = vtanh.pop %v685
      %v718 = vtanh.pop %v686
      %v719 = vtanh.pop %v687
      %v720 = vtanh.pop %v688
      %v721 = vadd.f32 %v689, 1.0
      %v722 = vadd.f32 %v690, 1.0
      %v723 = vadd.f32 %v691, 1.0
      %v724 = vadd.f32 %v692, 1.0
      %v725 = vadd.f32 %v693, 1.0
      %v726 = vadd.f32 %v694, 1.0
      %v727 = vadd.f32 %v695, 1.0
      %v728 = vadd.f32 %v696, 1.0
      %v729 = vadd.f32 %v697, 1.0
      %v730 = vadd.f32 %v698, 1.0
      %v731 = vadd.f32 %v699, 1.0
      %v732 = vadd.f32 %v700, 1.0
      %v733 = vadd.f32 %v701, 1.0
      %v734 = vadd.f32 %v702, 1.0
      %v735 = vadd.f32 %v703, 1.0
      %v736 = vadd.f32 %v704, 1.0
      %v737 = vadd.f32 %v705, 1.0
      %v738 = vadd.f32 %v706, 1.0
      %v739 = vadd.f32 %v707, 1.0
      %v740 = vadd.f32 %v708, 1.0
      %v741 = vadd.f32 %v709, 1.0
      %v742 = vadd.f32 %v710, 1.0
      %v743 = vadd.f32 %v711, 1.0
      %v744 = vadd.f32 %v712, 1.0
      %v745 = vadd.f32 %v713, 1.0
      %v746 = vadd.f32 %v714, 1.0
      %v747 = vadd.f32 %v715, 1.0
      %v748 = vadd.f32 %v716, 1.0
      %v749 = vadd.f32 %v717, 1.0
      %v750 = vadd.f32 %v718, 1.0
      %v751 = vadd.f32 %v719, 1.0
      %v752 = vadd.f32 %v720, 1.0
      %v753 = vmul.f32 %v497, %v721
      %v754 = vmul.f32 %v498, %v722
      %v755 = vmul.f32 %v499, %v723
      %v756 = vmul.f32 %v500, %v724
      %v757 = vmul.f32 %v501, %v725
      %v758 = vmul.f32 %v502, %v726
      %v759 = vmul.f32 %v503, %v727
      %v760 = vmul.f32 %v504, %v728
      %v761 = vmul.f32 %v505, %v729
      %v762 = vmul.f32 %v506, %v730
      %v763 = vmul.f32 %v507, %v731
      %v764 = vmul.f32 %v508, %v732
      %v765 = vmul.f32 %v509, %v733
      %v766 = vmul.f32 %v510, %v734
      %v767 = vmul.f32 %v511, %v735
      %v768 = vmul.f32 %v512, %v736
      %v769 = vmul.f32 %v513, %v737
      %v770 = vmul.f32 %v514, %v738
      %v771 = vmul.f32 %v515, %v739
      %v772 = vmul.f32 %v516, %v740
      %v773 = vmul.f32 %v517, %v741
      %v774 = vmul.f32 %v518, %v742
      %v775 = vmul.f32 %v519, %v743
      %v776 = vmul.f32 %v520, %v744
      %v777 = vmul.f32 %v521, %v745
      %v778 = vmul.f32 %v522, %v746
      %v779 = vmul.f32 %v523, %v747
      %v780 = vmul.f32 %v524, %v748
      %v781 = vmul.f32 %v525, %v749
      %v782 = vmul.f32 %v526, %v750
      %v783 = vmul.f32 %v527, %v751
      %v784 = vmul.f32 %v528, %v752
      %v785 = vpack.c.bf16 %v753, %v753
      %v786 = vpack.c.bf16 %v754, %v754
      %v787 = vpack.c.bf16 %v755, %v755
      %v788 = vpack.c.bf16 %v756, %v756
      %v789 = vpack.c.bf16 %v757, %v757
      %v790 = vpack.c.bf16 %v758, %v758
      %v791 = vpack.c.bf16 %v759, %v759
      %v792 = vpack.c.bf16 %v760, %v760
      %v793 = vpack.c.bf16 %v761, %v761
      %v794 = vpack.c.bf16 %v762, %v762
      %v795 = vpack.c.bf16 %v763, %v763
      %v796 = vpack.c.bf16 %v764, %v764
      %v797 = vpack.c.bf16 %v765, %v765
      %v798 = vpack.c.bf16 %v766, %v766
      %v799 = vpack.c.bf16 %v767, %v767
      %v800 = vpack.c.bf16 %v768, %v768
      %v801 = vpack.c.bf16 %v769, %v769
      %v802 = vpack.c.bf16 %v770, %v770
      %v803 = vpack.c.bf16 %v771, %v771
      %v804 = vpack.c.bf16 %v772, %v772
      %v805 = vpack.c.bf16 %v773, %v773
      %v806 = vpack.c.bf16 %v774, %v774
      %v807 = vpack.c.bf16 %v775, %v775
      %v808 = vpack.c.bf16 %v776, %v776
      %v809 = vpack.c.bf16 %v777, %v777
      %v810 = vpack.c.bf16 %v778, %v778
      %v811 = vpack.c.bf16 %v779, %v779
      %v812 = vpack.c.bf16 %v780, %v780
      %v813 = vpack.c.bf16 %v781, %v781
      %v814 = vpack.c.bf16 %v782, %v782
      %v815 = vpack.c.bf16 %v783, %v783
      %v816 = vpack.c.bf16 %v784, %v784
      %817 = vst [vmem:[%s206] sm:$0xf] %v785
      %818 = vst [vmem:[%s206 + $0x4] sm:$0xf] %v786
      %819 = vst [vmem:[%s206 + $0x8] sm:$0xf] %v787
      %820 = vst [vmem:[%s206 + $0xc] sm:$0xf] %v788
      %821 = vst [vmem:[%s206 + $0x10] sm:$0xf] %v789
      %822 = vst [vmem:[%s206 + $0x14] sm:$0xf] %v790
      %823 = vst [vmem:[%s206 + $0x18] sm:$0xf] %v791
      %824 = vst [vmem:[%s206 + $0x1c] sm:$0xf] %v792
      %825 = vst [vmem:[%s206 + $0x20] sm:$0xf] %v793
      %826 = vst [vmem:[%s206 + $0x24] sm:$0xf] %v794
      %827 = vst [vmem:[%s206 + $0x28] sm:$0xf] %v795
      %828 = vst [vmem:[%s206 + $0x2c] sm:$0xf] %v796
      %829 = vst [vmem:[%s206 + $0x30] sm:$0xf] %v797
      %830 = vst [vmem:[%s206 + $0x34] sm:$0xf] %v798
      %831 = vst [vmem:[%s206 + $0x38] sm:$0xf] %v799
      %832 = vst [vmem:[%s206 + $0x3c] sm:$0xf] %v800
      %833 = vst [vmem:[%s206 + $0x40] sm:$0xf] %v801
      %834 = vst [vmem:[%s206 + $0x44] sm:$0xf] %v802
      %835 = vst [vmem:[%s206 + $0x48] sm:$0xf] %v803
      %836 = vst [vmem:[%s206 + $0x4c] sm:$0xf] %v804
      %837 = vst [vmem:[%s206 + $0x50] sm:$0xf] %v805
      %838 = vst [vmem:[%s206 + $0x54] sm:$0xf] %v806
      %839 = vst [vmem:[%s206 + $0x58] sm:$0xf] %v807
      %840 = vst [vmem:[%s206 + $0x5c] sm:$0xf] %v808
      %841 = vst [vmem:[%s206 + $0x60] sm:$0xf] %v809
      %842 = vst [vmem:[%s206 + $0x64] sm:$0xf] %v810
      %843 = vst [vmem:[%s206 + $0x68] sm:$0xf] %v811
      %844 = vst [vmem:[%s206 + $0x6c] sm:$0xf] %v812
      %845 = vst [vmem:[%s206 + $0x70] sm:$0xf] %v813
      %846 = vst [vmem:[%s206 + $0x74] sm:$0xf] %v814
      %847 = vst [vmem:[%s206 + $0x78] sm:$0xf] %v815
      %848 = vst [vmem:[%s206 + $0x7c] sm:$0xf] %v816
      %v849 = vunpack.c.l.bf16 %v785
      %v850 = vunpack.c.l.bf16 %v786
      %v851 = vunpack.c.l.bf16 %v787
      %v852 = vunpack.c.l.bf16 %v788
      %v853 = vunpack.c.l.bf16 %v789
      %v854 = vunpack.c.l.bf16 %v790
      %v855 = vunpack.c.l.bf16 %v791
      %v856 = vunpack.c.l.bf16 %v792
      %v857 = vunpack.c.l.bf16 %v793
      %v858 = vunpack.c.l.bf16 %v794
      %v859 = vunpack.c.l.bf16 %v795
      %v860 = vunpack.c.l.bf16 %v796
      %v861 = vunpack.c.l.bf16 %v797
      %v862 = vunpack.c.l.bf16 %v798
      %v863 = vunpack.c.l.bf16 %v799
      %v864 = vunpack.c.l.bf16 %v800
      %v865 = vunpack.c.l.bf16 %v801
      %v866 = vunpack.c.l.bf16 %v802
      %v867 = vunpack.c.l.bf16 %v803
      %v868 = vunpack.c.l.bf16 %v804
      %v869 = vunpack.c.l.bf16 %v805
      %v870 = vunpack.c.l.bf16 %v806
      %v871 = vunpack.c.l.bf16 %v807
      %v872 = vunpack.c.l.bf16 %v808
      %v873 = vunpack.c.l.bf16 %v809
      %v874 = vunpack.c.l.bf16 %v810
      %v875 = vunpack.c.l.bf16 %v811
      %v876 = vunpack.c.l.bf16 %v812
      %v877 = vunpack.c.l.bf16 %v813
      %v878 = vunpack.c.l.bf16 %v814
      %v879 = vunpack.c.l.bf16 %v815
      %v880 = vunpack.c.l.bf16 %v816
      %v881 = vadd.f32 %v849, %v850
      %v882 = vadd.f32 %v881, %v851
      %v883 = vadd.f32 %v882, %v852
      %v884 = vadd.f32 %v883, %v853
      %v885 = vadd.f32 %v884, %v854
      %v886 = vadd.f32 %v885, %v855
      %v887 = vadd.f32 %v886, %v856
      %v888 = vadd.f32 %v887, %v857
      %v889 = vadd.f32 %v888, %v858
      %v890 = vadd.f32 %v889, %v859
      %v891 = vadd.f32 %v890, %v860
      %v892 = vadd.f32 %v891, %v861
      %v893 = vadd.f32 %v892, %v862
      %v894 = vadd.f32 %v893, %v863
      %v895 = vadd.f32 %v894, %v864
      %v896 = vadd.f32 %v895, %v865
      %v897 = vadd.f32 %v896, %v866
      %v898 = vadd.f32 %v897, %v867
      %v899 = vadd.f32 %v898, %v868
      %v900 = vadd.f32 %v899, %v869
      %v901 = vadd.f32 %v900, %v870
      %v902 = vadd.f32 %v901, %v871
      %v903 = vadd.f32 %v902, %v872
      %v904 = vadd.f32 %v903, %v873
      %v905 = vadd.f32 %v904, %v874
      %v906 = vadd.f32 %v905, %v875
      %v907 = vadd.f32 %v906, %v876
      %v908 = vadd.f32 %v907, %v877
      %v909 = vadd.f32 %v908, %v878
      %v910 = vadd.f32 %v909, %v879
      %v911 = vadd.f32 %v910, %v880
      %v912 = vrot.slane %v911, 4
      %v913 = vadd.f32 %v911, %v912
      %v914 = vrot.slane %v913, 2
      %v915 = vadd.f32 %v913, %v914
      %v916 = vrot.slane %v915, 1
      %v917 = vadd.f32 %v915, %v916
      %918 = vst [vmem:[%s211] sm:$0x1] %v917
      %v919 = vmul.f32 %v849, %v849
      %v920 = vmul.f32 %v850, %v850
      %v921 = vmul.f32 %v851, %v851
      %v922 = vmul.f32 %v852, %v852
      %v923 = vmul.f32 %v853, %v853
      %v924 = vmul.f32 %v854, %v854
      %v925 = vmul.f32 %v855, %v855
      %v926 = vmul.f32 %v856, %v856
      %v927 = vmul.f32 %v857, %v857
      %v928 = vmul.f32 %v858, %v858
      %v929 = vmul.f32 %v859, %v859
      %v930 = vmul.f32 %v860, %v860
      %v931 = vmul.f32 %v861, %v861
      %v932 = vmul.f32 %v862, %v862
      %v933 = vmul.f32 %v863, %v863
      %v934 = vmul.f32 %v864, %v864
      %v935 = vmul.f32 %v865, %v865
      %v936 = vmul.f32 %v866, %v866
      %v937 = vmul.f32 %v867, %v867
      %v938 = vmul.f32 %v868, %v868
      %v939 = vmul.f32 %v869, %v869
      %v940 = vmul.f32 %v870, %v870
      %v941 = vmul.f32 %v871, %v871
      %v942 = vmul.f32 %v872, %v872
      %v943 = vmul.f32 %v873, %v873
      %v944 = vmul.f32 %v874, %v874
      %v945 = vmul.f32 %v875, %v875
      %v946 = vmul.f32 %v876, %v876
      %v947 = vmul.f32 %v877, %v877
      %v948 = vmul.f32 %v878, %v878
      %v949 = vmul.f32 %v879, %v879
      %v950 = vmul.f32 %v880, %v880
      %v951 = vadd.f32 %v919, %v920
      %v952 = vadd.f32 %v951, %v921
      %v953 = vadd.f32 %v952, %v922
      %v954 = vadd.f32 %v953, %v923
      %v955 = vadd.f32 %v954, %v924
      %v956 = vadd.f32 %v955, %v925
      %v957 = vadd.f32 %v956, %v926
      %v958 = vadd.f32 %v957, %v927
      %v959 = vadd.f32 %v958, %v928
      %v960 = vadd.f32 %v959, %v929
      %v961 = vadd.f32 %v960, %v930
      %v962 = vadd.f32 %v961, %v931
      %v963 = vadd.f32 %v962, %v932
      %v964 = vadd.f32 %v963, %v933
      %v965 = vadd.f32 %v964, %v934
      %v966 = vadd.f32 %v965, %v935
      %v967 = vadd.f32 %v966, %v936
      %v968 = vadd.f32 %v967, %v937
      %v969 = vadd.f32 %v968, %v938
      %v970 = vadd.f32 %v969, %v939
      %v971 = vadd.f32 %v970, %v940
      %v972 = vadd.f32 %v971, %v941
      %v973 = vadd.f32 %v972, %v942
      %v974 = vadd.f32 %v973, %v943
      %v975 = vadd.f32 %v974, %v944
      %v976 = vadd.f32 %v975, %v945
      %v977 = vadd.f32 %v976, %v946
      %v978 = vadd.f32 %v977, %v947
      %v979 = vadd.f32 %v978, %v948
      %v980 = vadd.f32 %v979, %v949
      %v981 = vadd.f32 %v980, %v950
      %v982 = vrot.slane %v981, 4
      %v983 = vadd.f32 %v981, %v982
      %v984 = vrot.slane %v983, 2
      %v985 = vadd.f32 %v983, %v984
      %v986 = vrot.slane %v985, 1
      %v987 = vadd.f32 %v985, %v986
      %988 = vst [vmem:[%s211 + $0x1] sm:$0x1] %v987
      %s989 = smul.u32 32, %s16
      %p990 = scmp.lt.s32.totalorder %s989, 63
      %s991 = scalar_select %p990, %s989, 63
      %s992 = smul.addr %s991, 4
      %s993 = scalar_lea.vmem %s3, %s992
      %p994 = scmp.lt.s32.totalorder %s16, 1
      %s995 = scalar_select %p994, %s16, 1
      %s996 = smul.addr %s995, 2
      %s997 = scalar_lea.vmem %s4, %s996
      // Predicated region
      $region33: #{inverted_residual_feed_forward.3} parent=31 // pred_check
        %p998 = pneg %p102
      $region34: #{inverted_residual_feed_forward.3} parent=31 // pred_check_branch
        %1000 = sbr.rel (%p998) target = $region36
      $region35: #{inverted_residual_feed_forward.3} parent=31 // pred_region
        %s1001 = smul.u32 32, %s16
      $region36: #{inverted_residual_feed_forward.3} parent=31 // pred_fallthru
        _
      // Predicated region
      $region37: #{inverted_residual_feed_forward.3} parent=31 // pred_check
        %p1002 = pneg %p128
      $region38: #{inverted_residual_feed_forward.3} parent=31 // pred_check_branch
        %1004 = sbr.rel (%p1002) target = $region40
      $region39: #{inverted_residual_feed_forward.3} parent=31 // pred_region
        _
      $region40: #{inverted_residual_feed_forward.3} parent=31 // pred_fallthru
        _
    $region32: #{inverted_residual_feed_forward.3} parent=5 // pred_fallthru
      _
    %p1005 = scmp.le.s32.totalorder 2, %s11
    // Predicated region
    $region41: #{inverted_residual_feed_forward.3} parent=5 // pred_check
      %p1006 = pneg %p1005
    $region42: #{inverted_residual_feed_forward.3} parent=5 // pred_check_branch
      %1008 = sbr.rel (%p1006) target = $region44
    $region43: #{inverted_residual_feed_forward.3} parent=5 // pred_region
      %s1009 = ssub.s32 %s11, 2
      // Predicated region
      $region45: #{inverted_residual_feed_forward.3} parent=43 // pred_check
        %p1010 = pneg %p108
      $region46: #{inverted_residual_feed_forward.3} parent=43 // pred_check_branch
        %1012 = sbr.rel (%p1010) target = $region48
      $region47: #{inverted_residual_feed_forward.3} parent=43 // pred_region
        %s1013 = smul.u32 32, %s17
        %p1014 = scmp.lt.s32.totalorder %s1013, 63
        %s1015 = scalar_select %p1014, %s1013, 63
        %s1016 = smul.addr %s1015, 4
        %s1017 = scalar_lea.vmem %s3, %s1016
      $region48: #{inverted_residual_feed_forward.3} parent=43 // pred_fallthru
        _
      // Predicated region
      $region49: #{inverted_residual_feed_forward.3} parent=43 // pred_check
        %p1018 = pneg %p134
      $region50: #{inverted_residual_feed_forward.3} parent=43 // pred_check_branch
        %1020 = sbr.rel (%p1018) target = $region52
      $region51: #{inverted_residual_feed_forward.3} parent=43 // pred_region
        %p1021 = scmp.lt.s32.totalorder %s17, 1
        %s1022 = scalar_select %p1021, %s17, 1
        %s1023 = smul.addr %s1022, 2
        %s1024 = scalar_lea.vmem %s4, %s1023
      $region52: #{inverted_residual_feed_forward.3} parent=43 // pred_fallthru
        _
    $region44: #{inverted_residual_feed_forward.3} parent=5 // pred_fallthru
      _
  $region6: #{inverted_residual_feed_forward.3} parent=0 // loop_footer
    %s15 = sadd.s32 1, %s11
  $region7: #{inverted_residual_feed_forward.3} parent=0 // loop_footer_branch
    %10 = sbr.rel target = $region3
  $region8: #{inverted_residual_feed_forward.3} parent=0 // loop_exit
    _

// kernel: inverted_residual_feed_forward.4
$region0: #{inverted_residual_feed_forward.4}
  #allocation0 [shape = 'u32[]', space=smem, size = 0x4, offset = 0x4, fixed_abs, tag = 'smem constant byte address 0x4 - core index']
  #allocation1 [shape = 'u32[72,128]{1,0:T(1,128)}', space=vmem, size = 0x9000, scoped, tag = 'internal scratch']
  #allocation2 [shape = 'f32[18,18,128]{2,1,0:T(8,128)}', space=vmem, size = 0x36000, scoped, tag = 'scratch operand']
  %s0 = inlined_call_operand.vmem [shape: bf16[2,16,16,128], index: 0, kind: input, shape index: {}]
  %s1 = inlined_call_operand.vmem [shape: f32[1,128], index: 1, kind: input, shape index: {}]
  %s2 = inlined_call_operand.vmem [shape: f32[1,128], index: 2, kind: input, shape index: {}]
  %s3 = inlined_call_operand.vmem [shape: f32[3,3,128], index: 3, kind: input, shape index: {}]
  %s4 = inlined_call_operand.vmem [shape: f32[1,128], index: 4, kind: input, shape index: {}]
  %s5 = inlined_call_operand.vmem [shape: bf16[2,16,16,128], index: 5, kind: output, shape index: {0}]
  %s6 = inlined_call_operand.vmem [shape: f32[2,1,2,128], index: 6, kind: output, shape index: {1}]
  %7 = xla_tuple %s5, %s6
  %s8 = sld [smem:[#allocation0]]
  $region61: #{inverted_residual_feed_forward.4} parent=0
    _
  %s10 = ssub.s32 1, %s8
  %s11 = scalar_select 0, %s10, %s8
  loop: start=0, step=1, limit=4
  $region2: #{inverted_residual_feed_forward.4} parent=0 // loop_pre_header
    _
  $region3: #{inverted_residual_feed_forward.4} parent=0 // loop_header
    %s13 = sphi 0, %s17
    %p14 = scmp.ge.s32.totalorder %s13, 4
    %s20 = sphi 0, %s32
    %s21 = sphi 0, %s28
    %s22 = sphi 0, %s20
    %s23 = sphi 0, %s21
    %s24 = sphi 0, %s22
    %s25 = sphi 0, %s23
    %s37 = sphi 0, %s39
    %s40 = sphi 0, %s37
    %s41 = sphi 0, %s40
    %s57 = sphi 0, %s41
    %s63 = sphi 0, %s65
    %s66 = sphi 0, %s63
    %s67 = sphi 0, %s66
    %s83 = sphi 0, %s67
    %s89 = sphi 0, %s91
    %s92 = sphi 0, %s89
    %s93 = sphi 0, %s92
    %s109 = sphi 0, %s93
    %s115 = sphi 0, %s117
    %s118 = sphi 0, %s115
    %s119 = sphi 0, %s118
    %s135 = sphi 0, %s119
    %s141 = sphi 0, %s143
    %s144 = sphi 0, %s141
    %s145 = sphi 0, %s144
    %s161 = sphi 0, %s145
    %s169 = sphi 0, %s171
    %s172 = sphi 0, %s169
    %s173 = sphi 0, %s172
    %s189 = sphi 0, %s173
    %s197 = sphi 0, %s199
    %s200 = sphi 0, %s197
    %s201 = sphi 0, %s200
    %s217 = sphi 0, %s201
  $region4: #{inverted_residual_feed_forward.4} parent=0 // loop_header_branch
    %16 = sbr.rel (%p14) target = $region8
  $region5: #{inverted_residual_feed_forward.4} parent=0 // loop_body
    %s18 = ssub.s32 %s13, 1
    %s19 = ssub.s32 %s13, 2
    %s26 = sadd.s32 1, %s21
    %p27 = scmp.ge.s32.totalorder %s26, 1
    %s28 = scalar_select %p27, 0, %s26
    %s29 = sadd.s32 1, %s20
    %s30 = scalar_select %p27, %s29, %s20
    %p31 = scmp.ge.s32.totalorder %s30, 2
    %s32 = scalar_select %p31, 0, %s30
    %s33 = ssub.s32 %s20, %s32
    %s34 = ssub.s32 %s21, %s28
    %s35 = sor.u32 %s33, %s34
    %p36 = scmp.eq.s32.totalorder %s35, 0
    %s38 = sadd.s32 %s37, 1
    %s39 = scalar_select %p36, %s37, %s38
    %p42 = pneg %p36
    %p43 = scmp.eq.s32.totalorder %s13, 1
    %p44 = por %p42, %p43
    %p45 = scmp.ne.s32.totalorder %s37, %s40
    %p46 = scmp.eq.s32.totalorder %s13, 0
    %p47 = por %p45, %p46
    %p48 = scmp.ne.s32.totalorder %s37, %s40
    %p49 = scmp.eq.s32.totalorder %s18, 1
    %p50 = por %p48, %p49
    %p51 = scmp.ne.s32.totalorder %s40, %s41
    %p52 = scmp.eq.s32.totalorder %s18, 0
    %p53 = por %p51, %p52
    %p54 = scmp.ne.s32.totalorder %s40, %s41
    %p55 = scmp.eq.s32.totalorder %s19, 1
    %p56 = por %p54, %p55
    %p58 = scmp.ne.s32.totalorder %s41, %s57
    %p59 = scmp.eq.s32.totalorder %s19, 0
    %p60 = por %p58, %p59
    %s61 = ssub.s32 %s21, %s28
    %p62 = scmp.eq.s32.totalorder %s61, 0
    %s64 = sadd.s32 %s63, 1
    %s65 = scalar_select %p62, %s63, %s64
    %p68 = pneg %p62
    %p69 = scmp.eq.s32.totalorder %s13, 1
    %p70 = por %p68, %p69
    %p71 = scmp.ne.s32.totalorder %s63, %s66
    %p72 = scmp.eq.s32.totalorder %s13, 0
    %p73 = por %p71, %p72
    %p74 = scmp.ne.s32.totalorder %s63, %s66
    %p75 = scmp.eq.s32.totalorder %s18, 1
    %p76 = por %p74, %p75
    %p77 = scmp.ne.s32.totalorder %s66, %s67
    %p78 = scmp.eq.s32.totalorder %s18, 0
    %p79 = por %p77, %p78
    %p80 = scmp.ne.s32.totalorder %s66, %s67
    %p81 = scmp.eq.s32.totalorder %s19, 1
    %p82 = por %p80, %p81
    %p84 = scmp.ne.s32.totalorder %s67, %s83
    %p85 = scmp.eq.s32.totalorder %s19, 0
    %p86 = por %p84, %p85
    %s87 = ssub.s32 %s21, %s28
    %p88 = scmp.eq.s32.totalorder %s87, 0
    %s90 = sadd.s32 %s89, 1
    %s91 = scalar_select %p88, %s89, %s90
    %p94 = pneg %p88
    %p95 = scmp.eq.s32.totalorder %s13, 1
    %p96 = por %p94, %p95
    %p97 = scmp.ne.s32.totalorder %s89, %s92
    %p98 = scmp.eq.s32.totalorder %s13, 0
    %p99 = por %p97, %p98
    %p100 = scmp.ne.s32.totalorder %s89, %s92
    %p101 = scmp.eq.s32.totalorder %s18, 1
    %p102 = por %p100, %p101
    %p103 = scmp.ne.s32.totalorder %s92, %s93
    %p104 = scmp.eq.s32.totalorder %s18, 0
    %p105 = por %p103, %p104
    %p106 = scmp.ne.s32.totalorder %s92, %s93
    %p107 = scmp.eq.s32.totalorder %s19, 1
    %p108 = por %p106, %p107
    %p110 = scmp.ne.s32.totalorder %s93, %s109
    %p111 = scmp.eq.s32.totalorder %s19, 0
    %p112 = por %p110, %p111
    %s113 = ssub.s32 %s21, %s28
    %p114 = scmp.eq.s32.totalorder %s113, 0
    %s116 = sadd.s32 %s115, 1
    %s117 = scalar_select %p114, %s115, %s116
    %p120 = pneg %p114
    %p121 = scmp.eq.s32.totalorder %s13, 1
    %p122 = por %p120, %p121
    %p123 = scmp.ne.s32.totalorder %s115, %s118
    %p124 = scmp.eq.s32.totalorder %s13, 0
    %p125 = por %p123, %p124
    %p126 = scmp.ne.s32.totalorder %s115, %s118
    %p127 = scmp.eq.s32.totalorder %s18, 1
    %p128 = por %p126, %p127
    %p129 = scmp.ne.s32.totalorder %s118, %s119
    %p130 = scmp.eq.s32.totalorder %s18, 0
    %p131 = por %p129, %p130
    %p132 = scmp.ne.s32.totalorder %s118, %s119
    %p133 = scmp.eq.s32.totalorder %s19, 1
    %p134 = por %p132, %p133
    %p136 = scmp.ne.s32.totalorder %s119, %s135
    %p137 = scmp.eq.s32.totalorder %s19, 0
    %p138 = por %p136, %p137
    %s139 = ssub.s32 %s21, %s28
    %p140 = scmp.eq.s32.totalorder %s139, 0
    %s142 = sadd.s32 %s141, 1
    %s143 = scalar_select %p140, %s141, %s142
    %p146 = pneg %p140
    %p147 = scmp.eq.s32.totalorder %s13, 1
    %p148 = por %p146, %p147
    %p149 = scmp.ne.s32.totalorder %s141, %s144
    %p150 = scmp.eq.s32.totalorder %s13, 0
    %p151 = por %p149, %p150
    %p152 = scmp.ne.s32.totalorder %s141, %s144
    %p153 = scmp.eq.s32.totalorder %s18, 1
    %p154 = por %p152, %p153
    %p155 = scmp.ne.s32.totalorder %s144, %s145
    %p156 = scmp.eq.s32.totalorder %s18, 0
    %p157 = por %p155, %p156
    %p158 = scmp.ne.s32.totalorder %s144, %s145
    %p159 = scmp.eq.s32.totalorder %s19, 1
    %p160 = por %p158, %p159
    %p162 = scmp.ne.s32.totalorder %s145, %s161
    %p163 = scmp.eq.s32.totalorder %s19, 0
    %p164 = por %p162, %p163
    %s165 = ssub.s32 %s20, %s32
    %s166 = ssub.s32 %s21, %s28
    %s167 = sor.u32 %s165, %s166
    %p168 = scmp.eq.s32.totalorder %s167, 0
    %s170 = sadd.s32 %s169, 1
    %s171 = scalar_select %p168, %s169, %s170
    %p174 = pneg %p168
    %p175 = scmp.eq.s32.totalorder %s13, 1
    %p176 = por %p174, %p175
    %p177 = scmp.ne.s32.totalorder %s169, %s172
    %p178 = scmp.eq.s32.totalorder %s13, 0
    %p179 = por %p177, %p178
    %p180 = scmp.ne.s32.totalorder %s169, %s172
    %p181 = scmp.eq.s32.totalorder %s18, 1
    %p182 = por %p180, %p181
    %p183 = scmp.ne.s32.totalorder %s172, %s173
    %p184 = scmp.eq.s32.totalorder %s18, 0
    %p185 = por %p183, %p184
    %p186 = scmp.ne.s32.totalorder %s172, %s173
    %p187 = scmp.eq.s32.totalorder %s19, 1
    %p188 = por %p186, %p187
    %p190 = scmp.ne.s32.totalorder %s173, %s189
    %p191 = scmp.eq.s32.totalorder %s19, 0
    %p192 = por %p190, %p191
    %s193 = ssub.s32 %s20, %s32
    %s194 = ssub.s32 %s21, %s28
    %s195 = sor.u32 %s193, %s194
    %p196 = scmp.eq.s32.totalorder %s195, 0
    %s198 = sadd.s32 %s197, 1
    %s199 = scalar_select %p196, %s197, %s198
    %p202 = pneg %p196
    %p203 = scmp.eq.s32.totalorder %s13, 1
    %p204 = por %p202, %p203
    %p205 = scmp.ne.s32.totalorder %s197, %s200
    %p206 = scmp.eq.s32.totalorder %s13, 0
    %p207 = por %p205, %p206
    %p208 = scmp.ne.s32.totalorder %s197, %s200
    %p209 = scmp.eq.s32.totalorder %s18, 1
    %p210 = por %p208, %p209
    %p211 = scmp.ne.s32.totalorder %s200, %s201
    %p212 = scmp.eq.s32.totalorder %s18, 0
    %p213 = por %p211, %p212
    %p214 = scmp.ne.s32.totalorder %s200, %s201
    %p215 = scmp.eq.s32.totalorder %s19, 1
    %p216 = por %p214, %p215
    %p218 = scmp.ne.s32.totalorder %s201, %s217
    %p219 = scmp.eq.s32.totalorder %s19, 0
    %p220 = por %p218, %p219
    %p221 = scmp.le.s32.totalorder 1, %s13
    %p222 = scmp.lt.s32.totalorder %s13, 3
    %p223 = pnand %p221, %p222
    %p224 = pneg %p223
    // Predicated region
    $region9: #{inverted_residual_feed_forward.4} parent=5 // pred_check
      _
    $region10: #{inverted_residual_feed_forward.4} parent=5 // pred_check_branch
      %226 = sbr.rel (%p223) target = $region12
    $region11: #{inverted_residual_feed_forward.4} parent=5 // pred_region
      %s227 = ssub.s32 %s13, 1
      // Predicated region
      $region13: #{inverted_residual_feed_forward.4} parent=11 // pred_check
        %p228 = pneg %p79
      $region14: #{inverted_residual_feed_forward.4} parent=11 // pred_check_branch
        %230 = sbr.rel (%p228) target = $region16
      $region15: #{inverted_residual_feed_forward.4} parent=11 // pred_region
        %p231 = scmp.lt.s32.totalorder %s23, 0
        %s232 = scalar_select %p231, %s23, 0
        %s233 = scalar_lea.vmem %s1, %s232
      $region16: #{inverted_residual_feed_forward.4} parent=11 // pred_fallthru
        _
      // Predicated region
      $region17: #{inverted_residual_feed_forward.4} parent=11 // pred_check
        %p234 = pneg %p105
      $region18: #{inverted_residual_feed_forward.4} parent=11 // pred_check_branch
        %236 = sbr.rel (%p234) target = $region20
      $region19: #{inverted_residual_feed_forward.4} parent=11 // pred_region
        %p237 = scmp.lt.s32.totalorder %s23, 0
        %s238 = scalar_select %p237, %s23, 0
        %s239 = scalar_lea.vmem %s2, %s238
      $region20: #{inverted_residual_feed_forward.4} parent=11 // pred_fallthru
        _
      // Predicated region
      $region21: #{inverted_residual_feed_forward.4} parent=11 // pred_check
        %p240 = pneg %p131
      $region22: #{inverted_residual_feed_forward.4} parent=11 // pred_check_branch
        %242 = sbr.rel (%p240) target = $region24
      $region23: #{inverted_residual_feed_forward.4} parent=11 // pred_region
        %p243 = scmp.lt.s32.totalorder %s23, 0
        %s244 = scalar_select %p243, %s23, 0
        %s245 = smul.addr %s244, 4
        %s246 = scalar_lea.vmem %s3, %s245
      $region24: #{inverted_residual_feed_forward.4} parent=11 // pred_fallthru
        _
      // Predicated region
      $region25: #{inverted_residual_feed_forward.4} parent=11 // pred_check
        %p247 = pneg %p157
      $region26: #{inverted_residual_feed_forward.4} parent=11 // pred_check_branch
        %249 = sbr.rel (%p247) target = $region28
      $region27: #{inverted_residual_feed_forward.4} parent=11 // pred_region
        %p250 = scmp.lt.s32.totalorder %s23, 0
        %s251 = scalar_select %p250, %s23, 0
        %s252 = scalar_lea.vmem %s4, %s251
      $region28: #{inverted_residual_feed_forward.4} parent=11 // pred_fallthru
        _
    $region12: #{inverted_residual_feed_forward.4} parent=5 // pred_fallthru
      _
    %p253 = scmp.lt.s32.totalorder %s13, 2
    // Predicated region
    $region29: #{inverted_residual_feed_forward.4} parent=5 // pred_check
      %p254 = pneg %p253
    $region30: #{inverted_residual_feed_forward.4} parent=5 // pred_check_branch
      %256 = sbr.rel (%p254) target = $region32
    $region31: #{inverted_residual_feed_forward.4} parent=5 // pred_region
      // Predicated region
      $region33: #{inverted_residual_feed_forward.4} parent=31 // pred_check
        %p257 = pneg %p47
      $region34: #{inverted_residual_feed_forward.4} parent=31 // pred_check_branch
        %259 = sbr.rel (%p257) target = $region36
      $region35: #{inverted_residual_feed_forward.4} parent=31 // pred_region
        %p260 = scmp.lt.s32.totalorder %s20, 1
        %s261 = scalar_select %p260, %s20, 1
        %p262 = scmp.lt.s32.totalorder %s21, 0
        %s263 = scalar_select %p262, %s21, 0
        %s264 = smul.addr %s261, 32
        %s265 = sadd.s32 %s263, %s264
        %s266 = smul.addr %s265, 4
        %s267 = scalar_lea.vmem %s0, %s266
      $region36: #{inverted_residual_feed_forward.4} parent=31 // pred_fallthru
        _
    $region32: #{inverted_residual_feed_forward.4} parent=5 // pred_fallthru
      _
    %p268 = scmp.le.s32.totalorder 1, %s13
    %p269 = scmp.lt.s32.totalorder %s13, 3
    %p270 = pnand %p268, %p269
    %p271 = pneg %p270
    // Predicated region
    $region37: #{inverted_residual_feed_forward.4} parent=5 // pred_check
      _
    $region38: #{inverted_residual_feed_forward.4} parent=5 // pred_check_branch
      %273 = sbr.rel (%p270) target = $region40
    $region39: #{inverted_residual_feed_forward.4} parent=5 // pred_region
      %s274 = ssub.s32 %s13, 1
      %p275 = scmp.lt.s32.totalorder %s22, 1
      %s276 = scalar_select %p275, %s22, 1
      %p277 = scmp.lt.s32.totalorder %s23, 0
      %s278 = scalar_select %p277, %s23, 0
      %s279 = smul.addr %s276, 32
      %s280 = sadd.s32 %s278, %s279
      %s281 = smul.addr %s280, 4
      %s282 = scalar_lea.vmem %s0, %s281
      %p283 = pneg %p53
      %p284 = pneg %p50
      %p285 = scmp.lt.s32.totalorder %s23, 0
      %s286 = scalar_select %p285, %s23, 0
      %s287 = scalar_lea.vmem %s1, %s286
      %p288 = pneg %p79
      %p289 = pneg %p76
      %p290 = scmp.lt.s32.totalorder %s23, 0
      %s291 = scalar_select %p290, %s23, 0
      %s292 = scalar_lea.vmem %s2, %s291
      %p293 = pneg %p105
      %p294 = pneg %p102
      %p295 = scmp.lt.s32.totalorder %s23, 0
      %s296 = scalar_select %p295, %s23, 0
      %s297 = smul.addr %s296, 4
      %s298 = scalar_lea.vmem %s3, %s297
      %p299 = pneg %p131
      %p300 = pneg %p128
      %p301 = scmp.lt.s32.totalorder %s23, 0
      %s302 = scalar_select %p301, %s23, 0
      %s303 = scalar_lea.vmem %s4, %s302
      %p304 = pneg %p157
      %p305 = pneg %p154
      %p306 = pneg %p185
      %p307 = pneg %p182
      %p308 = scmp.lt.s32.totalorder %s22, 1
      %s309 = scalar_select %p308, %s22, 1
      %p310 = scmp.lt.s32.totalorder %s23, 0
      %s311 = scalar_select %p310, %s23, 0
      %s312 = smul.addr %s309, 32
      %s313 = sadd.s32 %s311, %s312
      %s314 = smul.addr %s313, 4
      %s315 = scalar_lea.vmem %s5, %s314
      %p316 = pneg %p213
      %p317 = pneg %p210
      %p318 = scmp.lt.s32.totalorder %s22, 1
      %s319 = scalar_select %p318, %s22, 1
      %p320 = scmp.lt.s32.totalorder %s23, 0
      %s321 = scalar_select %p320, %s23, 0
      %s322 = sadd.s32 %s321, %s319
      %s323 = smul.addr %s322, 2
      %s324 = scalar_lea.vmem %s6, %s323
      %p325 = scmp.lt.s32.totalorder %s22, 1
      %s326 = scalar_select %p325, %s22, 1
      %p327 = scmp.lt.s32.totalorder %s23, 0
      %s328 = scalar_select %p327, %s23, 0
      %s329 = smul.addr %s326, 32
      %s330 = sadd.s32 %s328, %s329
      %s331 = smul.addr %s330, 4
      %s332 = scalar_lea.vmem %s0, %s331
      %p333 = scmp.lt.s32.totalorder %s23, 0
      %s334 = scalar_select %p333, %s23, 0
      %s335 = scalar_lea.vmem %s1, %s334
      %p336 = scmp.lt.s32.totalorder %s23, 0
      %s337 = scalar_select %p336, %s23, 0
      %s338 = scalar_lea.vmem %s2, %s337
      %p339 = scmp.lt.s32.totalorder %s23, 0
      %s340 = scalar_select %p339, %s23, 0
      %s341 = smul.addr %s340, 4
      %s342 = scalar_lea.vmem %s3, %s341
      %p343 = scmp.lt.s32.totalorder %s23, 0
      %s344 = scalar_select %p343, %s23, 0
      %s345 = scalar_lea.vmem %s4, %s344
      %p346 = scmp.lt.s32.totalorder %s22, 1
      %s347 = scalar_select %p346, %s22, 1
      %p348 = scmp.lt.s32.totalorder %s23, 0
      %s349 = scalar_select %p348, %s23, 0
      %s350 = smul.addr %s347, 32
      %s351 = sadd.s32 %s349, %s350
      %s352 = smul.addr %s351, 4
      %s353 = scalar_lea.vmem %s5, %s352
      %p354 = scmp.lt.s32.totalorder %s22, 1
      %s355 = scalar_select %p354, %s22, 1
      %p356 = scmp.lt.s32.totalorder %s23, 0
      %s357 = scalar_select %p356, %s23, 0
      %s358 = sadd.s32 %s357, %s355
      %s359 = smul.addr %s358, 2
      %s360 = scalar_lea.vmem %s6, %s359
      %v361 = vld [vmem:[%s332] sm:$0xf]
      %v362 = vld [vmem:[%s332 + $0x4] sm:$0xf]
      %v363 = vld [vmem:[%s332 + $0x8] sm:$0xf]
      %v364 = vld [vmem:[%s332 + $0xc] sm:$0xf]
      %v365 = vld [vmem:[%s332 + $0x10] sm:$0xf]
      %v366 = vld [vmem:[%s332 + $0x14] sm:$0xf]
      %v367 = vld [vmem:[%s332 + $0x18] sm:$0xf]
      %v368 = vld [vmem:[%s332 + $0x1c] sm:$0xf]
      %v369 = vld [vmem:[%s332 + $0x20] sm:$0xf]
      %v370 = vld [vmem:[%s332 + $0x24] sm:$0xf]
      %v371 = vld [vmem:[%s332 + $0x28] sm:$0xf]
      %v372 = vld [vmem:[%s332 + $0x2c] sm:$0xf]
      %v373 = vld [vmem:[%s332 + $0x30] sm:$0xf]
      %v374 = vld [vmem:[%s332 + $0x34] sm:$0xf]
      %v375 = vld [vmem:[%s332 + $0x38] sm:$0xf]
      %v376 = vld [vmem:[%s332 + $0x3c] sm:$0xf]
      %v377 = vld [vmem:[%s332 + $0x40] sm:$0xf]
      %v378 = vld [vmem:[%s332 + $0x44] sm:$0xf]
      %v379 = vld [vmem:[%s332 + $0x48] sm:$0xf]
      %v380 = vld [vmem:[%s332 + $0x4c] sm:$0xf]
      %v381 = vld [vmem:[%s332 + $0x50] sm:$0xf]
      %v382 = vld [vmem:[%s332 + $0x54] sm:$0xf]
      %v383 = vld [vmem:[%s332 + $0x58] sm:$0xf]
      %v384 = vld [vmem:[%s332 + $0x5c] sm:$0xf]
      %v385 = vld [vmem:[%s332 + $0x60] sm:$0xf]
      %v386 = vld [vmem:[%s332 + $0x64] sm:$0xf]
      %v387 = vld [vmem:[%s332 + $0x68] sm:$0xf]
      %v388 = vld [vmem:[%s332 + $0x6c] sm:$0xf]
      %v389 = vld [vmem:[%s332 + $0x70] sm:$0xf]
      %v390 = vld [vmem:[%s332 + $0x74] sm:$0xf]
      %v391 = vld [vmem:[%s332 + $0x78] sm:$0xf]
      %v392 = vld [vmem:[%s332 + $0x7c] sm:$0xf]
      %v393 = vunpack.c.l.bf16 %v361
      %v394 = vunpack.c.l.bf16 %v362
      %v395 = vunpack.c.l.bf16 %v363
      %v396 = vunpack.c.l.bf16 %v364
      %v397 = vunpack.c.l.bf16 %v365
      %v398 = vunpack.c.l.bf16 %v366
      %v399 = vunpack.c.l.bf16 %v367
      %v400 = vunpack.c.l.bf16 %v368
      %v401 = vunpack.c.l.bf16 %v369
      %v402 = vunpack.c.l.bf16 %v370
      %v403 = vunpack.c.l.bf16 %v371
      %v404 = vunpack.c.l.bf16 %v372
      %v405 = vunpack.c.l.bf16 %v373
      %v406 = vunpack.c.l.bf16 %v374
      %v407 = vunpack.c.l.bf16 %v375
      %v408 = vunpack.c.l.bf16 %v376
      %v409 = vunpack.c.l.bf16 %v377
      %v410 = vunpack.c.l.bf16 %v378
      %v411 = vunpack.c.l.bf16 %v379
      %v412 = vunpack.c.l.bf16 %v380
      %v413 = vunpack.c.l.bf16 %v381
      %v414 = vunpack.c.l.bf16 %v382
      %v415 = vunpack.c.l.bf16 %v383
      %v416 = vunpack.c.l.bf16 %v384
      %v417 = vunpack.c.l.bf16 %v385
      %v418 = vunpack.c.l.bf16 %v386
      %v419 = vunpack.c.l.bf16 %v387
      %v420 = vunpack.c.l.bf16 %v388
      %v421 = vunpack.c.l.bf16 %v389
      %v422 = vunpack.c.l.bf16 %v390
      %v423 = vunpack.c.l.bf16 %v391
      %v424 = vunpack.c.l.bf16 %v392
      %v425 = vld [vmem:[%s335] sm:$0x1]
      %v427 = vperm.slane %v425, 0
      %v429 = vmul.f32 %v393, %v427
      %v430 = vmul.f32 %v394, %v427
      %v431 = vmul.f32 %v395, %v427
      %v432 = vmul.f32 %v396, %v427
      %v433 = vmul.f32 %v397, %v427
      %v434 = vmul.f32 %v398, %v427
      %v435 = vmul.f32 %v399, %v427
      %v436 = vmul.f32 %v400, %v427
      %v437 = vmul.f32 %v401, %v427
      %v438 = vmul.f32 %v402, %v427
      %v439 = vmul.f32 %v403, %v427
      %v440 = vmul.f32 %v404, %v427
      %v441 = vmul.f32 %v405, %v427
      %v442 = vmul.f32 %v406, %v427
      %v443 = vmul.f32 %v407, %v427
      %v444 = vmul.f32 %v408, %v427
      %v445 = vmul.f32 %v409, %v427
      %v446 = vmul.f32 %v410, %v427
      %v447 = vmul.f32 %v411, %v427
      %v448 = vmul.f32 %v412, %v427
      %v449 = vmul.f32 %v413, %v427
      %v450 = vmul.f32 %v414, %v427
      %v451 = vmul.f32 %v415, %v427
      %v452 = vmul.f32 %v416, %v427
      %v453 = vmul.f32 %v417, %v427
      %v454 = vmul.f32 %v418, %v427
      %v455 = vmul.f32 %v419, %v427
      %v456 = vmul.f32 %v420, %v427
      %v457 = vmul.f32 %v421, %v427
      %v458 = vmul.f32 %v422, %v427
      %v459 = vmul.f32 %v423, %v427
      %v460 = vmul.f32 %v424, %v427
      %v461 = vld [vmem:[%s338] sm:$0x1]
      %v463 = vperm.slane %v461, 0
      %v465 = vadd.f32 %v429, %v463
      %v466 = vadd.f32 %v430, %v463
      %v467 = vadd.f32 %v431, %v463
      %v468 = vadd.f32 %v432, %v463
      %v469 = vadd.f32 %v433, %v463
      %v470 = vadd.f32 %v434, %v463
      %v471 = vadd.f32 %v435, %v463
      %v472 = vadd.f32 %v436, %v463
      %v473 = vadd.f32 %v437, %v463
      %v474 = vadd.f32 %v438, %v463
      %v475 = vadd.f32 %v439, %v463
      %v476 = vadd.f32 %v440, %v463
      %v477 = vadd.f32 %v441, %v463
      %v478 = vadd.f32 %v442, %v463
      %v479 = vadd.f32 %v443, %v463
      %v480 = vadd.f32 %v444, %v463
      %v481 = vadd.f32 %v445, %v463
      %v482 = vadd.f32 %v446, %v463
      %v483 = vadd.f32 %v447, %v463
      %v484 = vadd.f32 %v448, %v463
      %v485 = vadd.f32 %v449, %v463
      %v486 = vadd.f32 %v450, %v463
      %v487 = vadd.f32 %v451, %v463
      %v488 = vadd.f32 %v452, %v463
      %v489 = vadd.f32 %v453, %v463
      %v490 = vadd.f32 %v454, %v463
      %v491 = vadd.f32 %v455, %v463
      %v492 = vadd.f32 %v456, %v463
      %v493 = vadd.f32 %v457, %v463
      %v494 = vadd.f32 %v458, %v463
      %v495 = vadd.f32 %v459, %v463
      %v496 = vadd.f32 %v460, %v463
      %497 = vst [vmem:[#allocation2] sm:$0xff] 0.0
      %498 = vst [vmem:[#allocation2 + $0x8] sm:$0xff] 0.0
      %499 = vst [vmem:[#allocation2 + $0x10] sm:$0x3] 0.0
      %s500 = scalar_lea.vmem [#allocation2], 408
      %501 = vst [vmem:[%s500] sm:$0xff] 0.0
      %502 = vst [vmem:[%s500 + $0x8] sm:$0xff] 0.0
      %503 = vst [vmem:[%s500 + $0x10] sm:$0x3] 0.0
      %s504 = scalar_lea.vmem [#allocation2], 24
      %505 = vst [vmem:[%s504] sm:$0x1] 0.0
      %506 = vst [vmem:[%s504 + $0x18] sm:$0x1] 0.0
      %507 = vst [vmem:[%s504 + $0x30] sm:$0x1] 0.0
      %508 = vst [vmem:[%s504 + $0x48] sm:$0x1] 0.0
      %509 = vst [vmem:[%s504 + $0x60] sm:$0x1] 0.0
      %510 = vst [vmem:[%s504 + $0x78] sm:$0x1] 0.0
      %511 = vst [vmem:[%s504 + $0x90] sm:$0x1] 0.0
      %512 = vst [vmem:[%s504 + $0xa8] sm:$0x1] 0.0
      %513 = vst [vmem:[%s504 + $0xc0] sm:$0x1] 0.0
      %514 = vst [vmem:[%s504 + $0xd8] sm:$0x1] 0.0
      %515 = vst [vmem:[%s504 + $0xf0] sm:$0x1] 0.0
      %516 = vst [vmem:[%s504 + $0x108] sm:$0x1] 0.0
      %517 = vst [vmem:[%s504 + $0x120] sm:$0x1] 0.0
      %518 = vst [vmem:[%s504 + $0x138] sm:$0x1] 0.0
      %519 = vst [vmem:[%s504 + $0x150] sm:$0x1] 0.0
      %520 = vst [vmem:[%s504 + $0x168] sm:$0x1] 0.0
      %521 = vst [vmem:[%s504 + $0x11] sm:$0x1] 0.0
      %522 = vst [vmem:[%s504 + $0x29] sm:$0x1] 0.0
      %523 = vst [vmem:[%s504 + $0x41] sm:$0x1] 0.0
      %524 = vst [vmem:[%s504 + $0x59] sm:$0x1] 0.0
      %525 = vst [vmem:[%s504 + $0x71] sm:$0x1] 0.0
      %526 = vst [vmem:[%s504 + $0x89] sm:$0x1] 0.0
      %527 = vst [vmem:[%s504 + $0xa1] sm:$0x1] 0.0
      %528 = vst [vmem:[%s504 + $0xb9] sm:$0x1] 0.0
      %529 = vst [vmem:[%s504 + $0xd1] sm:$0x1] 0.0
      %530 = vst [vmem:[%s504 + $0xe9] sm:$0x1] 0.0
      %531 = vst [vmem:[%s504 + $0x101] sm:$0x1] 0.0
      %532 = vst [vmem:[%s504 + $0x119] sm:$0x1] 0.0
      %533 = vst [vmem:[%s504 + $0x131] sm:$0x1] 0.0
      %534 = vst [vmem:[%s504 + $0x149] sm:$0x1] 0.0
      %535 = vst [vmem:[%s504 + $0x161] sm:$0x1] 0.0
      %536 = vst [vmem:[%s504 + $0x179] sm:$0x1] 0.0
      %537 = vst [vmem:[%s504 + $0x1] sm:$0xff] %v465
      %538 = vst [vmem:[%s504 + $0x9] sm:$0xff] %v466
      %539 = vst [vmem:[%s504 + $0x19] sm:$0xff] %v467
      %540 = vst [vmem:[%s504 + $0x21] sm:$0xff] %v468
      %541 = vst [vmem:[%s504 + $0x31] sm:$0xff] %v469
      %542 = vst [vmem:[%s504 + $0x39] sm:$0xff] %v470
      %543 = vst [vmem:[%s504 + $0x49] sm:$0xff] %v471
      %544 = vst [vmem:[%s504 + $0x51] sm:$0xff] %v472
      %545 = vst [vmem:[%s504 + $0x61] sm:$0xff] %v473
      %546 = vst [vmem:[%s504 + $0x69] sm:$0xff] %v474
      %547 = vst [vmem:[%s504 + $0x79] sm:$0xff] %v475
      %548 = vst [vmem:[%s504 + $0x81] sm:$0xff] %v476
      %549 = vst [vmem:[%s504 + $0x91] sm:$0xff] %v477
      %550 = vst [vmem:[%s504 + $0x99] sm:$0xff] %v478
      %551 = vst [vmem:[%s504 + $0xa9] sm:$0xff] %v479
      %552 = vst [vmem:[%s504 + $0xb1] sm:$0xff] %v480
      %553 = vst [vmem:[%s504 + $0xc1] sm:$0xff] %v481
      %554 = vst [vmem:[%s504 + $0xc9] sm:$0xff] %v482
      %555 = vst [vmem:[%s504 + $0xd9] sm:$0xff] %v483
      %556 = vst [vmem:[%s504 + $0xe1] sm:$0xff] %v484
      %557 = vst [vmem:[%s504 + $0xf1] sm:$0xff] %v485
      %558 = vst [vmem:[%s504 + $0xf9] sm:$0xff] %v486
      %559 = vst [vmem:[%s504 + $0x109] sm:$0xff] %v487
      %560 = vst [vmem:[%s504 + $0x111] sm:$0xff] %v488
      %561 = vst [vmem:[%s504 + $0x121] sm:$0xff] %v489
      %562 = vst [vmem:[%s504 + $0x129] sm:$0xff] %v490
      %563 = vst [vmem:[%s504 + $0x139] sm:$0xff] %v491
      %564 = vst [vmem:[%s504 + $0x141] sm:$0xff] %v492
      %565 = vst [vmem:[%s504 + $0x151] sm:$0xff] %v493
      %566 = vst [vmem:[%s504 + $0x159] sm:$0xff] %v494
      %567 = vst [vmem:[%s504 + $0x169] sm:$0xff] %v495
      %568 = vst [vmem:[%s504 + $0x171] sm:$0xff] %v496
      %v569 = vld [vmem:[%s342] sm:$0x7]
      %v570 = vld [vmem:[%s342 + $0x4] sm:$0x7]
      %v571 = vld [vmem:[%s342 + $0x8] sm:$0x7]
      %v572 = vld [vmem:[#allocation2] sm:$0xff]
      %v573 = vld [vmem:[#allocation2 + $0x8] sm:$0xff]
      %v574 = vld [vmem:[#allocation2 + $0x18] sm:$0xff]
      %v575 = vld [vmem:[#allocation2 + $0x20] sm:$0xff]
      %v576 = vld [vmem:[#allocation2 + $0x30] sm:$0xff]
      %v577 = vld [vmem:[#allocation2 + $0x38] sm:$0xff]
      %v578 = vld [vmem:[#allocation2 + $0x48] sm:$0xff]
      %v579 = vld [vmem:[#allocation2 + $0x50] sm:$0xff]
      %v580 = vld [vmem:[#allocation2 + $0x60] sm:$0xff]
      %v581 = vld [vmem:[#allocation2 + $0x68] sm:$0xff]
      %v582 = vld [vmem:[#allocation2 + $0x78] sm:$0xff]
      %v583 = vld [vmem:[#allocation2 + $0x80] sm:$0xff]
      %v584 = vld [vmem:[#allocation2 + $0x90] sm:$0xff]
      %v585 = vld [vmem:[#allocation2 + $0x98] sm:$0xff]
      %v586 = vld [vmem:[#allocation2 + $0xa8] sm:$0xff]
      %v587 = vld [vmem:[#allocation2 + $0xb0] sm:$0xff]
      %v588 = vld [vmem:[#allocation2 + $0xc0] sm:$0xff]
      %v589 = vld [vmem:[#allocation2 + $0xc8] sm:$0xff]
      %v590 = vld [vmem:[#allocation2 + $0xd8] sm:$0xff]
      %v591 = vld [vmem:[#allocation2 + $0xe0] sm:$0xff]
      %v592 = vld [vmem:[#allocation2 + $0xf0] sm:$0xff]
      %v593 = vld [vmem:[#allocation2 + $0xf8] sm:$0xff]
      %v594 = vld [vmem:[#allocation2 + $0x108] sm:$0xff]
      %v595 = vld [vmem:[#allocation2 + $0x110] sm:$0xff]
      %v596 = vld [vmem:[#allocation2 + $0x120] sm:$0xff]
      %v597 = vld [vmem:[#allocation2 + $0x128] sm:$0xff]
      %v598 = vld [vmem:[#allocation2 + $0x138] sm:$0xff]
      %v599 = vld [vmem:[#allocation2 + $0x140] sm:$0xff]
      %v600 = vld [vmem:[#allocation2 + $0x150] sm:$0xff]
      %v601 = vld [vmem:[#allocation2 + $0x158] sm:$0xff]
      %v602 = vld [vmem:[#allocation2 + $0x168] sm:$0xff]
      %v603 = vld [vmem:[#allocation2 + $0x170] sm:$0xff]
      %v604 = vld [vmem:[#allocation2 + $0x180] sm:$0xff]
      %v605 = vld [vmem:[#allocation2 + $0x188] sm:$0xff]
      %v606 = vld [vmem:[#allocation2 + $0x198] sm:$0xff]
      %v607 = vld [vmem:[#allocation2 + $0x1a0] sm:$0xff]
      %v608 = vperm.slane %v569, 0
      %v609 = vmul.f32 %v572, %v608
      %v610 = vmul.f32 %v573, %v608
      %v611 = vmul.f32 %v574, %v608
      %v612 = vmul.f32 %v575, %v608
      %v613 = vmul.f32 %v576, %v608
      %v614 = vmul.f32 %v577, %v608
      %v615 = vmul.f32 %v578, %v608
      %v616 = vmul.f32 %v579, %v608
      %v617 = vmul.f32 %v580, %v608
      %v618 = vmul.f32 %v581, %v608
      %v619 = vmul.f32 %v582, %v608
      %v620 = vmul.f32 %v583, %v608
      %v621 = vmul.f32 %v584, %v608
      %v622 = vmul.f32 %v585, %v608
      %v623 = vmul.f32 %v586, %v608
      %v624 = vmul.f32 %v587, %v608
      %v625 = vmul.f32 %v588, %v608
      %v626 = vmul.f32 %v589, %v608
      %v627 = vmul.f32 %v590, %v608
      %v628 = vmul.f32 %v591, %v608
      %v629 = vmul.f32 %v592, %v608
      %v630 = vmul.f32 %v593, %v608
      %v631 = vmul.f32 %v594, %v608
      %v632 = vmul.f32 %v595, %v608
      %v633 = vmul.f32 %v596, %v608
      %v634 = vmul.f32 %v597, %v608
      %v635 = vmul.f32 %v598, %v608
      %v636 = vmul.f32 %v599, %v608
      %v637 = vmul.f32 %v600, %v608
      %v638 = vmul.f32 %v601, %v608
      %v639 = vmul.f32 %v602, %v608
      %v640 = vmul.f32 %v603, %v608
      %v641 = vadd.f32 %v609, 0.0
      %v642 = vadd.f32 %v610, 0.0
      %v643 = vadd.f32 %v611, 0.0
      %v644 = vadd.f32 %v612, 0.0
      %v645 = vadd.f32 %v613, 0.0
      %v646 = vadd.f32 %v614, 0.0
      %v647 = vadd.f32 %v615, 0.0
      %v648 = vadd.f32 %v616, 0.0
      %v649 = vadd.f32 %v617, 0.0
      %v650 = vadd.f32 %v618, 0.0
      %v651 = vadd.f32 %v619, 0.0
      %v652 = vadd.f32 %v620, 0.0
      %v653 = vadd.f32 %v621, 0.0
      %v654 = vadd.f32 %v622, 0.0
      %v655 = vadd.f32 %v623, 0.0
      %v656 = vadd.f32 %v624, 0.0
      %v657 = vadd.f32 %v625, 0.0
      %v658 = vadd.f32 %v626, 0.0
      %v659 = vadd.f32 %v627, 0.0
      %v660 = vadd.f32 %v628, 0.0
      %v661 = vadd.f32 %v629, 0.0
      %v662 = vadd.f32 %v630, 0.0
      %v663 = vadd.f32 %v631, 0.0
      %v664 = vadd.f32 %v632, 0.0
      %v665 = vadd.f32 %v633, 0.0
      %v666 = vadd.f32 %v634, 0.0
      %v667 = vadd.f32 %v635, 0.0
      %v668 = vadd.f32 %v636, 0.0
      %v669 = vadd.f32 %v637, 0.0
      %v670 = vadd.f32 %v638, 0.0
      %v671 = vadd.f32 %v639, 0.0
      %v672 = vadd.f32 %v640, 0.0
      %v673 = vperm.slane %v570, 0
      %v674 = vmul.f32 %v574, %v673
      %v675 = vmul.f32 %v575, %v673
      %v676 = vmul.f32 %v576, %v673
      %v677 = vmul.f32 %v577, %v673
      %v678 = vmul.f32 %v578, %v673
      %v679 = vmul.f32 %v579, %v673
      %v680 = vmul.f32 %v580, %v673
      %v681 = vmul.f32 %v581, %v673
      %v682 = vmul.f32 %v582, %v673
      %v683 = vmul.f32 %v583, %v673
      %v684 = vmul.f32 %v584, %v673
      %v685 = vmul.f32 %v585, %v673
      %v686 = vmul.f32 %v586, %v673
      %v687 = vmul.f32 %v587, %v673
      %v688 = vmul.f32 %v588, %v673
      %v689 = vmul.f32 %v589, %v673
      %v690 = vmul.f32 %v590, %v673
      %v691 = vmul.f32 %v591, %v673
      %v692 = vmul.f32 %v592, %v673
      %v693 = vmul.f32 %v593, %v673
      %v694 = vmul.f32 %v594, %v673
      %v695 = vmul.f32 %v595, %v673
      %v696 = vmul.f32 %v596, %v673
      %v697 = vmul.f32 %v597, %v673
      %v698 = vmul.f32 %v598, %v673
      %v699 = vmul.f32 %v599, %v673
      %v700 = vmul.f32 %v600, %v673
      %v701 = vmul.f32 %v601, %v673
      %v702 = vmul.f32 %v602, %v673
      %v703 = vmul.f32 %v603, %v673
      %v704 = vmul.f32 %v604, %v673
      %v705 = vmul.f32 %v605, %v673
      %v706 = vadd.f32 %v641, %v674
      %v707 = vadd.f32 %v642, %v675
      %v708 = vadd.f32 %v643, %v676
      %v709 = vadd.f32 %v644, %v677
      %v710 = vadd.f32 %v645, %v678
      %v711 = vadd.f32 %v646, %v679
      %v712 = vadd.f32 %v647, %v680
      %v713 = vadd.f32 %v648, %v681
      %v714 = vadd.f32 %v649, %v682
      %v715 = vadd.f32 %v650, %v683
      %v716 = vadd.f32 %v651, %v684
      %v717 = vadd.f32 %v652, %v685
      %v718 = vadd.f32 %v653, %v686
      %v719 = vadd.f32 %v654, %v687
      %v720 = vadd.f32 %v655, %v688
      %v721 = vadd.f32 %v656, %v689
      %v722 = vadd.f32 %v657, %v690
      %v723 = vadd.f32 %v658, %v691
      %v724 = vadd.f32 %v659, %v692
      %v725 = vadd.f32 %v660, %v693
      %v726 = vadd.f32 %v661, %v694
      %v727 = vadd.f32 %v662, %v695
      %v728 = vadd.f32 %v663, %v696
      %v729 = vadd.f32 %v664, %v697
      %v730 = vadd.f32 %v665, %v698
      %v731 = vadd.f32 %v666, %v699
      %v732 = vadd.f32 %v667, %v700
      %v733 = vadd.f32 %v668, %v701
      %v734 = vadd.f32 %v669, %v702
      %v735 = vadd.f32 %v670, %v703
      %v736 = vadd.f32 %v671, %v704
      %v737 = vadd.f32 %v672, %v705
      %v738 = vperm.slane %v571, 0
      %v739 = vmul.f32 %v576, %v738
      %v740 = vmul.f32 %v577, %v738
      %v741 = vmul.f32 %v578, %v738
      %v742 = vmul.f32 %v579, %v738
      %v743 = vmul.f32 %v580, %v738
      %v744 = vmul.f32 %v581, %v738
      %v745 = vmul.f32 %v582, %v738
      %v746 = vmul.f32 %v583, %v738
      %v747 = vmul.f32 %v584, %v738
      %v748 = vmul.f32 %v585, %v738
      %v749 = vmul.f32 %v586, %v738
      %v750 = vmul.f32 %v587, %v738
      %v751 = vmul.f32 %v588, %v738
      %v752 = vmul.f32 %v589, %v738
      %v753 = vmul.f32 %v590, %v738
      %v754 = vmul.f32 %v591, %v738
      %v755 = vmul.f32 %v592, %v738
      %v756 = vmul.f32 %v593, %v738
      %v757 = vmul.f32 %v594, %v738
      %v758 = vmul.f32 %v595, %v738
      %v759 = vmul.f32 %v596, %v738
      %v760 = vmul.f32 %v597, %v738
      %v761 = vmul.f32 %v598, %v738
      %v762 = vmul.f32 %v599, %v738
      %v763 = vmul.f32 %v600, %v738
      %v764 = vmul.f32 %v601, %v738
      %v765 = vmul.f32 %v602, %v738
      %v766 = vmul.f32 %v603, %v738
      %v767 = vmul.f32 %v604, %v738
      %v768 = vmul.f32 %v605, %v738
      %v769 = vmul.f32 %v606, %v738
      %v770 = vmul.f32 %v607, %v738
      %v771 = vadd.f32 %v706, %v739
      %v772 = vadd.f32 %v707, %v740
      %v773 = vadd.f32 %v708, %v741
      %v774 = vadd.f32 %v709, %v742
      %v775 = vadd.f32 %v710, %v743
      %v776 = vadd.f32 %v711, %v744
      %v777 = vadd.f32 %v712, %v745
      %v778 = vadd.f32 %v713, %v746
      %v779 = vadd.f32 %v714, %v747
      %v780 = vadd.f32 %v715, %v748
      %v781 = vadd.f32 %v716, %v749
      %v782 = vadd.f32 %v717, %v750
      %v783 = vadd.f32 %v718, %v751
      %v784 = vadd.f32 %v719, %v752
      %v785 = vadd.f32 %v720, %v753
      %v786 = vadd.f32 %v721, %v754
      %v787 = vadd.f32 %v722, %v755
      %v788 = vadd.f32 %v723, %v756
      %v789 = vadd.f32 %v724, %v757
      %v790 = vadd.f32 %v725, %v758
      %v791 = vadd.f32 %v726, %v759
      %v792 = vadd.f32 %v727, %v760
      %v793 = vadd.f32 %v728, %v761
      %v794 = vadd.f32 %v729, %v762
      %v795 = vadd.f32 %v730, %v763
      %v796 = vadd.f32 %v731, %v764
      %v797 = vadd.f32 %v732, %v765
      %v798 = vadd.f32 %v733, %v766
      %v799 = vadd.f32 %v734, %v767
      %v800 = vadd.f32 %v735, %v768
      %v801 = vadd.f32 %v736, %v769
      %v802 = vadd.f32 %v737, %v770
      %v803 = vld [vmem:[#allocation2 + $0x1] sm:$0xff]
      %v804 = vld [vmem:[#allocation2 + $0x9] sm:$0xff]
      %v805 = vld [vmem:[#allocation2 + $0x19] sm:$0xff]
      %v806 = vld [vmem:[#allocation2 + $0x21] sm:$0xff]
      %v807 = vld [vmem:[#allocation2 + $0x31] sm:$0xff]
      %v808 = vld [vmem:[#allocation2 + $0x39] sm:$0xff]
      %v809 = vld [vmem:[#allocation2 + $0x49] sm:$0xff]
      %v810 = vld [vmem:[#allocation2 + $0x51] sm:$0xff]
      %v811 = vld [vmem:[#allocation2 + $0x61] sm:$0xff]
      %v812 = vld [vmem:[#allocation2 + $0x69] sm:$0xff]
      %v813 = vld [vmem:[#allocation2 + $0x79] sm:$0xff]
      %v814 = vld [vmem:[#allocation2 + $0x81] sm:$0xff]
      %v815 = vld [vmem:[#allocation2 + $0x91] sm:$0xff]
      %v816 = vld [vmem:[#allocation2 + $0x99] sm:$0xff]
      %v817 = vld [vmem:[#allocation2 + $0xa9] sm:$0xff]
      %v818 = vld [vmem:[#allocation2 + $0xb1] sm:$0xff]
      %v819 = vld [vmem:[#allocation2 + $0xc1] sm:$0xff]
      %v820 = vld [vmem:[#allocation2 + $0xc9] sm:$0xff]
      %v821 = vld [vmem:[#allocation2 + $0xd9] sm:$0xff]
      %v822 = vld [vmem:[#allocation2 + $0xe1] sm:$0xff]
      %v823 = vld [vmem:[#allocation2 + $0xf1] sm:$0xff]
      %v824 = vld [vmem:[#allocation2 + $0xf9] sm:$0xff]
      %v825 = vld [vmem:[#allocation2 + $0x109] sm:$0xff]
      %v826 = vld [vmem:[#allocation2 + $0x111] sm:$0xff]
      %v827 = vld [vmem:[#allocation2 + $0x121] sm:$0xff]
      %v828 = vld [vmem:[#allocation2 + $0x129] sm:$0xff]
      %v829 = vld [vmem:[#allocation2 + $0x139] sm:$0xff]
      %v830 = vld [vmem:[#allocation2 + $0x141] sm:$0xff]
      %v831 = vld [vmem:[#allocation2 + $0x151] sm:$0xff]
      %v832 = vld [vmem:[#allocation2 + $0x159] sm:$0xff]
      %v833 = vld [vmem:[#allocation2 + $0x169] sm:$0xff]
      %v834 = vld [vmem:[#allocation2 + $0x171] sm:$0xff]
      %v835 = vld [vmem:[#allocation2 + $0x181] sm:$0xff]
      %v836 = vld [vmem:[#allocation2 + $0x189] sm:$0xff]
      %v837 = vld [vmem:[#allocation2 + $0x199] sm:$0xff]
      %v838 = vld [vmem:[#allocation2 + $0x1a1] sm:$0xff]
      %v839 = vperm.slane %v569, 1
      %v840 = vmul.f32 %v803, %v839
      %v841 = vmul.f32 %v804, %v839
      %v842 = vmul.f32 %v805, %v839
      %v843 = vmul.f32 %v806, %v839
      %v844 = vmul.f32 %v807, %v839
      %v845 = vmul.f32 %v808, %v839
      %v846 = vmul.f32 %v809, %v839
      %v847 = vmul.f32 %v810, %v839
      %v848 = vmul.f32 %v811, %v839
      %v849 = vmul.f32 %v812, %v839
      %v850 = vmul.f32 %v813, %v839
      %v851 = vmul.f32 %v814, %v839
      %v852 = vmul.f32 %v815, %v839
      %v853 = vmul.f32 %v816, %v839
      %v854 = vmul.f32 %v817, %v839
      %v855 = vmul.f32 %v818, %v839
      %v856 = vmul.f32 %v819, %v839
      %v857 = vmul.f32 %v820, %v839
      %v858 = vmul.f32 %v821, %v839
      %v859 = vmul.f32 %v822, %v839
      %v860 = vmul.f32 %v823, %v839
      %v861 = vmul.f32 %v824, %v839
      %v862 = vmul.f32 %v825, %v839
      %v863 = vmul.f32 %v826, %v839
      %v864 = vmul.f32 %v827, %v839
      %v865 = vmul.f32 %v828, %v839
      %v866 = vmul.f32 %v829, %v839
      %v867 = vmul.f32 %v830, %v839
      %v868 = vmul.f32 %v831, %v839
      %v869 = vmul.f32 %v832, %v839
      %v870 = vmul.f32 %v833, %v839
      %v871 = vmul.f32 %v834, %v839
      %v872 = vadd.f32 %v771, %v840
      %v873 = vadd.f32 %v772, %v841
      %v874 = vadd.f32 %v773, %v842
      %v875 = vadd.f32 %v774, %v843
      %v876 = vadd.f32 %v775, %v844
      %v877 = vadd.f32 %v776, %v845
      %v878 = vadd.f32 %v777, %v846
      %v879 = vadd.f32 %v778, %v847
      %v880 = vadd.f32 %v779, %v848
      %v881 = vadd.f32 %v780, %v849
      %v882 = vadd.f32 %v781, %v850
      %v883 = vadd.f32 %v782, %v851
      %v884 = vadd.f32 %v783, %v852
      %v885 = vadd.f32 %v784, %v853
      %v886 = vadd.f32 %v785, %v854
      %v887 = vadd.f32 %v786, %v855
      %v888 = vadd.f32 %v787, %v856
      %v889 = vadd.f32 %v788, %v857
      %v890 = vadd.f32 %v789, %v858
      %v891 = vadd.f32 %v790, %v859
      %v892 = vadd.f32 %v791, %v860
      %v893 = vadd.f32 %v792, %v861
      %v894 = vadd.f32 %v793, %v862
      %v895 = vadd.f32 %v794, %v863
      %v896 = vadd.f32 %v795, %v864
      %v897 = vadd.f32 %v796, %v865
      %v898 = vadd.f32 %v797, %v866
      %v899 = vadd.f32 %v798, %v867
      %v900 = vadd.f32 %v799, %v868
      %v901 = vadd.f32 %v800, %v869
      %v902 = vadd.f32 %v801, %v870
      %v903 = vadd.f32 %v802, %v871
      %v904 = vperm.slane %v570, 1
      %v905 = vmul.f32 %v805, %v904
      %v906 = vmul.f32 %v806, %v904
      %v907 = vmul.f32 %v807, %v904
      %v908 = vmul.f32 %v808, %v904
      %v909 = vmul.f32 %v809, %v904
      %v910 = vmul.f32 %v810, %v904
      %v911 = vmul.f32 %v811, %v904
      %v912 = vmul.f32 %v812, %v904
      %v913 = vmul.f32 %v813, %v904
      %v914 = vmul.f32 %v814, %v904
      %v915 = vmul.f32 %v815, %v904
      %v916 = vmul.f32 %v816, %v904
      %v917 = vmul.f32 %v817, %v904
      %v918 = vmul.f32 %v818, %v904
      %v919 = vmul.f32 %v819, %v904
      %v920 = vmul.f32 %v820, %v904
      %v921 = vmul.f32 %v821, %v904
      %v922 = vmul.f32 %v822, %v904
      %v923 = vmul.f32 %v823, %v904
      %v924 = vmul.f32 %v824, %v904
      %v925 = vmul.f32 %v825, %v904
      %v926 = vmul.f32 %v826, %v904
      %v927 = vmul.f32 %v827, %v904
      %v928 = vmul.f32 %v828, %v904
      %v929 = vmul.f32 %v829, %v904
      %v930 = vmul.f32 %v830, %v904
      %v931 = vmul.f32 %v831, %v904
      %v932 = vmul.f32 %v832, %v904
      %v933 = vmul.f32 %v833, %v904
      %v934 = vmul.f32 %v834, %v904
      %v935 = vmul.f32 %v835, %v904
      %v936 = vmul.f32 %v836, %v904
      %v937 = vadd.f32 %v872, %v905
      %v938 = vadd.f32 %v873, %v906
      %v939 = vadd.f32 %v874, %v907
      %v940 = vadd.f32 %v875, %v908
      %v941 = vadd.f32 %v876, %v909
      %v942 = vadd.f32 %v877, %v910
      %v943 = vadd.f32 %v878, %v911
      %v944 = vadd.f32 %v879, %v912
      %v945 = vadd.f32 %v880, %v913
      %v946 = vadd.f32 %v881, %v914
      %v947 = vadd.f32 %v882, %v915
      %v948 = vadd.f32 %v883, %v916
      %v949 = vadd.f32 %v884, %v917
      %v950 = vadd.f32 %v885, %v918
      %v951 = vadd.f32 %v886, %v919
      %v952 = vadd.f32 %v887, %v920
      %v953 = vadd.f32 %v888, %v921
      %v954 = vadd.f32 %v889, %v922
      %v955 = vadd.f32 %v890, %v923
      %v956 = vadd.f32 %v891, %v924
      %v957 = vadd.f32 %v892, %v925
      %v958 = vadd.f32 %v893, %v926
      %v959 = vadd.f32 %v894, %v927
      %v960 = vadd.f32 %v895, %v928
      %v961 = vadd.f32 %v896, %v929
      %v962 = vadd.f32 %v897, %v930
      %v963 = vadd.f32 %v898, %v931
      %v964 = vadd.f32 %v899, %v932
      %v965 = vadd.f32 %v900, %v933
      %v966 = vadd.f32 %v901, %v934
      %v967 = vadd.f32 %v902, %v935
      %v968 = vadd.f32 %v903, %v936
      %v969 = vperm.slane %v571, 1
      %v970 = vmul.f32 %v807, %v969
      %v971 = vmul.f32 %v808, %v969
      %v972 = vmul.f32 %v809, %v969
      %v973 = vmul.f32 %v810, %v969
      %v974 = vmul.f32 %v811, %v969
      %v975 = vmul.f32 %v812, %v969
      %v976 = vmul.f32 %v813, %v969
      %v977 = vmul.f32 %v814, %v969
      %v978 = vmul.f32 %v815, %v969
      %v979 = vmul.f32 %v816, %v969
      %v980 = vmul.f32 %v817, %v969
      %v981 = vmul.f32 %v818, %v969
      %v982 = vmul.f32 %v819, %v969
      %v983 = vmul.f32 %v820, %v969
      %v984 = vmul.f32 %v821, %v969
      %v985 = vmul.f32 %v822, %v969
      %v986 = vmul.f32 %v823, %v969
      %v987 = vmul.f32 %v824, %v969
      %v988 = vmul.f32 %v825, %v969
      %v989 = vmul.f32 %v826, %v969
      %v990 = vmul.f32 %v827, %v969
      %v991 = vmul.f32 %v828, %v969
      %v992 = vmul.f32 %v829, %v969
      %v993 = vmul.f32 %v830, %v969
      %v994 = vmul.f32 %v831, %v969
      %v995 = vmul.f32 %v832, %v969
      %v996 = vmul.f32 %v833, %v969
      %v997 = vmul.f32 %v834, %v969
      %v998 = vmul.f32 %v835, %v969
      %v999 = vmul.f32 %v836, %v969
      %v1000 = vmul.f32 %v837, %v969
      %v1001 = vmul.f32 %v838, %v969
      %v1002 = vadd.f32 %v937, %v970
      %v1003 = vadd.f32 %v938, %v971
      %v1004 = vadd.f32 %v939, %v972
      %v1005 = vadd.f32 %v940, %v973
      %v1006 = vadd.f32 %v941, %v974
      %v1007 = vadd.f32 %v942, %v975
      %v1008 = vadd.f32 %v943, %v976
      %v1009 = vadd.f32 %v944, %v977
      %v1010 = vadd.f32 %v945, %v978
      %v1011 = vadd.f32 %v946, %v979
      %v1012 = vadd.f32 %v947, %v980
      %v1013 = vadd.f32 %v948, %v981
      %v1014 = vadd.f32 %v949, %v982
      %v1015 = vadd.f32 %v950, %v983
      %v1016 = vadd.f32 %v951, %v984
      %v1017 = vadd.f32 %v952, %v985
      %v1018 = vadd.f32 %v953, %v986
      %v1019 = vadd.f32 %v954, %v987
      %v1020 = vadd.f32 %v955, %v988
      %v1021 = vadd.f32 %v956, %v989
      %v1022 = vadd.f32 %v957, %v990
      %v1023 = vadd.f32 %v958, %v991
      %v1024 = vadd.f32 %v959, %v992
      %v1025 = vadd.f32 %v960, %v993
      %v1026 = vadd.f32 %v961, %v994
      %v1027 = vadd.f32 %v962, %v995
      %v1028 = vadd.f32 %v963, %v996
      %v1029 = vadd.f32 %v964, %v997
      %v1030 = vadd.f32 %v965, %v998
      %v1031 = vadd.f32 %v966, %v999
      %v1032 = vadd.f32 %v967, %v1000
      %v1033 = vadd.f32 %v968, %v1001
      %v1034 = vld [vmem:[#allocation2 + $0x2] sm:$0xff]
      %v1035 = vld [vmem:[#allocation2 + $0xa] sm:$0xff]
      %v1036 = vld [vmem:[#allocation2 + $0x1a] sm:$0xff]
      %v1037 = vld [vmem:[#allocation2 + $0x22] sm:$0xff]
      %v1038 = vld [vmem:[#allocation2 + $0x32] sm:$0xff]
      %v1039 = vld [vmem:[#allocation2 + $0x3a] sm:$0xff]
      %v1040 = vld [vmem:[#allocation2 + $0x4a] sm:$0xff]
      %v1041 = vld [vmem:[#allocation2 + $0x52] sm:$0xff]
      %v1042 = vld [vmem:[#allocation2 + $0x62] sm:$0xff]
      %v1043 = vld [vmem:[#allocation2 + $0x6a] sm:$0xff]
      %v1044 = vld [vmem:[#allocation2 + $0x7a] sm:$0xff]
      %v1045 = vld [vmem:[#allocation2 + $0x82] sm:$0xff]
      %v1046 = vld [vmem:[#allocation2 + $0x92] sm:$0xff]
      %v1047 = vld [vmem:[#allocation2 + $0x9a] sm:$0xff]
      %v1048 = vld [vmem:[#allocation2 + $0xaa] sm:$0xff]
      %v1049 = vld [vmem:[#allocation2 + $0xb2] sm:$0xff]
      %v1050 = vld [vmem:[#allocation2 + $0xc2] sm:$0xff]
      %v1051 = vld [vmem:[#allocation2 + $0xca] sm:$0xff]
      %v1052 = vld [vmem:[#allocation2 + $0xda] sm:$0xff]
      %v1053 = vld [vmem:[#allocation2 + $0xe2] sm:$0xff]
      %v1054 = vld [vmem:[#allocation2 + $0xf2] sm:$0xff]
      %v1055 = vld [vmem:[#allocation2 + $0xfa] sm:$0xff]
      %v1056 = vld [vmem:[#allocation2 + $0x10a] sm:$0xff]
      %v1057 = vld [vmem:[#allocation2 + $0x112] sm:$0xff]
      %v1058 = vld [vmem:[#allocation2 + $0x122] sm:$0xff]
      %v1059 = vld [vmem:[#allocation2 + $0x12a] sm:$0xff]
      %v1060 = vld [vmem:[#allocation2 + $0x13a] sm:$0xff]
      %v1061 = vld [vmem:[#allocation2 + $0x142] sm:$0xff]
      %v1062 = vld [vmem:[#allocation2 + $0x152] sm:$0xff]
      %v1063 = vld [vmem:[#allocation2 + $0x15a] sm:$0xff]
      %v1064 = vld [vmem:[#allocation2 + $0x16a] sm:$0xff]
      %v1065 = vld [vmem:[#allocation2 + $0x172] sm:$0xff]
      %v1066 = vld [vmem:[#allocation2 + $0x182] sm:$0xff]
      %v1067 = vld [vmem:[#allocation2 + $0x18a] sm:$0xff]
      %v1068 = vld [vmem:[#allocation2 + $0x19a] sm:$0xff]
      %v1069 = vld [vmem:[#allocation2 + $0x1a2] sm:$0xff]
      %v1070 = vperm.slane %v569, 2
      %v1071 = vmul.f32 %v1034, %v1070
      %v1072 = vmul.f32 %v1035, %v1070
      %v1073 = vmul.f32 %v1036, %v1070
      %v1074 = vmul.f32 %v1037, %v1070
      %v1075 = vmul.f32 %v1038, %v1070
      %v1076 = vmul.f32 %v1039, %v1070
      %v1077 = vmul.f32 %v1040, %v1070
      %v1078 = vmul.f32 %v1041, %v1070
      %v1079 = vmul.f32 %v1042, %v1070
      %v1080 = vmul.f32 %v1043, %v1070
      %v1081 = vmul.f32 %v1044, %v1070
      %v1082 = vmul.f32 %v1045, %v1070
      %v1083 = vmul.f32 %v1046, %v1070
      %v1084 = vmul.f32 %v1047, %v1070
      %v1085 = vmul.f32 %v1048, %v1070
      %v1086 = vmul.f32 %v1049, %v1070
      %v1087 = vmul.f32 %v1050, %v1070
      %v1088 = vmul.f32 %v1051, %v1070
      %v1089 = vmul.f32 %v1052, %v1070
      %v1090 = vmul.f32 %v1053, %v1070
      %v1091 = vmul.f32 %v1054, %v1070
      %v1092 = vmul.f32 %v1055, %v1070
      %v1093 = vmul.f32 %v1056, %v1070
      %v1094 = vmul.f32 %v1057, %v1070
      %v1095 = vmul.f32 %v1058, %v1070
      %v1096 = vmul.f32 %v1059, %v1070
      %v1097 = vmul.f32 %v1060, %v1070
      %v1098 = vmul.f32 %v1061, %v1070
      %v1099 = vmul.f32 %v1062, %v1070
      %v1100 = vmul.f32 %v1063, %v1070
      %v1101 = vmul.f32 %v1064, %v1070
      %v1102 = vmul.f32 %v1065, %v1070
      %v1103 = vadd.f32 %v1002, %v1071
      %v1104 = vadd.f32 %v1003, %v1072
      %v1105 = vadd.f32 %v1004, %v1073
      %v1106 = vadd.f32 %v1005, %v1074
      %v1107 = vadd.f32 %v1006, %v1075
      %v1108 = vadd.f32 %v1007, %v1076
      %v1109 = vadd.f32 %v1008, %v1077
      %v1110 = vadd.f32 %v1009, %v1078
      %v1111 = vadd.f32 %v1010, %v1079
      %v1112 = vadd.f32 %v1011, %v1080
      %v1113 = vadd.f32 %v1012, %v1081
      %v1114 = vadd.f32 %v1013, %v1082
      %v1115 = vadd.f32 %v1014, %v1083
      %v1116 = vadd.f32 %v1015, %v1084
      %v1117 = vadd.f32 %v1016, %v1085
      %v1118 = vadd.f32 %v1017, %v1086
      %v1119 = vadd.f32 %v1018, %v1087
      %v1120 = vadd.f32 %v1019, %v1088
      %v1121 = vadd.f32 %v1020, %v1089
      %v1122 = vadd.f32 %v1021, %v1090
      %v1123 = vadd.f32 %v1022, %v1091
      %v1124 = vadd.f32 %v1023, %v1092
      %v1125 = vadd.f32 %v1024, %v1093
      %v1126 = vadd.f32 %v1025, %v1094
      %v1127 = vadd.f32 %v1026, %v1095
      %v1128 = vadd.f32 %v1027, %v1096
      %v1129 = vadd.f32 %v1028, %v1097
      %v1130 = vadd.f32 %v1029, %v1098
      %v1131 = vadd.f32 %v1030, %v1099
      %v1132 = vadd.f32 %v1031, %v1100
      %v1133 = vadd.f32 %v1032, %v1101
      %v1134 = vadd.f32 %v1033, %v1102
      %v1135 = vperm.slane %v570, 2
      %v1136 = vmul.f32 %v1036, %v1135
      %v1137 = vmul.f32 %v1037, %v1135
      %v1138 = vmul.f32 %v1038, %v1135
      %v1139 = vmul.f32 %v1039, %v1135
      %v1140 = vmul.f32 %v1040, %v1135
      %v1141 = vmul.f32 %v1041, %v1135
      %v1142 = vmul.f32 %v1042, %v1135
      %v1143 = vmul.f32 %v1043, %v1135
      %v1144 = vmul.f32 %v1044, %v1135
      %v1145 = vmul.f32 %v1045, %v1135
      %v1146 = vmul.f32 %v1046, %v1135
      %v1147 = vmul.f32 %v1047, %v1135
      %v1148 = vmul.f32 %v1048, %v1135
      %v1149 = vmul.f32 %v1049, %v1135
      %v1150 = vmul.f32 %v1050, %v1135
      %v1151 = vmul.f32 %v1051, %v1135
      %v1152 = vmul.f32 %v1052, %v1135
      %v1153 = vmul.f32 %v1053, %v1135
      %v1154 = vmul.f32 %v1054, %v1135
      %v1155 = vmul.f32 %v1055, %v1135
      %v1156 = vmul.f32 %v1056, %v1135
      %v1157 = vmul.f32 %v1057, %v1135
      %v1158 = vmul.f32 %v1058, %v1135
      %v1159 = vmul.f32 %v1059, %v1135
      %v1160 = vmul.f32 %v1060, %v1135
      %v1161 = vmul.f32 %v1061, %v1135
      %v1162 = vmul.f32 %v1062, %v1135
      %v1163 = vmul.f32 %v1063, %v1135
      %v1164 = vmul.f32 %v1064, %v1135
      %v1165 = vmul.f32 %v1065, %v1135
      %v1166 = vmul.f32 %v1066, %v1135
      %v1167 = vmul.f32 %v1067, %v1135
      %v1168 = vadd.f32 %v1103, %v1136
      %v1169 = vadd.f32 %v1104, %v1137
      %v1170 = vadd.f32 %v1105, %v1138
      %v1171 = vadd.f32 %v1106, %v1139
      %v1172 = vadd.f32 %v1107, %v1140
      %v1173 = vadd.f32 %v1108, %v1141
      %v1174 = vadd.f32 %v1109, %v1142
      %v1175 = vadd.f32 %v1110, %v1143
      %v1176 = vadd.f32 %v1111, %v1144
      %v1177 = vadd.f32 %v1112, %v1145
      %v1178 = vadd.f32 %v1113, %v1146
      %v1179 = vadd.f32 %v1114, %v1147
      %v1180 = vadd.f32 %v1115, %v1148
      %v1181 = vadd.f32 %v1116, %v1149
      %v1182 = vadd.f32 %v1117, %v1150
      %v1183 = vadd.f32 %v1118, %v1151
      %v1184 = vadd.f32 %v1119, %v1152
      %v1185 = vadd.f32 %v1120, %v1153
      %v1186 = vadd.f32 %v1121, %v1154
      %v1187 = vadd.f32 %v1122, %v1155
      %v1188 = vadd.f32 %v1123, %v1156
      %v1189 = vadd.f32 %v1124, %v1157
      %v1190 = vadd.f32 %v1125, %v1158
      %v1191 = vadd.f32 %v1126, %v1159
      %v1192 = vadd.f32 %v1127, %v1160
      %v1193 = vadd.f32 %v1128, %v1161
      %v1194 = vadd.f32 %v1129, %v1162
      %v1195 = vadd.f32 %v1130, %v1163
      %v1196 = vadd.f32 %v1131, %v1164
      %v1197 = vadd.f32 %v1132, %v1165
      %v1198 = vadd.f32 %v1133, %v1166
      %v1199 = vadd.f32 %v1134, %v1167
      %v1200 = vperm.slane %v571, 2
      %v1201 = vmul.f32 %v1038, %v1200
      %v1202 = vmul.f32 %v1039, %v1200
      %v1203 = vmul.f32 %v1040, %v1200
      %v1204 = vmul.f32 %v1041, %v1200
      %v1205 = vmul.f32 %v1042, %v1200
      %v1206 = vmul.f32 %v1043, %v1200
      %v1207 = vmul.f32 %v1044, %v1200
      %v1208 = vmul.f32 %v1045, %v1200
      %v1209 = vmul.f32 %v1046, %v1200
      %v1210 = vmul.f32 %v1047, %v1200
      %v1211 = vmul.f32 %v1048, %v1200
      %v1212 = vmul.f32 %v1049, %v1200
      %v1213 = vmul.f32 %v1050, %v1200
      %v1214 = vmul.f32 %v1051, %v1200
      %v1215 = vmul.f32 %v1052, %v1200
      %v1216 = vmul.f32 %v1053, %v1200
      %v1217 = vmul.f32 %v1054, %v1200
      %v1218 = vmul.f32 %v1055, %v1200
      %v1219 = vmul.f32 %v1056, %v1200
      %v1220 = vmul.f32 %v1057, %v1200
      %v1221 = vmul.f32 %v1058, %v1200
      %v1222 = vmul.f32 %v1059, %v1200
      %v1223 = vmul.f32 %v1060, %v1200
      %v1224 = vmul.f32 %v1061, %v1200
      %v1225 = vmul.f32 %v1062, %v1200
      %v1226 = vmul.f32 %v1063, %v1200
      %v1227 = vmul.f32 %v1064, %v1200
      %v1228 = vmul.f32 %v1065, %v1200
      %v1229 = vmul.f32 %v1066, %v1200
      %v1230 = vmul.f32 %v1067, %v1200
      %v1231 = vmul.f32 %v1068, %v1200
      %v1232 = vmul.f32 %v1069, %v1200
      %v1233 = vadd.f32 %v1168, %v1201
      %v1234 = vadd.f32 %v1169, %v1202
      %v1235 = vadd.f32 %v1170, %v1203
      %v1236 = vadd.f32 %v1171, %v1204
      %v1237 = vadd.f32 %v1172, %v1205
      %v1238 = vadd.f32 %v1173, %v1206
      %v1239 = vadd.f32 %v1174, %v1207
      %v1240 = vadd.f32 %v1175, %v1208
      %v1241 = vadd.f32 %v1176, %v1209
      %v1242 = vadd.f32 %v1177, %v1210
      %v1243 = vadd.f32 %v1178, %v1211
      %v1244 = vadd.f32 %v1179, %v1212
      %v1245 = vadd.f32 %v1180, %v1213
      %v1246 = vadd.f32 %v1181, %v1214
      %v1247 = vadd.f32 %v1182, %v1215
      %v1248 = vadd.f32 %v1183, %v1216
      %v1249 = vadd.f32 %v1184, %v1217
      %v1250 = vadd.f32 %v1185, %v1218
      %v1251 = vadd.f32 %v1186, %v1219
      %v1252 = vadd.f32 %v1187, %v1220
      %v1253 = vadd.f32 %v1188, %v1221
      %v1254 = vadd.f32 %v1189, %v1222
      %v1255 = vadd.f32 %v1190, %v1223
      %v1256 = vadd.f32 %v1191, %v1224
      %v1257 = vadd.f32 %v1192, %v1225
      %v1258 = vadd.f32 %v1193, %v1226
      %v1259 = vadd.f32 %v1194, %v1227
      %v1260 = vadd.f32 %v1195, %v1228
      %v1261 = vadd.f32 %v1196, %v1229
      %v1262 = vadd.f32 %v1197, %v1230
      %v1263 = vadd.f32 %v1198, %v1231
      %v1264 = vadd.f32 %v1199, %v1232
      %v1265 = vld [vmem:[%s345] sm:$0x1]
      %v1267 = vperm.slane %v1265, 0
      %v1269 = vadd.f32 %v1233, %v1267
      %v1270 = vadd.f32 %v1234, %v1267
      %v1271 = vadd.f32 %v1235, %v1267
      %v1272 = vadd.f32 %v1236, %v1267
      %v1273 = vadd.f32 %v1237, %v1267
      %v1274 = vadd.f32 %v1238, %v1267
      %v1275 = vadd.f32 %v1239, %v1267
      %v1276 = vadd.f32 %v1240, %v1267
      %v1277 = vadd.f32 %v1241, %v1267
      %v1278 = vadd.f32 %v1242, %v1267
      %v1279 = vadd.f32 %v1243, %v1267
      %v1280 = vadd.f32 %v1244, %v1267
      %v1281 = vadd.f32 %v1245, %v1267
      %v1282 = vadd.f32 %v1246, %v1267
      %v1283 = vadd.f32 %v1247, %v1267
      %v1284 = vadd.f32 %v1248, %v1267
      %v1285 = vadd.f32 %v1249, %v1267
      %v1286 = vadd.f32 %v1250, %v1267
      %v1287 = vadd.f32 %v1251, %v1267
      %v1288 = vadd.f32 %v1252, %v1267
      %v1289 = vadd.f32 %v1253, %v1267
      %v1290 = vadd.f32 %v1254, %v1267
      %v1291 = vadd.f32 %v1255, %v1267
      %v1292 = vadd.f32 %v1256, %v1267
      %v1293 = vadd.f32 %v1257, %v1267
      %v1294 = vadd.f32 %v1258, %v1267
      %v1295 = vadd.f32 %v1259, %v1267
      %v1296 = vadd.f32 %v1260, %v1267
      %v1297 = vadd.f32 %v1261, %v1267
      %v1298 = vadd.f32 %v1262, %v1267
      %v1299 = vadd.f32 %v1263, %v1267
      %v1300 = vadd.f32 %v1264, %v1267
      %v1301 = vmul.f32 %v1269, 0.5
      %v1302 = vmul.f32 %v1270, 0.5
      %v1303 = vmul.f32 %v1271, 0.5
      %v1304 = vmul.f32 %v1272, 0.5
      %v1305 = vmul.f32 %v1273, 0.5
      %v1306 = vmul.f32 %v1274, 0.5
      %v1307 = vmul.f32 %v1275, 0.5
      %v1308 = vmul.f32 %v1276, 0.5
      %v1309 = vmul.f32 %v1277, 0.5
      %v1310 = vmul.f32 %v1278, 0.5
      %v1311 = vmul.f32 %v1279, 0.5
      %v1312 = vmul.f32 %v1280, 0.5
      %v1313 = vmul.f32 %v1281, 0.5
      %v1314 = vmul.f32 %v1282, 0.5
      %v1315 = vmul.f32 %v1283, 0.5
      %v1316 = vmul.f32 %v1284, 0.5
      %v1317 = vmul.f32 %v1285, 0.5
      %v1318 = vmul.f32 %v1286, 0.5
      %v1319 = vmul.f32 %v1287, 0.5
      %v1320 = vmul.f32 %v1288, 0.5
      %v1321 = vmul.f32 %v1289, 0.5
      %v1322 = vmul.f32 %v1290, 0.5
      %v1323 = vmul.f32 %v1291, 0.5
      %v1324 = vmul.f32 %v1292, 0.5
      %v1325 = vmul.f32 %v1293, 0.5
      %v1326 = vmul.f32 %v1294, 0.5
      %v1327 = vmul.f32 %v1295, 0.5
      %v1328 = vmul.f32 %v1296, 0.5
      %v1329 = vmul.f32 %v1297, 0.5
      %v1330 = vmul.f32 %v1298, 0.5
      %v1331 = vmul.f32 %v1299, 0.5
      %v1332 = vmul.f32 %v1300, 0.5
      %v1333 = vmul.f32 %v1269, 0.044715
      %v1334 = vmul.f32 %v1270, 0.044715
      %v1335 = vmul.f32 %v1271, 0.044715
      %v1336 = vmul.f32 %v1272, 0.044715
      %v1337 = vmul.f32 %v1273, 0.044715
      %v1338 = vmul.f32 %v1274, 0.044715
      %v1339 = vmul.f32 %v1275, 0.044715
      %v1340 = vmul.f32 %v1276, 0.044715
      %v1341 = vmul.f32 %v1277, 0.044715
      %v1342 = vmul.f32 %v1278, 0.044715
      %v1343 = vmul.f32 %v1279, 0.044715
      %v1344 = vmul.f32 %v1280, 0.044715
      %v1345 = vmul.f32 %v1281, 0.044715
      %v1346 = vmul.f32 %v1282, 0.044715
      %v1347 = vmul.f32 %v1283, 0.044715
      %v1348 = vmul.f32 %v1284, 0.044715
      %v1349 = vmul.f32 %v1285, 0.044715
      %v1350 = vmul.f32 %v1286, 0.044715
      %v1351 = vmul.f32 %v1287, 0.044715
      %v1352 = vmul.f32 %v1288, 0.044715
      %v1353 = vmul.f32 %v1289, 0.044715
      %v1354 = vmul.f32 %v1290, 0.044715
      %v1355 = vmul.f32 %v1291, 0.044715
      %v1356 = vmul.f32 %v1292, 0.044715
      %v1357 = vmul.f32 %v1293, 0.044715
      %v1358 = vmul.f32 %v1294, 0.044715
      %v1359 = vmul.f32 %v1295, 0.044715
      %v1360 = vmul.f32 %v1296, 0.044715
      %v1361 = vmul.f32 %v1297, 0.044715
      %v1362 = vmul.f32 %v1298, 0.044715
      %v1363 = vmul.f32 %v1299, 0.044715
      %v1364 = vmul.f32 %v1300, 0.044715
      %v1365 = vmul.f32 %v1333, %v1269
      %v1366 = vmul.f32 %v1334, %v1270
      %v1367 = vmul.f32 %v1335, %v1271
      %v1368 = vmul.f32 %v1336, %v1272
      %v1369 = vmul.f32 %v1337, %v1273
      %v1370 = vmul.f32 %v1338, %v1274
      %v1371 = vmul.f32 %v1339, %v1275
      %v1372 = vmul.f32 %v1340, %v1276
      %v1373 = vmul.f32 %v1341, %v1277
      %v1374 = vmul.f32 %v1342, %v1278
      %v1375 = vmul.f32 %v1343, %v1279
      %v1376 = vmul.f32 %v1344, %v1280
      %v1377 = vmul.f32 %v1345, %v1281
      %v1378 = vmul.f32 %v1346, %v1282
      %v1379 = vmul.f32 %v1347, %v1283
      %v1380 = vmul.f32 %v1348, %v1284
      %v1381 = vmul.f32 %v1349, %v1285
      %v1382 = vmul.f32 %v1350, %v1286
      %v1383 = vmul.f32 %v1351, %v1287
      %v1384 = vmul.f32 %v1352, %v1288
      %v1385 = vmul.f32 %v1353, %v1289
      %v1386 = vmul.f32 %v1354, %v1290
      %v1387 = vmul.f32 %v1355, %v1291
      %v1388 = vmul.f32 %v1356, %v1292
      %v1389 = vmul.f32 %v1357, %v1293
      %v1390 = vmul.f32 %v1358, %v1294
      %v1391 = vmul.f32 %v1359, %v1295
      %v1392 = vmul.f32 %v1360, %v1296
      %v1393 = vmul.f32 %v1361, %v1297
      %v1394 = vmul.f32 %v1362, %v1298
      %v1395 = vmul.f32 %v1363, %v1299
      %v1396 = vmul.f32 %v1364, %v1300
      %v1397 = vmul.f32 %v1365, %v1269
      %v1398 = vmul.f32 %v1366, %v1270
      %v1399 = vmul.f32 %v1367, %v1271
      %v1400 = vmul.f32 %v1368, %v1272
      %v1401 = vmul.f32 %v1369, %v1273
      %v1402 = vmul.f32 %v1370, %v1274
      %v1403 = vmul.f32 %v1371, %v1275
      %v1404 = vmul.f32 %v1372, %v1276
      %v1405 = vmul.f32 %v1373, %v1277
      %v1406 = vmul.f32 %v1374, %v1278
      %v1407 = vmul.f32 %v1375, %v1279
      %v1408 = vmul.f32 %v1376, %v1280
      %v1409 = vmul.f32 %v1377, %v1281
      %v1410 = vmul.f32 %v1378, %v1282
      %v1411 = vmul.f32 %v1379, %v1283
      %v1412 = vmul.f32 %v1380, %v1284
      %v1413 = vmul.f32 %v1381, %v1285
      %v1414 = vmul.f32 %v1382, %v1286
      %v1415 = vmul.f32 %v1383, %v1287
      %v1416 = vmul.f32 %v1384, %v1288
      %v1417 = vmul.f32 %v1385, %v1289
      %v1418 = vmul.f32 %v1386, %v1290
      %v1419 = vmul.f32 %v1387, %v1291
      %v1420 = vmul.f32 %v1388, %v1292
      %v1421 = vmul.f32 %v1389, %v1293
      %v1422 = vmul.f32 %v1390, %v1294
      %v1423 = vmul.f32 %v1391, %v1295
      %v1424 = vmul.f32 %v1392, %v1296
      %v1425 = vmul.f32 %v1393, %v1297
      %v1426 = vmul.f32 %v1394, %v1298
      %v1427 = vmul.f32 %v1395, %v1299
      %v1428 = vmul.f32 %v1396, %v1300
      %v1429 = vadd.f32 %v1269, %v1397
      %v1430 = vadd.f32 %v1270, %v1398
      %v1431 = vadd.f32 %v1271, %v1399
      %v1432 = vadd.f32 %v1272, %v1400
      %v1433 = vadd.f32 %v1273, %v1401
      %v1434 = vadd.f32 %v1274, %v1402
      %v1435 = vadd.f32 %v1275, %v1403
      %v1436 = vadd.f32 %v1276, %v1404
      %v1437 = vadd.f32 %v1277, %v1405
      %v1438 = vadd.f32 %v1278, %v1406
      %v1439 = vadd.f32 %v1279, %v1407
      %v1440 = vadd.f32 %v1280, %v1408
      %v1441 = vadd.f32 %v1281, %v1409
      %v1442 = vadd.f32 %v1282, %v1410
      %v1443 = vadd.f32 %v1283, %v1411
      %v1444 = vadd.f32 %v1284, %v1412
      %v1445 = vadd.f32 %v1285, %v1413
      %v1446 = vadd.f32 %v1286, %v1414
      %v1447 = vadd.f32 %v1287, %v1415
      %v1448 = vadd.f32 %v1288, %v1416
      %v1449 = vadd.f32 %v1289, %v1417
      %v1450 = vadd.f32 %v1290, %v1418
      %v1451 = vadd.f32 %v1291, %v1419
      %v1452 = vadd.f32 %v1292, %v1420
      %v1453 = vadd.f32 %v1293, %v1421
      %v1454 = vadd.f32 %v1294, %v1422
      %v1455 = vadd.f32 %v1295, %v1423
      %v1456 = vadd.f32 %v1296, %v1424
      %v1457 = vadd.f32 %v1297, %v1425
      %v1458 = vadd.f32 %v1298, %v1426
      %v1459 = vadd.f32 %v1299, %v1427
      %v1460 = vadd.f32 %v1300, %v1428
      %v1461 = vmul.f32 %v1429, 0.7978846
      %v1462 = vmul.f32 %v1430, 0.7978846
      %v1463 = vmul.f32 %v1431, 0.7978846
      %v1464 = vmul.f32 %v1432, 0.7978846
      %v1465 = vmul.f32 %v1433, 0.7978846
      %v1466 = vmul.f32 %v1434, 0.7978846
      %v1467 = vmul.f32 %v1435, 0.7978846
      %v1468 = vmul.f32 %v1436, 0.7978846
      %v1469 = vmul.f32 %v1437, 0.7978846
      %v1470 = vmul.f32 %v1438, 0.7978846
      %v1471 = vmul.f32 %v1439, 0.7978846
      %v1472 = vmul.f32 %v1440, 0.7978846
      %v1473 = vmul.f32 %v1441, 0.7978846
      %v1474 = vmul.f32 %v1442, 0.7978846
      %v1475 = vmul.f32 %v1443, 0.7978846
      %v1476 = vmul.f32 %v1444, 0.7978846
      %v1477 = vmul.f32 %v1445, 0.7978846
      %v1478 = vmul.f32 %v1446, 0.7978846
      %v1479 = vmul.f32 %v1447, 0.7978846
      %v1480 = vmul.f32 %v1448, 0.7978846
      %v1481 = vmul.f32 %v1449, 0.7978846
      %v1482 = vmul.f32 %v1450, 0.7978846
      %v1483 = vmul.f32 %v1451, 0.7978846
      %v1484 = vmul.f32 %v1452, 0.7978846
      %v1485 = vmul.f32 %v1453, 0.7978846
      %v1486 = vmul.f32 %v1454, 0.7978846
      %v1487 = vmul.f32 %v1455, 0.7978846
      %v1488 = vmul.f32 %v1456, 0.7978846
      %v1489 = vmul.f32 %v1457, 0.7978846
      %v1490 = vmul.f32 %v1458, 0.7978846
      %v1491 = vmul.f32 %v1459, 0.7978846
      %v1492 = vmul.f32 %v1460, 0.7978846
      %v1493 = vtanh.pop %v1461
      %v1494 = vtanh.pop %v1462
      %v1495 = vtanh.pop %v1463
      %v1496 = vtanh.pop %v1464
      %v1497 = vtanh.pop %v1465
      %v1498 = vtanh.pop %v1466
      %v1499 = vtanh.pop %v1467
      %v1500 = vtanh.pop %v1468
      %v1501 = vtanh.pop %v1469
      %v1502 = vtanh.pop %v1470
      %v1503 = vtanh.pop %v1471
      %v1504 = vtanh.pop %v1472
      %v1505 = vtanh.pop %v1473
      %v1506 = vtanh.pop %v1474
      %v1507 = vtanh.pop %v1475
      %v1508 = vtanh.pop %v1476
      %v1509 = vtanh.pop %v1477
      %v1510 = vtanh.pop %v1478
      %v1511 = vtanh.pop %v1479
      %v1512 = vtanh.pop %v1480
      %v1513 = vtanh.pop %v1481
      %v1514 = vtanh.pop %v1482
      %v1515 = vtanh.pop %v1483
      %v1516 = vtanh.pop %v1484
      %v1517 = vtanh.pop %v1485
      %v1518 = vtanh.pop %v1486
      %v1519 = vtanh.pop %v1487
      %v1520 = vtanh.pop %v1488
      %v1521 = vtanh.pop %v1489
      %v1522 = vtanh.pop %v1490
      %v1523 = vtanh.pop %v1491
      %v1524 = vtanh.pop %v1492
      %v1525 = vadd.f32 %v1493, 1.0
      %v1526 = vadd.f32 %v1494, 1.0
      %v1527 = vadd.f32 %v1495, 1.0
      %v1528 = vadd.f32 %v1496, 1.0
      %v1529 = vadd.f32 %v1497, 1.0
      %v1530 = vadd.f32 %v1498, 1.0
      %v1531 = vadd.f32 %v1499, 1.0
      %v1532 = vadd.f32 %v1500, 1.0
      %v1533 = vadd.f32 %v1501, 1.0
      %v1534 = vadd.f32 %v1502, 1.0
      %v1535 = vadd.f32 %v1503, 1.0
      %v1536 = vadd.f32 %v1504, 1.0
      %v1537 = vadd.f32 %v1505, 1.0
      %v1538 = vadd.f32 %v1506, 1.0
      %v1539 = vadd.f32 %v1507, 1.0
      %v1540 = vadd.f32 %v1508, 1.0
      %v1541 = vadd.f32 %v1509, 1.0
      %v1542 = vadd.f32 %v1510, 1.0
      %v1543 = vadd.f32 %v1511, 1.0
      %v1544 = vadd.f32 %v1512, 1.0
      %v1545 = vadd.f32 %v1513, 1.0
      %v1546 = vadd.f32 %v1514, 1.0
      %v1547 = vadd.f32 %v1515, 1.0
      %v1548 = vadd.f32 %v1516, 1.0
      %v1549 = vadd.f32 %v1517, 1.0
      %v1550 = vadd.f32 %v1518, 1.0
      %v1551 = vadd.f32 %v1519, 1.0
      %v1552 = vadd.f32 %v1520, 1.0
      %v1553 = vadd.f32 %v1521, 1.0
      %v1554 = vadd.f32 %v1522, 1.0
      %v1555 = vadd.f32 %v1523, 1.0
      %v1556 = vadd.f32 %v1524, 1.0
      %v1557 = vmul.f32 %v1301, %v1525
      %v1558 = vmul.f32 %v1302, %v1526
      %v1559 = vmul.f32 %v1303, %v1527
      %v1560 = vmul.f32 %v1304, %v1528
      %v1561 = vmul.f32 %v1305, %v1529
      %v1562 = vmul.f32 %v1306, %v1530
      %v1563 = vmul.f32 %v1307, %v1531
      %v1564 = vmul.f32 %v1308, %v1532
      %v1565 = vmul.f32 %v1309, %v1533
      %v1566 = vmul.f32 %v1310, %v1534
      %v1567 = vmul.f32 %v1311, %v1535
      %v1568 = vmul.f32 %v1312, %v1536
      %v1569 = vmul.f32 %v1313, %v1537
      %v1570 = vmul.f32 %v1314, %v1538
      %v1571 = vmul.f32 %v1315, %v1539
      %v1572 = vmul.f32 %v1316, %v1540
      %v1573 = vmul.f32 %v1317, %v1541
      %v1574 = vmul.f32 %v1318, %v1542
      %v1575 = vmul.f32 %v1319, %v1543
      %v1576 = vmul.f32 %v1320, %v1544
      %v1577 = vmul.f32 %v1321, %v1545
      %v1578 = vmul.f32 %v1322, %v1546
      %v1579 = vmul.f32 %v1323, %v1547
      %v1580 = vmul.f32 %v1324, %v1548
      %v1581 = vmul.f32 %v1325, %v1549
      %v1582 = vmul.f32 %v1326, %v1550
      %v1583 = vmul.f32 %v1327, %v1551
      %v1584 = vmul.f32 %v1328, %v1552
      %v1585 = vmul.f32 %v1329, %v1553
      %v1586 = vmul.f32 %v1330, %v1554
      %v1587 = vmul.f32 %v1331, %v1555
      %v1588 = vmul.f32 %v1332, %v1556
      %v1589 = vpack.c.bf16 %v1557, %v1557
      %v1590 = vpack.c.bf16 %v1558, %v1558
      %v1591 = vpack.c.bf16 %v1559, %v1559
      %v1592 = vpack.c.bf16 %v1560, %v1560
      %v1593 = vpack.c.bf16 %v1561, %v1561
      %v1594 = vpack.c.bf16 %v1562, %v1562
      %v1595 = vpack.c.bf16 %v1563, %v1563
      %v1596 = vpack.c.bf16 %v1564, %v1564
      %v1597 = vpack.c.bf16 %v1565, %v1565
      %v1598 = vpack.c.bf16 %v1566, %v1566
      %v1599 = vpack.c.bf16 %v1567, %v1567
      %v1600 = vpack.c.bf16 %v1568, %v1568
      %v1601 = vpack.c.bf16 %v1569, %v1569
      %v1602 = vpack.c.bf16 %v1570, %v1570
      %v1603 = vpack.c.bf16 %v1571, %v1571
      %v1604 = vpack.c.bf16 %v1572, %v1572
      %v1605 = vpack.c.bf16 %v1573, %v1573
      %v1606 = vpack.c.bf16 %v1574, %v1574
      %v1607 = vpack.c.bf16 %v1575, %v1575
      %v1608 = vpack.c.bf16 %v1576, %v1576
      %v1609 = vpack.c.bf16 %v1577, %v1577
      %v1610 = vpack.c.bf16 %v1578, %v1578
      %v1611 = vpack.c.bf16 %v1579, %v1579
      %v1612 = vpack.c.bf16 %v1580, %v1580
      %v1613 = vpack.c.bf16 %v1581, %v1581
      %v1614 = vpack.c.bf16 %v1582, %v1582
      %v1615 = vpack.c.bf16 %v1583, %v1583
      %v1616 = vpack.c.bf16 %v1584, %v1584
      %v1617 = vpack.c.bf16 %v1585, %v1585
      %v1618 = vpack.c.bf16 %v1586, %v1586
      %v1619 = vpack.c.bf16 %v1587, %v1587
      %v1620 = vpack.c.bf16 %v1588, %v1588
      %1621 = vst [vmem:[%s353] sm:$0xf] %v1589
      %1622 = vst [vmem:[%s353 + $0x4] sm:$0xf] %v1590
      %1623 = vst [vmem:[%s353 + $0x8] sm:$0xf] %v1591
      %1624 = vst [vmem:[%s353 + $0xc] sm:$0xf] %v1592
      %1625 = vst [vmem:[%s353 + $0x10] sm:$0xf] %v1593
      %1626 = vst [vmem:[%s353 + $0x14] sm:$0xf] %v1594
      %1627 = vst [vmem:[%s353 + $0x18] sm:$0xf] %v1595
      %1628 = vst [vmem:[%s353 + $0x1c] sm:$0xf] %v1596
      %1629 = vst [vmem:[%s353 + $0x20] sm:$0xf] %v1597
      %1630 = vst [vmem:[%s353 + $0x24] sm:$0xf] %v1598
      %1631 = vst [vmem:[%s353 + $0x28] sm:$0xf] %v1599
      %1632 = vst [vmem:[%s353 + $0x2c] sm:$0xf] %v1600
      %1633 = vst [vmem:[%s353 + $0x30] sm:$0xf] %v1601
      %1634 = vst [vmem:[%s353 + $0x34] sm:$0xf] %v1602
      %1635 = vst [vmem:[%s353 + $0x38] sm:$0xf] %v1603
      %1636 = vst [vmem:[%s353 + $0x3c] sm:$0xf] %v1604
      %1637 = vst [vmem:[%s353 + $0x40] sm:$0xf] %v1605
      %1638 = vst [vmem:[%s353 + $0x44] sm:$0xf] %v1606
      %1639 = vst [vmem:[%s353 + $0x48] sm:$0xf] %v1607
      %1640 = vst [vmem:[%s353 + $0x4c] sm:$0xf] %v1608
      %1641 = vst [vmem:[%s353 + $0x50] sm:$0xf] %v1609
      %1642 = vst [vmem:[%s353 + $0x54] sm:$0xf] %v1610
      %1643 = vst [vmem:[%s353 + $0x58] sm:$0xf] %v1611
      %1644 = vst [vmem:[%s353 + $0x5c] sm:$0xf] %v1612
      %1645 = vst [vmem:[%s353 + $0x60] sm:$0xf] %v1613
      %1646 = vst [vmem:[%s353 + $0x64] sm:$0xf] %v1614
      %1647 = vst [vmem:[%s353 + $0x68] sm:$0xf] %v1615
      %1648 = vst [vmem:[%s353 + $0x6c] sm:$0xf] %v1616
      %1649 = vst [vmem:[%s353 + $0x70] sm:$0xf] %v1617
      %1650 = vst [vmem:[%s353 + $0x74] sm:$0xf] %v1618
      %1651 = vst [vmem:[%s353 + $0x78] sm:$0xf] %v1619
      %1652 = vst [vmem:[%s353 + $0x7c] sm:$0xf] %v1620
      %v1653 = vunpack.c.l.bf16 %v1589
      %v1654 = vunpack.c.l.bf16 %v1590
      %v1655 = vunpack.c.l.bf16 %v1591
      %v1656 = vunpack.c.l.bf16 %v1592
      %v1657 = vunpack.c.l.bf16 %v1593
      %v1658 = vunpack.c.l.bf16 %v1594
      %v1659 = vunpack.c.l.bf16 %v1595
      %v1660 = vunpack.c.l.bf16 %v1596
      %v1661 = vunpack.c.l.bf16 %v1597
      %v1662 = vunpack.c.l.bf16 %v1598
      %v1663 = vunpack.c.l.bf16 %v1599
      %v1664 = vunpack.c.l.bf16 %v1600
      %v1665 = vunpack.c.l.bf16 %v1601
      %v1666 = vunpack.c.l.bf16 %v1602
      %v1667 = vunpack.c.l.bf16 %v1603
      %v1668 = vunpack.c.l.bf16 %v1604
      %v1669 = vunpack.c.l.bf16 %v1605
      %v1670 = vunpack.c.l.bf16 %v1606
      %v1671 = vunpack.c.l.bf16 %v1607
      %v1672 = vunpack.c.l.bf16 %v1608
      %v1673 = vunpack.c.l.bf16 %v1609
      %v1674 = vunpack.c.l.bf16 %v1610
      %v1675 = vunpack.c.l.bf16 %v1611
      %v1676 = vunpack.c.l.bf16 %v1612
      %v1677 = vunpack.c.l.bf16 %v1613
      %v1678 = vunpack.c.l.bf16 %v1614
      %v1679 = vunpack.c.l.bf16 %v1615
      %v1680 = vunpack.c.l.bf16 %v1616
      %v1681 = vunpack.c.l.bf16 %v1617
      %v1682 = vunpack.c.l.bf16 %v1618
      %v1683 = vunpack.c.l.bf16 %v1619
      %v1684 = vunpack.c.l.bf16 %v1620
      %v1685 = vadd.f32 %v1653, %v1655
      %v1686 = vadd.f32 %v1685, %v1657
      %v1687 = vadd.f32 %v1686, %v1659
      %v1688 = vadd.f32 %v1687, %v1661
      %v1689 = vadd.f32 %v1688, %v1663
      %v1690 = vadd.f32 %v1689, %v1665
      %v1691 = vadd.f32 %v1690, %v1667
      %v1692 = vadd.f32 %v1691, %v1669
      %v1693 = vadd.f32 %v1692, %v1671
      %v1694 = vadd.f32 %v1693, %v1673
      %v1695 = vadd.f32 %v1694, %v1675
      %v1696 = vadd.f32 %v1695, %v1677
      %v1697 = vadd.f32 %v1696, %v1679
      %v1698 = vadd.f32 %v1697, %v1681
      %v1699 = vadd.f32 %v1698, %v1683
      %v1700 = vadd.f32 %v1654, %v1656
      %v1701 = vadd.f32 %v1700, %v1658
      %v1702 = vadd.f32 %v1701, %v1660
      %v1703 = vadd.f32 %v1702, %v1662
      %v1704 = vadd.f32 %v1703, %v1664
      %v1705 = vadd.f32 %v1704, %v1666
      %v1706 = vadd.f32 %v1705, %v1668
      %v1707 = vadd.f32 %v1706, %v1670
      %v1708 = vadd.f32 %v1707, %v1672
      %v1709 = vadd.f32 %v1708, %v1674
      %v1710 = vadd.f32 %v1709, %v1676
      %v1711 = vadd.f32 %v1710, %v1678
      %v1712 = vadd.f32 %v1711, %v1680
      %v1713 = vadd.f32 %v1712, %v1682
      %v1714 = vadd.f32 %v1713, %v1684
      %v1715 = vadd.f32 %v1699, %v1714
      %v1716 = vrot.slane %v1715, 4
      %v1717 = vadd.f32 %v1715, %v1716
      %v1718 = vrot.slane %v1717, 2
      %v1719 = vadd.f32 %v1717, %v1718
      %v1720 = vrot.slane %v1719, 1
      %v1721 = vadd.f32 %v1719, %v1720
      %1722 = vst [vmem:[%s360] sm:$0x1] %v1721
      %v1723 = vmul.f32 %v1653, %v1653
      %v1724 = vmul.f32 %v1654, %v1654
      %v1725 = vmul.f32 %v1655, %v1655
      %v1726 = vmul.f32 %v1656, %v1656
      %v1727 = vmul.f32 %v1657, %v1657
      %v1728 = vmul.f32 %v1658, %v1658
      %v1729 = vmul.f32 %v1659, %v1659
      %v1730 = vmul.f32 %v1660, %v1660
      %v1731 = vmul.f32 %v1661, %v1661
      %v1732 = vmul.f32 %v1662, %v1662
      %v1733 = vmul.f32 %v1663, %v1663
      %v1734 = vmul.f32 %v1664, %v1664
      %v1735 = vmul.f32 %v1665, %v1665
      %v1736 = vmul.f32 %v1666, %v1666
      %v1737 = vmul.f32 %v1667, %v1667
      %v1738 = vmul.f32 %v1668, %v1668
      %v1739 = vmul.f32 %v1669, %v1669
      %v1740 = vmul.f32 %v1670, %v1670
      %v1741 = vmul.f32 %v1671, %v1671
      %v1742 = vmul.f32 %v1672, %v1672
      %v1743 = vmul.f32 %v1673, %v1673
      %v1744 = vmul.f32 %v1674, %v1674
      %v1745 = vmul.f32 %v1675, %v1675
      %v1746 = vmul.f32 %v1676, %v1676
      %v1747 = vmul.f32 %v1677, %v1677
      %v1748 = vmul.f32 %v1678, %v1678
      %v1749 = vmul.f32 %v1679, %v1679
      %v1750 = vmul.f32 %v1680, %v1680
      %v1751 = vmul.f32 %v1681, %v1681
      %v1752 = vmul.f32 %v1682, %v1682
      %v1753 = vmul.f32 %v1683, %v1683
      %v1754 = vmul.f32 %v1684, %v1684
      %v1755 = vadd.f32 %v1723, %v1725
      %v1756 = vadd.f32 %v1755, %v1727
      %v1757 = vadd.f32 %v1756, %v1729
      %v1758 = vadd.f32 %v1757, %v1731
      %v1759 = vadd.f32 %v1758, %v1733
      %v1760 = vadd.f32 %v1759, %v1735
      %v1761 = vadd.f32 %v1760, %v1737
      %v1762 = vadd.f32 %v1761, %v1739
      %v1763 = vadd.f32 %v1762, %v1741
      %v1764 = vadd.f32 %v1763, %v1743
      %v1765 = vadd.f32 %v1764, %v1745
      %v1766 = vadd.f32 %v1765, %v1747
      %v1767 = vadd.f32 %v1766, %v1749
      %v1768 = vadd.f32 %v1767, %v1751
      %v1769 = vadd.f32 %v1768, %v1753
      %v1770 = vadd.f32 %v1724, %v1726
      %v1771 = vadd.f32 %v1770, %v1728
      %v1772 = vadd.f32 %v1771, %v1730
      %v1773 = vadd.f32 %v1772, %v1732
      %v1774 = vadd.f32 %v1773, %v1734
      %v1775 = vadd.f32 %v1774, %v1736
      %v1776 = vadd.f32 %v1775, %v1738
      %v1777 = vadd.f32 %v1776, %v1740
      %v1778 = vadd.f32 %v1777, %v1742
      %v1779 = vadd.f32 %v1778, %v1744
      %v1780 = vadd.f32 %v1779, %v1746
      %v1781 = vadd.f32 %v1780, %v1748
      %v1782 = vadd.f32 %v1781, %v1750
      %v1783 = vadd.f32 %v1782, %v1752
      %v1784 = vadd.f32 %v1783, %v1754
      %v1785 = vadd.f32 %v1769, %v1784
      %v1786 = vrot.slane %v1785, 4
      %v1787 = vadd.f32 %v1785, %v1786
      %v1788 = vrot.slane %v1787, 2
      %v1789 = vadd.f32 %v1787, %v1788
      %v1790 = vrot.slane %v1789, 1
      %v1791 = vadd.f32 %v1789, %v1790
      %1792 = vst [vmem:[%s360 + $0x1] sm:$0x1] %v1791
      %p1793 = scmp.lt.s32.totalorder %s22, 1
      %s1794 = scalar_select %p1793, %s22, 1
      %p1795 = scmp.lt.s32.totalorder %s23, 0
      %s1796 = scalar_select %p1795, %s23, 0
      %s1797 = smul.addr %s1794, 32
      %s1798 = sadd.s32 %s1796, %s1797
      %s1799 = smul.addr %s1798, 4
      %s1800 = scalar_lea.vmem %s5, %s1799
      %p1801 = scmp.lt.s32.totalorder %s22, 1
      %s1802 = scalar_select %p1801, %s22, 1
      %p1803 = scmp.lt.s32.totalorder %s23, 0
      %s1804 = scalar_select %p1803, %s23, 0
      %s1805 = sadd.s32 %s1804, %s1802
      %s1806 = smul.addr %s1805, 2
      %s1807 = scalar_lea.vmem %s6, %s1806
      // Predicated region
      $region41: #{inverted_residual_feed_forward.4} parent=39 // pred_check
        %p1808 = pneg %p182
      $region42: #{inverted_residual_feed_forward.4} parent=39 // pred_check_branch
        %1810 = sbr.rel (%p1808) target = $region44
      $region43: #{inverted_residual_feed_forward.4} parent=39 // pred_region
        _
      $region44: #{inverted_residual_feed_forward.4} parent=39 // pred_fallthru
        _
      // Predicated region
      $region45: #{inverted_residual_feed_forward.4} parent=39 // pred_check
        %p1811 = pneg %p210
      $region46: #{inverted_residual_feed_forward.4} parent=39 // pred_check_branch
        %1813 = sbr.rel (%p1811) target = $region48
      $region47: #{inverted_residual_feed_forward.4} parent=39 // pred_region
        _
      $region48: #{inverted_residual_feed_forward.4} parent=39 // pred_fallthru
        _
    $region40: #{inverted_residual_feed_forward.4} parent=5 // pred_fallthru
      _
    %p1814 = scmp.le.s32.totalorder 2, %s13
    // Predicated region
    $region49: #{inverted_residual_feed_forward.4} parent=5 // pred_check
      %p1815 = pneg %p1814
    $region50: #{inverted_residual_feed_forward.4} parent=5 // pred_check_branch
      %1817 = sbr.rel (%p1815) target = $region52
    $region51: #{inverted_residual_feed_forward.4} parent=5 // pred_region
      %s1818 = ssub.s32 %s13, 2
      // Predicated region
      $region53: #{inverted_residual_feed_forward.4} parent=51 // pred_check
        %p1819 = pneg %p188
      $region54: #{inverted_residual_feed_forward.4} parent=51 // pred_check_branch
        %1821 = sbr.rel (%p1819) target = $region56
      $region55: #{inverted_residual_feed_forward.4} parent=51 // pred_region
        %p1822 = scmp.lt.s32.totalorder %s24, 1
        %s1823 = scalar_select %p1822, %s24, 1
        %p1824 = scmp.lt.s32.totalorder %s25, 0
        %s1825 = scalar_select %p1824, %s25, 0
        %s1826 = smul.addr %s1823, 32
        %s1827 = sadd.s32 %s1825, %s1826
        %s1828 = smul.addr %s1827, 4
        %s1829 = scalar_lea.vmem %s5, %s1828
      $region56: #{inverted_residual_feed_forward.4} parent=51 // pred_fallthru
        _
      // Predicated region
      $region57: #{inverted_residual_feed_forward.4} parent=51 // pred_check
        %p1830 = pneg %p216
      $region58: #{inverted_residual_feed_forward.4} parent=51 // pred_check_branch
        %1832 = sbr.rel (%p1830) target = $region60
      $region59: #{inverted_residual_feed_forward.4} parent=51 // pred_region
        %p1833 = scmp.lt.s32.totalorder %s24, 1
        %s1834 = scalar_select %p1833, %s24, 1
        %p1835 = scmp.lt.s32.totalorder %s25, 0
        %s1836 = scalar_select %p1835, %s25, 0
        %s1837 = sadd.s32 %s1836, %s1834
        %s1838 = smul.addr %s1837, 2
        %s1839 = scalar_lea.vmem %s6, %s1838
      $region60: #{inverted_residual_feed_forward.4} parent=51 // pred_fallthru
        _
    $region52: #{inverted_residual_feed_forward.4} parent=5 // pred_fallthru
      _
  $region6: #{inverted_residual_feed_forward.4} parent=0 // loop_footer
    %s17 = sadd.s32 1, %s13
  $region7: #{inverted_residual_feed_forward.4} parent=0 // loop_footer_branch
    %12 = sbr.rel target = $region3
  $region8: #{inverted_residual_feed_forward.4} parent=0 // loop_exit
    _

</llo_original>
